<compile_context>
chip_gen: v7x
topology: tpu7x:2x2x1
jax: 0.10.0
libtpu: 0.0.40
codegen_flags: <defaults>
</compile_context>

<pallas_src>
import functools

import jax
import jax.numpy as jnp
import numpy as np
from jax.experimental import pallas as pl
from jax.experimental.pallas import tpu as pltpu


def _round_up(x, m):
    return ((x + m - 1) // m) * m


def _convlstm_kernel(x_ref, w_ref, b_ref, c_ref, h_out_ref, c_out_ref,
                     patch_ref, *, hid, cpad, taps, wp, chunk,
                     chunks_per_tile, loadw):
    """One grid step == one (batch, spatial-tile) block.

    x_ref     : (1, Cpad, L_in)  zero-padded [x;h] image, resident per batch
    w_ref     : (4*hid, K)       conv weights, tap-major / channel-minor, resident
    b_ref     : (4*hid, 1)       f32 bias (added in the f32 epilogue)
    c_ref     : (1, hid, ST)     current cell state (padded-width layout)
    h_out_ref : (1, hid, ST)
    c_out_ref : (1, hid, ST)     aliased with the c input
    patch_ref : VMEM scratch (K, CHUNK) in the MXU dtype
    """
    t = pl.program_id(1)
    st = chunks_per_tile * chunk
    bias = b_ref[...]                                  # (4h, 1) f32, hoisted

    # Static chunk loop: each chunk's matmul + gates + state update is local,
    # keeping the live vreg set small (review item: epilogue chunking).
    for ci in range(chunks_per_tile):
        c0 = ci * chunk
        # Aligned dynamic lane load (start is a multiple of 128); the per-tap
        # shifts are *static* slices of this value, so only compile-time lane
        # rotates are needed -- no dynamic unaligned VMEM slicing.
        start = pl.multiple_of(t * st + c0, 128)
        xw = x_ref[0, :, pl.ds(start, loadw)]          # (Cpad, LOADW)

        # In-kernel im2col: build the (K, CHUNK) patch in VMEM scratch.
        for ti, (dy, dx) in enumerate(taps):
            off = dy * wp + dx
            patch_ref[ti * cpad:(ti + 1) * cpad, :] = xw[:, off:off + chunk]

        # One MXU matmul per chunk: (4h, K) @ (K, CHUNK), f32 accumulation,
        # f32 bias add in the epilogue (not rounded through the MXU dtype).
        z = jnp.dot(w_ref[...], patch_ref[...],
                    preferred_element_type=jnp.float32) + bias

        # Gates: static sublane slices (channels on sublanes, spatial lanes).
        i = jax.nn.sigmoid(z[0 * hid:1 * hid])
        f = jax.nn.sigmoid(z[1 * hid:2 * hid])
        o = jax.nn.sigmoid(z[2 * hid:3 * hid])
        g = jnp.tanh(z[3 * hid:4 * hid])

        c_cur = c_ref[0, :, c0:c0 + chunk].astype(jnp.float32)
        c_next = f * c_cur + i * g
        h_next = o * jnp.tanh(c_next)

        # Lane-dense (128-aligned, unmasked) stores.
        c_out_ref[0, :, c0:c0 + chunk] = c_next.astype(c_out_ref.dtype)
        h_out_ref[0, :, c0:c0 + chunk] = h_next.astype(h_out_ref.dtype)


def convlstm_cell_pallas(x, h_cur, c_cur, w_pt, bias, *, hidden_dim,
                         kernel_size, mxu_dtype=jnp.bfloat16,
                         lane_chunk=None, spatial_tile_lanes=2048):
    """x, h_cur, c_cur: NCHW float32.  w_pt: (4*hid, Cin+hid, kh, kw) OIHW."""
    B, Cin, H, W = x.shape
    kh, kw = kernel_size
    assert kh % 2 == 1 and kw % 2 == 1, "odd kernel sizes (PyTorch 'same' pad)"
    ph, pw = kh // 2, kw // 2
    hid = hidden_dim
    assert hid % 8 == 0, "hidden_dim must be a multiple of 8 for TPU tiling"
    C = Cin + hid
    Hp, Wp = H + 2 * ph, W + 2 * pw

    mxu_dtype = jnp.dtype(mxu_dtype)
    # Channel padding only to the sublane alignment (8 f32 / 16 bf16) -- no
    # 128-padding of K any more.
    c_align = 16 if mxu_dtype == jnp.dtype(jnp.bfloat16) else 8
    Cpad = _round_up(C, c_align)
    K = kh * kw * Cpad

    # Epilogue / matmul lane chunk: 256 lanes, 128 for large hidden dims to
    # keep the per-chunk live set near the 64-vreg file.
    CHUNK = lane_chunk if lane_chunk is not None else (256 if hid <= 48 else 128)
    assert CHUNK % 128 == 0

    # Padded-width spatial layout: output lane p = oy * Wp + ox (ox < W valid),
    # rounded up to a whole number of chunks so every store is lane-dense.
    HWp = H * Wp
    L_out = _round_up(HWp, CHUNK)
    n_chunks = L_out // CHUNK

    # Spatial grid tiling: largest divisor of n_chunks under the lane cap;
    # force >= 2 grid steps when batch == 1 so both v7x TensorCores get work.
    cap = max(1, spatial_tile_lanes // CHUNK)
    if B == 1 and n_chunks >= 2:
        cap = min(cap, n_chunks // 2)
    cpt = 1
    for d in range(1, cap + 1):
        if n_chunks % d == 0:
            cpt = d
    nT = n_chunks // cpt
    ST = cpt * CHUNK

    # Halo needed by the shifted tap reads.
    HALO = (kh - 1) * Wp + (kw - 1)
    LOADW = CHUNK + _round_up(HALO, 128)
    L_in = L_out + _round_up(HALO, 128)          # >= Hp*Wp by construction

    taps = tuple((dy, dx) for dy in range(kh) for dx in range(kw))

    # ---- wrapper glue (plain JAX, fused by XLA; ~1.1x the raw input size) ---
    combined = jnp.concatenate([x, h_cur], axis=1)                     # (B,C,H,W)
    combined = jnp.pad(combined,
                       ((0, 0), (0, Cpad - C), (ph, ph), (pw, pw)))    # (B,Cpad,Hp,Wp)
    x_flat = combined.reshape(B, Cpad, Hp * Wp)
    x_flat = jnp.pad(x_flat, ((0, 0), (0, 0), (0, L_in - Hp * Wp)))
    x_flat = x_flat.astype(mxu_dtype)                                  # bf16 default

    # Weights OIHW -> (4*hid, K) tap-major, channel-minor (channels padded).
    w_k = jnp.transpose(w_pt, (0, 2, 3, 1))                            # (4h,kh,kw,C)
    w_k = jnp.pad(w_k, ((0, 0), (0, 0), (0, 0), (0, Cpad - C)))
    w_lhs = w_k.reshape(4 * hid, K).astype(mxu_dtype)

    b2d = bias.reshape(4 * hid, 1).astype(jnp.float32)                 # f32 bias

    # Cell state in the padded-width layout; stays f32.  The padded copy is
    # what gets donated via input_output_aliases, not the caller's c_cur.
    c_flat = jnp.pad(c_cur, ((0, 0), (0, 0), (0, 0), (0, Wp - W)))
    c_flat = c_flat.reshape(B, hid, HWp)
    c_flat = jnp.pad(c_flat, ((0, 0), (0, 0), (0, L_out - HWp)))

    # ---- VMEM budget (explicit, review item for v7x's 64 MiB) --------------
    esz = mxu_dtype.itemsize
    csz = jnp.dtype(c_cur.dtype).itemsize
    vmem_est = (2 * Cpad * L_in * esz            # resident padded image (x2 buf)
                + 2 * 4 * hid * K * esz          # resident weights (x2 buf)
                + 2 * 4 * hid * 4                # bias
                + 2 * 3 * hid * ST * csz         # c_in + h_out + c_out blocks
                + K * CHUNK * esz                # patch scratch
                + (1 << 20))                     # headroom
    assert vmem_est < (40 << 20), (
        "padded image too large to keep resident in VMEM; "
        "TODO(synk): manual halo-DMA path for very large images")
    vmem_limit = min(64 << 20, max(32 << 20, int(2 * vmem_est)))

    kernel = functools.partial(
        _convlstm_kernel, hid=hid, cpad=Cpad, taps=taps, wp=Wp,
        chunk=CHUNK, chunks_per_tile=cpt, loadw=LOADW)

    h_out, c_out = pl.pallas_call(
        kernel,
        out_shape=(
            jax.ShapeDtypeStruct((B, hid, L_out), c_cur.dtype),
            jax.ShapeDtypeStruct((B, hid, L_out), c_cur.dtype),
        ),
        grid_spec=pltpu.PrefetchScalarGridSpec(
            num_scalar_prefetch=0,
            grid=(B, nT),
            in_specs=[
                # Padded image: constant over t -> resident across spatial tiles.
                pl.BlockSpec((1, Cpad, L_in), lambda b, t: (b, 0, 0)),
                pl.BlockSpec((4 * hid, K), lambda b, t: (0, 0)),
                pl.BlockSpec((4 * hid, 1), lambda b, t: (0, 0)),
                pl.BlockSpec((1, hid, ST), lambda b, t: (b, 0, t)),
            ],
            out_specs=[
                pl.BlockSpec((1, hid, ST), lambda b, t: (b, 0, t)),
                pl.BlockSpec((1, hid, ST), lambda b, t: (b, 0, t)),
            ],
            scratch_shapes=[pltpu.VMEM((K, CHUNK), mxu_dtype)],
        ),
        input_output_aliases={3: 1},   # c_flat (input 3) aliases c_out (output 1)
        compiler_params=pltpu.CompilerParams(
            dimension_semantics=("parallel", "parallel"),
            vmem_limit_bytes=vmem_limit),
    )(x_flat, w_lhs, b2d, c_flat)

    # Back to NCHW: crop lane padding and the 2*pw pad columns per row.
    def crop(y):
        return y[:, :, :HWp].reshape(B, hid, H, Wp)[:, :, :, :W]

    return crop(h_out), crop(c_out)


def convlstm_cell_ref(x, h_cur, c_cur, w_pt, bias, *, hidden_dim):
    """Pure-JAX reference matching the PyTorch forward (NCHW)."""
    combined = jnp.concatenate([x, h_cur], axis=1)
    z = jax.lax.conv_general_dilated(
        combined, w_pt, window_strides=(1, 1), padding="SAME",
        dimension_numbers=("NCHW", "OIHW", "NCHW"))
    z = z + bias[None, :, None, None]
    cc_i, cc_f, cc_o, cc_g = jnp.split(z, 4, axis=1)
    i = jax.nn.sigmoid(cc_i)
    f = jax.nn.sigmoid(cc_f)
    o = jax.nn.sigmoid(cc_o)
    g = jnp.tanh(cc_g)
    c_next = f * c_cur + i * g
    h_next = o * jnp.tanh(c_next)
    return h_next, c_next


if __name__ == "__main__":
    # Small deterministic config consistent with ConvLSTMCell.__init__
    B, Cin, H, W = 2, 4, 16, 16
    hidden_dim = 32
    kernel_size = (3, 3)
    C = Cin + hidden_dim

    key = jax.random.PRNGKey(0)
    kx, kh_, kc, kw_, kb = jax.random.split(key, 5)

    x = jax.random.normal(kx, (B, Cin, H, W), jnp.float32)
    h_cur = jax.random.normal(kh_, (B, hidden_dim, H, W), jnp.float32)
    c_cur = jax.random.normal(kc, (B, hidden_dim, H, W), jnp.float32)

    # nn.Conv2d(in=C, out=4*hidden, kernel=(3,3), bias=True) parameter shapes.
    w_pt = 0.1 * jax.random.normal(
        kw_, (4 * hidden_dim, C, kernel_size[0], kernel_size[1]), jnp.float32)
    bias = 0.1 * jax.random.normal(kb, (4 * hidden_dim,), jnp.float32)

    h_want, c_want = convlstm_cell_ref(x, h_cur, c_cur, w_pt, bias,
                                       hidden_dim=hidden_dim)

    # f32 MXU-operand path: matches the PyTorch module numerics tightly.
    f32_fn = jax.jit(functools.partial(convlstm_cell_pallas,
                                       hidden_dim=hidden_dim,
                                       kernel_size=kernel_size,
                                       mxu_dtype=jnp.float32))
    h32, c32 = f32_fn(x, h_cur, c_cur, w_pt, bias)
    jax.block_until_ready((h32, c32))
    np.testing.assert_allclose(np.asarray(h32), np.asarray(h_want),
                               rtol=1e-4, atol=1e-4)
    np.testing.assert_allclose(np.asarray(c32), np.asarray(c_want),
                               rtol=1e-4, atol=1e-4)

    # Default path: bf16 MXU operands, f32 accumulation / bias / gates / state.
    bf16_fn = jax.jit(functools.partial(convlstm_cell_pallas,
                                        hidden_dim=hidden_dim,
                                        kernel_size=kernel_size))
    hbf, cbf = bf16_fn(x, h_cur, c_cur, w_pt, bias)
    jax.block_until_ready((hbf, cbf))
    np.testing.assert_allclose(np.asarray(hbf), np.asarray(h_want),
                               rtol=1e-1, atol=1e-1)
    np.testing.assert_allclose(np.asarray(cbf), np.asarray(c_want),
                               rtol=1e-1, atol=1e-1)

    print("KERNEL_OK")
</pallas_src>

<mosaic_0001>
module attributes {stable_mosaic.version = 11 : i64} {
  func.func @_convlstm_kernel(%arg0: i32, %arg1: i32, %arg2: memref<1x40x640xf32, #tpu.memory_space<vmem>>, %arg3: memref<128x360xf32, #tpu.memory_space<vmem>>, %arg4: memref<128x1xf32, #tpu.memory_space<vmem>>, %arg5: memref<1x32x512xf32, #tpu.memory_space<vmem>>, %arg6: memref<1x32x512xf32, #tpu.memory_space<vmem>>, %arg7: memref<1x32x512xf32, #tpu.memory_space<vmem>>, %arg8: memref<360x256xf32, #tpu.memory_space<vmem>>) attributes {dimension_semantics = [#tpu.dimension_semantics<parallel>, #tpu.dimension_semantics<parallel>], iteration_bounds = array<i64: 2, 1>, scalar_prefetch = 0 : i64, scratch_operands = 1 : i64, tpu.core_type = #tpu.core_type<tc>, window_params = [{transform_indices = @transform_0, window_bounds = array<i64: 1, 40, 640>}, {pipeline_mode = #tpu.pipeline_mode<synchronous>, transform_indices = @transform_1, window_bounds = array<i64: 128, 360>}, {pipeline_mode = #tpu.pipeline_mode<synchronous>, transform_indices = @transform_2, window_bounds = array<i64: 128, 1>}, {transform_indices = @transform_3, window_bounds = array<i64: 1, 32, 512>}, {transform_indices = @transform_4, window_bounds = array<i64: 1, 32, 512>}, {transform_indices = @transform_5, window_bounds = array<i64: 1, 32, 512>}]} {
    %c0 = arith.constant 0 : index
    %c0_0 = arith.constant 0 : index
    %0 = vector.load %arg4[%c0, %c0_0] : memref<128x1xf32, #tpu.memory_space<vmem>>, vector<128x1xf32>
    %c512_i32 = arith.constant 512 : i32
    %1 = arith.muli %arg1, %c512_i32 : i32
    %c0_i32 = arith.constant 0 : i32
    %2 = arith.addi %1, %c0_i32 : i32
    %3 = tpu.assume_multiple %2, 128 : i32
    %c0_1 = arith.constant 0 : index
    %c0_2 = arith.constant 0 : index
    %4 = arith.index_cast %3 : i32 to index
    %5 = vector.load %arg2[%c0_1, %c0_2, %4] : memref<1x40x640xf32, #tpu.memory_space<vmem>>, vector<1x40x384xf32>
    %6 = vector.shape_cast %5 : vector<1x40x384xf32> to vector<40x384xf32>
    %7 = vector.extract_strided_slice %6 {offsets = [0, 0], sizes = [40, 256], strides = [1, 1]} : vector<40x384xf32> to vector<40x256xf32>
    %c0_3 = arith.constant 0 : index
    %c0_4 = arith.constant 0 : index
    %8 = vector.load %arg8[%c0_3, %c0_4] : memref<360x256xf32, #tpu.memory_space<vmem>>, vector<40x256xf32>
    tpu.vector_store %arg8[%c0_3, %c0_4], %7 {strides = array<i32>} : memref<360x256xf32, #tpu.memory_space<vmem>>, vector<40x256xf32>,
    %9 = vector.extract_strided_slice %6 {offsets = [0, 1], sizes = [40, 256], strides = [1, 1]} : vector<40x384xf32> to vector<40x256xf32>
    %c40 = arith.constant 40 : index
    %c0_5 = arith.constant 0 : index
    %10 = vector.load %arg8[%c40, %c0_5] : memref<360x256xf32, #tpu.memory_space<vmem>>, vector<40x256xf32>
    tpu.vector_store %arg8[%c40, %c0_5], %9 {strides = array<i32>} : memref<360x256xf32, #tpu.memory_space<vmem>>, vector<40x256xf32>,
    %11 = vector.extract_strided_slice %6 {offsets = [0, 2], sizes = [40, 256], strides = [1, 1]} : vector<40x384xf32> to vector<40x256xf32>
    %c80 = arith.constant 80 : index
    %c0_6 = arith.constant 0 : index
    %12 = vector.load %arg8[%c80, %c0_6] : memref<360x256xf32, #tpu.memory_space<vmem>>, vector<40x256xf32>
    tpu.vector_store %arg8[%c80, %c0_6], %11 {strides = array<i32>} : memref<360x256xf32, #tpu.memory_space<vmem>>, vector<40x256xf32>,
    %13 = vector.extract_strided_slice %6 {offsets = [0, 18], sizes = [40, 256], strides = [1, 1]} : vector<40x384xf32> to vector<40x256xf32>
    %c120 = arith.constant 120 : index
    %c0_7 = arith.constant 0 : index
    %14 = vector.load %arg8[%c120, %c0_7] : memref<360x256xf32, #tpu.memory_space<vmem>>, vector<40x256xf32>
    tpu.vector_store %arg8[%c120, %c0_7], %13 {strides = array<i32>} : memref<360x256xf32, #tpu.memory_space<vmem>>, vector<40x256xf32>,
    %15 = vector.extract_strided_slice %6 {offsets = [0, 19], sizes = [40, 256], strides = [1, 1]} : vector<40x384xf32> to vector<40x256xf32>
    %c160 = arith.constant 160 : index
    %c0_8 = arith.constant 0 : index
    %16 = vector.load %arg8[%c160, %c0_8] : memref<360x256xf32, #tpu.memory_space<vmem>>, vector<40x256xf32>
    tpu.vector_store %arg8[%c160, %c0_8], %15 {strides = array<i32>} : memref<360x256xf32, #tpu.memory_space<vmem>>, vector<40x256xf32>,
    %17 = vector.extract_strided_slice %6 {offsets = [0, 20], sizes = [40, 256], strides = [1, 1]} : vector<40x384xf32> to vector<40x256xf32>
    %c200 = arith.constant 200 : index
    %c0_9 = arith.constant 0 : index
    %18 = vector.load %arg8[%c200, %c0_9] : memref<360x256xf32, #tpu.memory_space<vmem>>, vector<40x256xf32>
    tpu.vector_store %arg8[%c200, %c0_9], %17 {strides = array<i32>} : memref<360x256xf32, #tpu.memory_space<vmem>>, vector<40x256xf32>,
    %19 = vector.extract_strided_slice %6 {offsets = [0, 36], sizes = [40, 256], strides = [1, 1]} : vector<40x384xf32> to vector<40x256xf32>
    %c240 = arith.constant 240 : index
    %c0_10 = arith.constant 0 : index
    %20 = vector.load %arg8[%c240, %c0_10] : memref<360x256xf32, #tpu.memory_space<vmem>>, vector<40x256xf32>
    tpu.vector_store %arg8[%c240, %c0_10], %19 {strides = array<i32>} : memref<360x256xf32, #tpu.memory_space<vmem>>, vector<40x256xf32>,
    %21 = vector.extract_strided_slice %6 {offsets = [0, 37], sizes = [40, 256], strides = [1, 1]} : vector<40x384xf32> to vector<40x256xf32>
    %c280 = arith.constant 280 : index
    %c0_11 = arith.constant 0 : index
    %22 = vector.load %arg8[%c280, %c0_11] : memref<360x256xf32, #tpu.memory_space<vmem>>, vector<40x256xf32>
    tpu.vector_store %arg8[%c280, %c0_11], %21 {strides = array<i32>} : memref<360x256xf32, #tpu.memory_space<vmem>>, vector<40x256xf32>,
    %23 = vector.extract_strided_slice %6 {offsets = [0, 38], sizes = [40, 256], strides = [1, 1]} : vector<40x384xf32> to vector<40x256xf32>
    %c320 = arith.constant 320 : index
    %c0_12 = arith.constant 0 : index
    %24 = vector.load %arg8[%c320, %c0_12] : memref<360x256xf32, #tpu.memory_space<vmem>>, vector<40x256xf32>
    tpu.vector_store %arg8[%c320, %c0_12], %23 {strides = array<i32>} : memref<360x256xf32, #tpu.memory_space<vmem>>, vector<40x256xf32>,
    %c0_13 = arith.constant 0 : index
    %c0_14 = arith.constant 0 : index
    %25 = vector.load %arg3[%c0_13, %c0_14] : memref<128x360xf32, #tpu.memory_space<vmem>>, vector<128x360xf32>
    %c0_15 = arith.constant 0 : index
    %c0_16 = arith.constant 0 : index
    %26 = vector.load %arg8[%c0_15, %c0_16] : memref<360x256xf32, #tpu.memory_space<vmem>>, vector<360x256xf32>
    %cst = arith.constant dense<0.000000e+00> : vector<128x256xf32>
    %27 = tpu.matmul %25, %26, %cst {dimension_numbers = #tpu.dot_dimension_numbers<[1], [0], [0], [1], [0, 0, 1, 1], [], []>} : vector<128x360xf32>, vector<360x256xf32>, vector<128x256xf32> -> vector<128x256xf32>
    %28 = vector.broadcast %0 : vector<128x1xf32> to vector<128x256xf32>
    %29 = arith.addf %27, %28 : vector<128x256xf32>
    %30 = vector.extract_strided_slice %29 {offsets = [0, 0], sizes = [32, 256], strides = [1, 1]} : vector<128x256xf32> to vector<32x256xf32>
    %31 = arith.negf %30 : vector<32x256xf32>
    %32 = math.exp %31 : vector<32x256xf32>
    %cst_17 = arith.constant 1.000000e+00 : f32
    %33 = vector.broadcast %cst_17 : f32 to vector<32x256xf32>
    %34 = arith.addf %33, %32 : vector<32x256xf32>
    %35 = arith.divf %33, %34 : vector<32x256xf32>
    %36 = vector.extract_strided_slice %29 {offsets = [32, 0], sizes = [32, 256], strides = [1, 1]} : vector<128x256xf32> to vector<32x256xf32>
    %37 = arith.negf %36 : vector<32x256xf32>
    %38 = math.exp %37 : vector<32x256xf32>
    %cst_18 = arith.constant 1.000000e+00 : f32
    %39 = vector.broadcast %cst_18 : f32 to vector<32x256xf32>
    %40 = arith.addf %39, %38 : vector<32x256xf32>
    %41 = arith.divf %39, %40 : vector<32x256xf32>
    %42 = vector.extract_strided_slice %29 {offsets = [64, 0], sizes = [32, 256], strides = [1, 1]} : vector<128x256xf32> to vector<32x256xf32>
    %43 = arith.negf %42 : vector<32x256xf32>
    %44 = math.exp %43 : vector<32x256xf32>
    %cst_19 = arith.constant 1.000000e+00 : f32
    %45 = vector.broadcast %cst_19 : f32 to vector<32x256xf32>
    %46 = arith.addf %45, %44 : vector<32x256xf32>
    %47 = arith.divf %45, %46 : vector<32x256xf32>
    %48 = vector.extract_strided_slice %29 {offsets = [96, 0], sizes = [32, 256], strides = [1, 1]} : vector<128x256xf32> to vector<32x256xf32>
    %49 = math.tanh %48 : vector<32x256xf32>
    %c0_20 = arith.constant 0 : index
    %c0_21 = arith.constant 0 : index
    %c0_22 = arith.constant 0 : index
    %50 = vector.load %arg5[%c0_20, %c0_21, %c0_22] : memref<1x32x512xf32, #tpu.memory_space<vmem>>, vector<1x32x256xf32>
    %51 = vector.shape_cast %50 : vector<1x32x256xf32> to vector<32x256xf32>
    %52 = arith.mulf %41, %51 : vector<32x256xf32>
    %53 = arith.mulf %35, %49 : vector<32x256xf32>
    %54 = arith.addf %52, %53 : vector<32x256xf32>
    %55 = math.tanh %54 : vector<32x256xf32>
    %56 = arith.mulf %47, %55 : vector<32x256xf32>
    %c0_23 = arith.constant 0 : index
    %c0_24 = arith.constant 0 : index
    %c0_25 = arith.constant 0 : index
    %57 = vector.load %arg7[%c0_23, %c0_24, %c0_25] : memref<1x32x512xf32, #tpu.memory_space<vmem>>, vector<1x32x256xf32>
    %58 = vector.shape_cast %57 : vector<1x32x256xf32> to vector<32x256xf32>
    %59 = vector.shape_cast %54 : vector<32x256xf32> to vector<1x32x256xf32>
    tpu.vector_store %arg7[%c0_23, %c0_24, %c0_25], %59 {strides = array<i32>} : memref<1x32x512xf32, #tpu.memory_space<vmem>>, vector<1x32x256xf32>,
    %c0_26 = arith.constant 0 : index
    %c0_27 = arith.constant 0 : index
    %c0_28 = arith.constant 0 : index
    %60 = vector.load %arg6[%c0_26, %c0_27, %c0_28] : memref<1x32x512xf32, #tpu.memory_space<vmem>>, vector<1x32x256xf32>
    %61 = vector.shape_cast %60 : vector<1x32x256xf32> to vector<32x256xf32>
    %62 = vector.shape_cast %56 : vector<32x256xf32> to vector<1x32x256xf32>
    tpu.vector_store %arg6[%c0_26, %c0_27, %c0_28], %62 {strides = array<i32>} : memref<1x32x512xf32, #tpu.memory_space<vmem>>, vector<1x32x256xf32>,
    %c512_i32_29 = arith.constant 512 : i32
    %63 = arith.muli %arg1, %c512_i32_29 : i32
    %c256_i32 = arith.constant 256 : i32
    %64 = arith.addi %63, %c256_i32 : i32
    %65 = tpu.assume_multiple %64, 128 : i32
    %c0_30 = arith.constant 0 : index
    %c0_31 = arith.constant 0 : index
    %66 = arith.index_cast %65 : i32 to index
    %67 = vector.load %arg2[%c0_30, %c0_31, %66] : memref<1x40x640xf32, #tpu.memory_space<vmem>>, vector<1x40x384xf32>
    %68 = vector.shape_cast %67 : vector<1x40x384xf32> to vector<40x384xf32>
    %69 = vector.extract_strided_slice %68 {offsets = [0, 0], sizes = [40, 256], strides = [1, 1]} : vector<40x384xf32> to vector<40x256xf32>
    %c0_32 = arith.constant 0 : index
    %c0_33 = arith.constant 0 : index
    %70 = vector.load %arg8[%c0_32, %c0_33] : memref<360x256xf32, #tpu.memory_space<vmem>>, vector<40x256xf32>
    tpu.vector_store %arg8[%c0_32, %c0_33], %69 {strides = array<i32>} : memref<360x256xf32, #tpu.memory_space<vmem>>, vector<40x256xf32>,
    %71 = vector.extract_strided_slice %68 {offsets = [0, 1], sizes = [40, 256], strides = [1, 1]} : vector<40x384xf32> to vector<40x256xf32>
    %c40_34 = arith.constant 40 : index
    %c0_35 = arith.constant 0 : index
    %72 = vector.load %arg8[%c40_34, %c0_35] : memref<360x256xf32, #tpu.memory_space<vmem>>, vector<40x256xf32>
    tpu.vector_store %arg8[%c40_34, %c0_35], %71 {strides = array<i32>} : memref<360x256xf32, #tpu.memory_space<vmem>>, vector<40x256xf32>,
    %73 = vector.extract_strided_slice %68 {offsets = [0, 2], sizes = [40, 256], strides = [1, 1]} : vector<40x384xf32> to vector<40x256xf32>
    %c80_36 = arith.constant 80 : index
    %c0_37 = arith.constant 0 : index
    %74 = vector.load %arg8[%c80_36, %c0_37] : memref<360x256xf32, #tpu.memory_space<vmem>>, vector<40x256xf32>
    tpu.vector_store %arg8[%c80_36, %c0_37], %73 {strides = array<i32>} : memref<360x256xf32, #tpu.memory_space<vmem>>, vector<40x256xf32>,
    %75 = vector.extract_strided_slice %68 {offsets = [0, 18], sizes = [40, 256], strides = [1, 1]} : vector<40x384xf32> to vector<40x256xf32>
    %c120_38 = arith.constant 120 : index
    %c0_39 = arith.constant 0 : index
    %76 = vector.load %arg8[%c120_38, %c0_39] : memref<360x256xf32, #tpu.memory_space<vmem>>, vector<40x256xf32>
    tpu.vector_store %arg8[%c120_38, %c0_39], %75 {strides = array<i32>} : memref<360x256xf32, #tpu.memory_space<vmem>>, vector<40x256xf32>,
    %77 = vector.extract_strided_slice %68 {offsets = [0, 19], sizes = [40, 256], strides = [1, 1]} : vector<40x384xf32> to vector<40x256xf32>
    %c160_40 = arith.constant 160 : index
    %c0_41 = arith.constant 0 : index
    %78 = vector.load %arg8[%c160_40, %c0_41] : memref<360x256xf32, #tpu.memory_space<vmem>>, vector<40x256xf32>
    tpu.vector_store %arg8[%c160_40, %c0_41], %77 {strides = array<i32>} : memref<360x256xf32, #tpu.memory_space<vmem>>, vector<40x256xf32>,
    %79 = vector.extract_strided_slice %68 {offsets = [0, 20], sizes = [40, 256], strides = [1, 1]} : vector<40x384xf32> to vector<40x256xf32>
    %c200_42 = arith.constant 200 : index
    %c0_43 = arith.constant 0 : index
    %80 = vector.load %arg8[%c200_42, %c0_43] : memref<360x256xf32, #tpu.memory_space<vmem>>, vector<40x256xf32>
    tpu.vector_store %arg8[%c200_42, %c0_43], %79 {strides = array<i32>} : memref<360x256xf32, #tpu.memory_space<vmem>>, vector<40x256xf32>,
    %81 = vector.extract_strided_slice %68 {offsets = [0, 36], sizes = [40, 256], strides = [1, 1]} : vector<40x384xf32> to vector<40x256xf32>
    %c240_44 = arith.constant 240 : index
    %c0_45 = arith.constant 0 : index
    %82 = vector.load %arg8[%c240_44, %c0_45] : memref<360x256xf32, #tpu.memory_space<vmem>>, vector<40x256xf32>
    tpu.vector_store %arg8[%c240_44, %c0_45], %81 {strides = array<i32>} : memref<360x256xf32, #tpu.memory_space<vmem>>, vector<40x256xf32>,
    %83 = vector.extract_strided_slice %68 {offsets = [0, 37], sizes = [40, 256], strides = [1, 1]} : vector<40x384xf32> to vector<40x256xf32>
    %c280_46 = arith.constant 280 : index
    %c0_47 = arith.constant 0 : index
    %84 = vector.load %arg8[%c280_46, %c0_47] : memref<360x256xf32, #tpu.memory_space<vmem>>, vector<40x256xf32>
    tpu.vector_store %arg8[%c280_46, %c0_47], %83 {strides = array<i32>} : memref<360x256xf32, #tpu.memory_space<vmem>>, vector<40x256xf32>,
    %85 = vector.extract_strided_slice %68 {offsets = [0, 38], sizes = [40, 256], strides = [1, 1]} : vector<40x384xf32> to vector<40x256xf32>
    %c320_48 = arith.constant 320 : index
    %c0_49 = arith.constant 0 : index
    %86 = vector.load %arg8[%c320_48, %c0_49] : memref<360x256xf32, #tpu.memory_space<vmem>>, vector<40x256xf32>
    tpu.vector_store %arg8[%c320_48, %c0_49], %85 {strides = array<i32>} : memref<360x256xf32, #tpu.memory_space<vmem>>, vector<40x256xf32>,
    %c0_50 = arith.constant 0 : index
    %c0_51 = arith.constant 0 : index
    %87 = vector.load %arg3[%c0_50, %c0_51] : memref<128x360xf32, #tpu.memory_space<vmem>>, vector<128x360xf32>
    %c0_52 = arith.constant 0 : index
    %c0_53 = arith.constant 0 : index
    %88 = vector.load %arg8[%c0_52, %c0_53] : memref<360x256xf32, #tpu.memory_space<vmem>>, vector<360x256xf32>
    %cst_54 = arith.constant dense<0.000000e+00> : vector<128x256xf32>
    %89 = tpu.matmul %87, %88, %cst_54 {dimension_numbers = #tpu.dot_dimension_numbers<[1], [0], [0], [1], [0, 0, 1, 1], [], []>} : vector<128x360xf32>, vector<360x256xf32>, vector<128x256xf32> -> vector<128x256xf32>
    %90 = vector.broadcast %0 : vector<128x1xf32> to vector<128x256xf32>
    %91 = arith.addf %89, %90 : vector<128x256xf32>
    %92 = vector.extract_strided_slice %91 {offsets = [0, 0], sizes = [32, 256], strides = [1, 1]} : vector<128x256xf32> to vector<32x256xf32>
    %93 = arith.negf %92 : vector<32x256xf32>
    %94 = math.exp %93 : vector<32x256xf32>
    %cst_55 = arith.constant 1.000000e+00 : f32
    %95 = vector.broadcast %cst_55 : f32 to vector<32x256xf32>
    %96 = arith.addf %95, %94 : vector<32x256xf32>
    %97 = arith.divf %95, %96 : vector<32x256xf32>
    %98 = vector.extract_strided_slice %91 {offsets = [32, 0], sizes = [32, 256], strides = [1, 1]} : vector<128x256xf32> to vector<32x256xf32>
    %99 = arith.negf %98 : vector<32x256xf32>
    %100 = math.exp %99 : vector<32x256xf32>
    %cst_56 = arith.constant 1.000000e+00 : f32
    %101 = vector.broadcast %cst_56 : f32 to vector<32x256xf32>
    %102 = arith.addf %101, %100 : vector<32x256xf32>
    %103 = arith.divf %101, %102 : vector<32x256xf32>
    %104 = vector.extract_strided_slice %91 {offsets = [64, 0], sizes = [32, 256], strides = [1, 1]} : vector<128x256xf32> to vector<32x256xf32>
    %105 = arith.negf %104 : vector<32x256xf32>
    %106 = math.exp %105 : vector<32x256xf32>
    %cst_57 = arith.constant 1.000000e+00 : f32
    %107 = vector.broadcast %cst_57 : f32 to vector<32x256xf32>
    %108 = arith.addf %107, %106 : vector<32x256xf32>
    %109 = arith.divf %107, %108 : vector<32x256xf32>
    %110 = vector.extract_strided_slice %91 {offsets = [96, 0], sizes = [32, 256], strides = [1, 1]} : vector<128x256xf32> to vector<32x256xf32>
    %111 = math.tanh %110 : vector<32x256xf32>
    %c0_58 = arith.constant 0 : index
    %c0_59 = arith.constant 0 : index
    %c256 = arith.constant 256 : index
    %112 = vector.load %arg5[%c0_58, %c0_59, %c256] : memref<1x32x512xf32, #tpu.memory_space<vmem>>, vector<1x32x256xf32>
    %113 = vector.shape_cast %112 : vector<1x32x256xf32> to vector<32x256xf32>
    %114 = arith.mulf %103, %113 : vector<32x256xf32>
    %115 = arith.mulf %97, %111 : vector<32x256xf32>
    %116 = arith.addf %114, %115 : vector<32x256xf32>
    %117 = math.tanh %116 : vector<32x256xf32>
    %118 = arith.mulf %109, %117 : vector<32x256xf32>
    %c0_60 = arith.constant 0 : index
    %c0_61 = arith.constant 0 : index
    %c256_62 = arith.constant 256 : index
    %119 = vector.load %arg7[%c0_60, %c0_61, %c256_62] : memref<1x32x512xf32, #tpu.memory_space<vmem>>, vector<1x32x256xf32>
    %120 = vector.shape_cast %119 : vector<1x32x256xf32> to vector<32x256xf32>
    %121 = vector.shape_cast %116 : vector<32x256xf32> to vector<1x32x256xf32>
    tpu.vector_store %arg7[%c0_60, %c0_61, %c256_62], %121 {strides = array<i32>} : memref<1x32x512xf32, #tpu.memory_space<vmem>>, vector<1x32x256xf32>,
    %c0_63 = arith.constant 0 : index
    %c0_64 = arith.constant 0 : index
    %c256_65 = arith.constant 256 : index
    %122 = vector.load %arg6[%c0_63, %c0_64, %c256_65] : memref<1x32x512xf32, #tpu.memory_space<vmem>>, vector<1x32x256xf32>
    %123 = vector.shape_cast %122 : vector<1x32x256xf32> to vector<32x256xf32>
    %124 = vector.shape_cast %118 : vector<32x256xf32> to vector<1x32x256xf32>
    tpu.vector_store %arg6[%c0_63, %c0_64, %c256_65], %124 {strides = array<i32>} : memref<1x32x512xf32, #tpu.memory_space<vmem>>, vector<1x32x256xf32>,
    return
  }
  func.func @transform_0(%arg0: i32, %arg1: i32) -> (i32, i32, i32) {
    %c0_i32 = arith.constant 0 : i32
    %c0_i32_0 = arith.constant 0 : i32
    %c0_i32_1 = arith.constant 0 : i32
    return %arg0, %c0_i32, %c0_i32_0 : i32, i32, i32
  }
  func.func @transform_1(%arg0: i32, %arg1: i32) -> (i32, i32) {
    %c0_i32 = arith.constant 0 : i32
    %c0_i32_0 = arith.constant 0 : i32
    %c0_i32_1 = arith.constant 0 : i32
    return %c0_i32, %c0_i32_0 : i32, i32
  }
  func.func @transform_2(%arg0: i32, %arg1: i32) -> (i32, i32) {
    %c0_i32 = arith.constant 0 : i32
    %c0_i32_0 = arith.constant 0 : i32
    %c0_i32_1 = arith.constant 0 : i32
    return %c0_i32, %c0_i32_0 : i32, i32
  }
  func.func @transform_3(%arg0: i32, %arg1: i32) -> (i32, i32, i32) {
    %c0_i32 = arith.constant 0 : i32
    %c0_i32_0 = arith.constant 0 : i32
    return %arg0, %c0_i32, %arg1 : i32, i32, i32
  }
  func.func @transform_4(%arg0: i32, %arg1: i32) -> (i32, i32, i32) {
    %c0_i32 = arith.constant 0 : i32
    %c0_i32_0 = arith.constant 0 : i32
    return %arg0, %c0_i32, %arg1 : i32, i32, i32
  }
  func.func @transform_5(%arg0: i32, %arg1: i32) -> (i32, i32, i32) {
    %c0_i32 = arith.constant 0 : i32
    %c0_i32_0 = arith.constant 0 : i32
    return %arg0, %c0_i32, %arg1 : i32, i32, i32
  }
}

</mosaic_0001>

<llo_original>
// kernel: convlstm_cell_pallas.1
$region0: #{convlstm_cell_pallas.1}
  #allocation0 [shape = 'u32[]', space=smem, size = 0x4, offset = 0x4, fixed_abs, tag = 'smem constant byte address 0x4 - core index']
  #allocation1 [shape = 'u32[144,128]{1,0:T(1,128)}', space=vmem, size = 0x12000, scoped, tag = 'internal scratch']
  #allocation2 [shape = 'f32[360,256]{1,0:T(8,128)}', space=vmem, size = 0x5a000, scoped, tag = 'scratch operand']
  %s0 = inlined_call_operand.vmem [shape: f32[2,40,640], index: 0, kind: input, shape index: {}]
  %s1 = inlined_call_operand.vmem [shape: f32[128,360], index: 1, kind: input, shape index: {}]
  %s2 = inlined_call_operand.vmem [shape: f32[128,1], index: 2, kind: input, shape index: {}]
  %s3 = inlined_call_operand.vmem [shape: f32[2,32,512], index: 3, kind: input, shape index: {}, may-alias: {3,5}]
  %s4 = inlined_call_operand.vmem [shape: f32[2,32,512], index: 4, kind: output, shape index: {0}]
  %s5 = inlined_call_operand.vmem [shape: f32[2,32,512], index: 5, kind: output, shape index: {1}, may-alias: {3,5}]
  %6 = xla_tuple %s4, %s5
  %s7 = sld [smem:[#allocation0]]
  $region57: #{convlstm_cell_pallas.1} parent=0
    _
  %s9 = ssub.s32 1, %s7
  %s10 = scalar_select 0, %s9, %s7
  loop: start=0, step=1, limit=4
  $region2: #{convlstm_cell_pallas.1} parent=0 // loop_pre_header
    _
  $region3: #{convlstm_cell_pallas.1} parent=0 // loop_header
    %s12 = sphi 0, %s16
    %p13 = scmp.ge.s32.totalorder %s12, 4
    %s19 = sphi 0, %s31
    %s20 = sphi 0, %s27
    %s21 = sphi 0, %s19
    %s22 = sphi 0, %s20
    %s23 = sphi 0, %s21
    %s24 = sphi 0, %s22
    %s34 = sphi 0, %s36
    %s37 = sphi 0, %s34
    %s38 = sphi 0, %s37
    %s54 = sphi 0, %s38
    %s58 = sphi 0, %s58
    %s60 = sphi 0, %s58
    %s61 = sphi 0, %s60
    %s75 = sphi 0, %s61
    %s79 = sphi 0, %s79
    %s81 = sphi 0, %s79
    %s82 = sphi 0, %s81
    %s96 = sphi 0, %s82
    %s104 = sphi 0, %s106
    %s107 = sphi 0, %s104
    %s108 = sphi 0, %s107
    %s124 = sphi 0, %s108
    %s132 = sphi 0, %s134
    %s135 = sphi 0, %s132
    %s136 = sphi 0, %s135
    %s152 = sphi 0, %s136
    %s160 = sphi 0, %s162
    %s163 = sphi 0, %s160
    %s164 = sphi 0, %s163
    %s180 = sphi 0, %s164
  $region4: #{convlstm_cell_pallas.1} parent=0 // loop_header_branch
    %15 = sbr.rel (%p13) target = $region8
  $region5: #{convlstm_cell_pallas.1} parent=0 // loop_body
    %s17 = ssub.s32 %s12, 1
    %s18 = ssub.s32 %s12, 2
    %s25 = sadd.s32 1, %s20
    %p26 = scmp.ge.s32.totalorder %s25, 1
    %s27 = scalar_select %p26, 0, %s25
    %s28 = sadd.s32 1, %s19
    %s29 = scalar_select %p26, %s28, %s19
    %p30 = scmp.ge.s32.totalorder %s29, 2
    %s31 = scalar_select %p30, 0, %s29
    %s32 = ssub.s32 %s19, %s31
    %p33 = scmp.eq.s32.totalorder %s32, 0
    %s35 = sadd.s32 %s34, 1
    %s36 = scalar_select %p33, %s34, %s35
    %p39 = pneg %p33
    %p40 = scmp.eq.s32.totalorder %s12, 1
    %p41 = por %p39, %p40
    %p42 = scmp.ne.s32.totalorder %s34, %s37
    %p43 = scmp.eq.s32.totalorder %s12, 0
    %p44 = por %p42, %p43
    %p45 = scmp.ne.s32.totalorder %s34, %s37
    %p46 = scmp.eq.s32.totalorder %s17, 1
    %p47 = por %p45, %p46
    %p48 = scmp.ne.s32.totalorder %s37, %s38
    %p49 = scmp.eq.s32.totalorder %s17, 0
    %p50 = por %p48, %p49
    %p51 = scmp.ne.s32.totalorder %s37, %s38
    %p52 = scmp.eq.s32.totalorder %s18, 1
    %p53 = por %p51, %p52
    %p55 = scmp.ne.s32.totalorder %s38, %s54
    %p56 = scmp.eq.s32.totalorder %s18, 0
    %p57 = por %p55, %p56
    %s59 = sadd.s32 %s58, 1
    %p62 = scmp.eq.s32.totalorder %s12, 1
    %p63 = scmp.ne.s32.totalorder %s58, %s60
    %p64 = scmp.eq.s32.totalorder %s12, 0
    %p65 = por %p63, %p64
    %p66 = scmp.ne.s32.totalorder %s58, %s60
    %p67 = scmp.eq.s32.totalorder %s17, 1
    %p68 = por %p66, %p67
    %p69 = scmp.ne.s32.totalorder %s60, %s61
    %p70 = scmp.eq.s32.totalorder %s17, 0
    %p71 = por %p69, %p70
    %p72 = scmp.ne.s32.totalorder %s60, %s61
    %p73 = scmp.eq.s32.totalorder %s18, 1
    %p74 = por %p72, %p73
    %p76 = scmp.ne.s32.totalorder %s61, %s75
    %p77 = scmp.eq.s32.totalorder %s18, 0
    %p78 = por %p76, %p77
    %s80 = sadd.s32 %s79, 1
    %p83 = scmp.eq.s32.totalorder %s12, 1
    %p84 = scmp.ne.s32.totalorder %s79, %s81
    %p85 = scmp.eq.s32.totalorder %s12, 0
    %p86 = por %p84, %p85
    %p87 = scmp.ne.s32.totalorder %s79, %s81
    %p88 = scmp.eq.s32.totalorder %s17, 1
    %p89 = por %p87, %p88
    %p90 = scmp.ne.s32.totalorder %s81, %s82
    %p91 = scmp.eq.s32.totalorder %s17, 0
    %p92 = por %p90, %p91
    %p93 = scmp.ne.s32.totalorder %s81, %s82
    %p94 = scmp.eq.s32.totalorder %s18, 1
    %p95 = por %p93, %p94
    %p97 = scmp.ne.s32.totalorder %s82, %s96
    %p98 = scmp.eq.s32.totalorder %s18, 0
    %p99 = por %p97, %p98
    %s100 = ssub.s32 %s19, %s31
    %s101 = ssub.s32 %s20, %s27
    %s102 = sor.u32 %s100, %s101
    %p103 = scmp.eq.s32.totalorder %s102, 0
    %s105 = sadd.s32 %s104, 1
    %s106 = scalar_select %p103, %s104, %s105
    %p109 = pneg %p103
    %p110 = scmp.eq.s32.totalorder %s12, 1
    %p111 = por %p109, %p110
    %p112 = scmp.ne.s32.totalorder %s104, %s107
    %p113 = scmp.eq.s32.totalorder %s12, 0
    %p114 = por %p112, %p113
    %p115 = scmp.ne.s32.totalorder %s104, %s107
    %p116 = scmp.eq.s32.totalorder %s17, 1
    %p117 = por %p115, %p116
    %p118 = scmp.ne.s32.totalorder %s107, %s108
    %p119 = scmp.eq.s32.totalorder %s17, 0
    %p120 = por %p118, %p119
    %p121 = scmp.ne.s32.totalorder %s107, %s108
    %p122 = scmp.eq.s32.totalorder %s18, 1
    %p123 = por %p121, %p122
    %p125 = scmp.ne.s32.totalorder %s108, %s124
    %p126 = scmp.eq.s32.totalorder %s18, 0
    %p127 = por %p125, %p126
    %s128 = ssub.s32 %s19, %s31
    %s129 = ssub.s32 %s20, %s27
    %s130 = sor.u32 %s128, %s129
    %p131 = scmp.eq.s32.totalorder %s130, 0
    %s133 = sadd.s32 %s132, 1
    %s134 = scalar_select %p131, %s132, %s133
    %p137 = pneg %p131
    %p138 = scmp.eq.s32.totalorder %s12, 1
    %p139 = por %p137, %p138
    %p140 = scmp.ne.s32.totalorder %s132, %s135
    %p141 = scmp.eq.s32.totalorder %s12, 0
    %p142 = por %p140, %p141
    %p143 = scmp.ne.s32.totalorder %s132, %s135
    %p144 = scmp.eq.s32.totalorder %s17, 1
    %p145 = por %p143, %p144
    %p146 = scmp.ne.s32.totalorder %s135, %s136
    %p147 = scmp.eq.s32.totalorder %s17, 0
    %p148 = por %p146, %p147
    %p149 = scmp.ne.s32.totalorder %s135, %s136
    %p150 = scmp.eq.s32.totalorder %s18, 1
    %p151 = por %p149, %p150
    %p153 = scmp.ne.s32.totalorder %s136, %s152
    %p154 = scmp.eq.s32.totalorder %s18, 0
    %p155 = por %p153, %p154
    %s156 = ssub.s32 %s19, %s31
    %s157 = ssub.s32 %s20, %s27
    %s158 = sor.u32 %s156, %s157
    %p159 = scmp.eq.s32.totalorder %s158, 0
    %s161 = sadd.s32 %s160, 1
    %s162 = scalar_select %p159, %s160, %s161
    %p165 = pneg %p159
    %p166 = scmp.eq.s32.totalorder %s12, 1
    %p167 = por %p165, %p166
    %p168 = scmp.ne.s32.totalorder %s160, %s163
    %p169 = scmp.eq.s32.totalorder %s12, 0
    %p170 = por %p168, %p169
    %p171 = scmp.ne.s32.totalorder %s160, %s163
    %p172 = scmp.eq.s32.totalorder %s17, 1
    %p173 = por %p171, %p172
    %p174 = scmp.ne.s32.totalorder %s163, %s164
    %p175 = scmp.eq.s32.totalorder %s17, 0
    %p176 = por %p174, %p175
    %p177 = scmp.ne.s32.totalorder %s163, %s164
    %p178 = scmp.eq.s32.totalorder %s18, 1
    %p179 = por %p177, %p178
    %p181 = scmp.ne.s32.totalorder %s164, %s180
    %p182 = scmp.eq.s32.totalorder %s18, 0
    %p183 = por %p181, %p182
    %p184 = scmp.le.s32.totalorder 1, %s12
    %p185 = scmp.lt.s32.totalorder %s12, 3
    %p186 = pnand %p184, %p185
    %p187 = pneg %p186
    // Predicated region
    $region9: #{convlstm_cell_pallas.1} parent=5 // pred_check
      _
    $region10: #{convlstm_cell_pallas.1} parent=5 // pred_check_branch
      %189 = sbr.rel (%p186) target = $region12
    $region11: #{convlstm_cell_pallas.1} parent=5 // pred_region
      %s190 = ssub.s32 %s12, 1
      // Predicated region
      $region13: #{convlstm_cell_pallas.1} parent=11 // pred_check
        %p191 = pneg %p71
      $region14: #{convlstm_cell_pallas.1} parent=11 // pred_check_branch
        %193 = sbr.rel (%p191) target = $region16
      $region15: #{convlstm_cell_pallas.1} parent=11 // pred_region
        _
      $region16: #{convlstm_cell_pallas.1} parent=11 // pred_fallthru
        _
      // Predicated region
      $region17: #{convlstm_cell_pallas.1} parent=11 // pred_check
        %p194 = pneg %p92
      $region18: #{convlstm_cell_pallas.1} parent=11 // pred_check_branch
        %196 = sbr.rel (%p194) target = $region20
      $region19: #{convlstm_cell_pallas.1} parent=11 // pred_region
        _
      $region20: #{convlstm_cell_pallas.1} parent=11 // pred_fallthru
        _
    $region12: #{convlstm_cell_pallas.1} parent=5 // pred_fallthru
      _
    %p197 = scmp.lt.s32.totalorder %s12, 2
    // Predicated region
    $region21: #{convlstm_cell_pallas.1} parent=5 // pred_check
      %p198 = pneg %p197
    $region22: #{convlstm_cell_pallas.1} parent=5 // pred_check_branch
      %200 = sbr.rel (%p198) target = $region24
    $region23: #{convlstm_cell_pallas.1} parent=5 // pred_region
      // Predicated region
      $region25: #{convlstm_cell_pallas.1} parent=23 // pred_check
        %p201 = pneg %p44
      $region26: #{convlstm_cell_pallas.1} parent=23 // pred_check_branch
        %203 = sbr.rel (%p201) target = $region28
      $region27: #{convlstm_cell_pallas.1} parent=23 // pred_region
        %p204 = scmp.lt.s32.totalorder %s19, 1
        %s205 = scalar_select %p204, %s19, 1
        %s206 = smul.addr %s205, 25
        %s207 = smul.addr %s206, 8
        %s208 = scalar_lea.vmem %s0, %s207
      $region28: #{convlstm_cell_pallas.1} parent=23 // pred_fallthru
        _
      // Predicated region
      $region29: #{convlstm_cell_pallas.1} parent=23 // pred_check
        %p209 = pneg %p114
      $region30: #{convlstm_cell_pallas.1} parent=23 // pred_check_branch
        %211 = sbr.rel (%p209) target = $region32
      $region31: #{convlstm_cell_pallas.1} parent=23 // pred_region
        %s212 = smul.u32 4, %s20
        %p213 = scmp.lt.s32.totalorder %s19, 1
        %s214 = scalar_select %p213, %s19, 1
        %p215 = scmp.lt.s32.totalorder %s212, 3
        %s216 = scalar_select %p215, %s212, 3
        %s217 = smul.addr %s214, 16
        %s218 = sadd.s32 %s216, %s217
        %s219 = smul.addr %s218, 8
        %s220 = scalar_lea.vmem %s3, %s219
        %s221 = smul.u32 4, %s20
      $region32: #{convlstm_cell_pallas.1} parent=23 // pred_fallthru
        _
    $region24: #{convlstm_cell_pallas.1} parent=5 // pred_fallthru
      _
    %p222 = scmp.le.s32.totalorder 1, %s12
    %p223 = scmp.lt.s32.totalorder %s12, 3
    %p224 = pnand %p222, %p223
    %p225 = pneg %p224
    // Predicated region
    $region33: #{convlstm_cell_pallas.1} parent=5 // pred_check
      _
    $region34: #{convlstm_cell_pallas.1} parent=5 // pred_check_branch
      %227 = sbr.rel (%p224) target = $region36
    $region35: #{convlstm_cell_pallas.1} parent=5 // pred_region
      %s228 = ssub.s32 %s12, 1
      %p229 = scmp.lt.s32.totalorder %s21, 1
      %s230 = scalar_select %p229, %s21, 1
      %s231 = smul.addr %s230, 25
      %s232 = smul.addr %s231, 8
      %s233 = scalar_lea.vmem %s0, %s232
      %p234 = pneg %p50
      %p235 = pneg %p47
      %p236 = pneg %p71
      %p237 = pneg %p68
      %p238 = pneg %p92
      %p239 = pneg %p89
      %s240 = smul.u32 4, %s22
      %p241 = scmp.lt.s32.totalorder %s21, 1
      %s242 = scalar_select %p241, %s21, 1
      %p243 = scmp.lt.s32.totalorder %s240, 3
      %s244 = scalar_select %p243, %s240, 3
      %s245 = smul.addr %s242, 16
      %s246 = sadd.s32 %s244, %s245
      %s247 = smul.addr %s246, 8
      %s248 = scalar_lea.vmem %s3, %s247
      %p249 = pneg %p120
      %p250 = pneg %p117
      %p251 = pneg %p148
      %p252 = pneg %p145
      %s253 = smul.u32 4, %s22
      %p254 = scmp.lt.s32.totalorder %s21, 1
      %s255 = scalar_select %p254, %s21, 1
      %p256 = scmp.lt.s32.totalorder %s253, 3
      %s257 = scalar_select %p256, %s253, 3
      %s258 = smul.addr %s255, 16
      %s259 = sadd.s32 %s257, %s258
      %s260 = smul.addr %s259, 8
      %s261 = scalar_lea.vmem %s4, %s260
      %p262 = pneg %p176
      %p263 = pneg %p173
      %s264 = smul.u32 4, %s22
      %p265 = scmp.lt.s32.totalorder %s21, 1
      %s266 = scalar_select %p265, %s21, 1
      %p267 = scmp.lt.s32.totalorder %s264, 3
      %s268 = scalar_select %p267, %s264, 3
      %s269 = smul.addr %s266, 16
      %s270 = sadd.s32 %s268, %s269
      %s271 = smul.addr %s270, 8
      %s272 = scalar_lea.vmem %s5, %s271
      %p273 = scmp.lt.s32.totalorder %s21, 1
      %s274 = scalar_select %p273, %s21, 1
      %s275 = smul.addr %s274, 25
      %s276 = smul.addr %s275, 8
      %s277 = scalar_lea.vmem %s0, %s276
      %s278 = smul.u32 4, %s22
      %p279 = scmp.lt.s32.totalorder %s21, 1
      %s280 = scalar_select %p279, %s21, 1
      %p281 = scmp.lt.s32.totalorder %s278, 3
      %s282 = scalar_select %p281, %s278, 3
      %s283 = smul.addr %s280, 16
      %s284 = sadd.s32 %s282, %s283
      %s285 = smul.addr %s284, 8
      %s286 = scalar_lea.vmem %s3, %s285
      %s287 = smul.u32 4, %s22
      %s288 = smul.u32 4, %s22
      %p289 = scmp.lt.s32.totalorder %s21, 1
      %s290 = scalar_select %p289, %s21, 1
      %p291 = scmp.lt.s32.totalorder %s288, 3
      %s292 = scalar_select %p291, %s288, 3
      %s293 = smul.addr %s290, 16
      %s294 = sadd.s32 %s292, %s293
      %s295 = smul.addr %s294, 8
      %s296 = scalar_lea.vmem %s4, %s295
      %s297 = smul.u32 4, %s22
      %s298 = smul.u32 4, %s22
      %p299 = scmp.lt.s32.totalorder %s21, 1
      %s300 = scalar_select %p299, %s21, 1
      %p301 = scmp.lt.s32.totalorder %s298, 3
      %s302 = scalar_select %p301, %s298, 3
      %s303 = smul.addr %s300, 16
      %s304 = sadd.s32 %s302, %s303
      %s305 = smul.addr %s304, 8
      %s306 = scalar_lea.vmem %s5, %s305
      %s307 = smul.u32 4, %s22
      %v308 = vld [vmem:[%s2] sm:$0xff]
      %v309 = vld [vmem:[%s2 + $0x8] sm:$0xff]
      %v310 = vld [vmem:[%s2 + $0x10] sm:$0xff]
      %v311 = vld [vmem:[%s2 + $0x18] sm:$0xff]
      %v312 = vld [vmem:[%s2 + $0x20] sm:$0xff]
      %v313 = vld [vmem:[%s2 + $0x28] sm:$0xff]
      %v314 = vld [vmem:[%s2 + $0x30] sm:$0xff]
      %v315 = vld [vmem:[%s2 + $0x38] sm:$0xff]
      %v316 = vld [vmem:[%s2 + $0x40] sm:$0xff]
      %v317 = vld [vmem:[%s2 + $0x48] sm:$0xff]
      %v318 = vld [vmem:[%s2 + $0x50] sm:$0xff]
      %v319 = vld [vmem:[%s2 + $0x58] sm:$0xff]
      %v320 = vld [vmem:[%s2 + $0x60] sm:$0xff]
      %v321 = vld [vmem:[%s2 + $0x68] sm:$0xff]
      %v322 = vld [vmem:[%s2 + $0x70] sm:$0xff]
      %v323 = vld [vmem:[%s2 + $0x78] sm:$0xff]
      %s324 = smul.u32 %s22, 512
      %s325 = sshra.s32 %s324, 7
      %s326 = sand.u32 %s324, 127
      %s327 = smul.addr %s325, 8
      %s328 = scalar_lea.vmem %s277, %s327
      %v329 = vld [vmem:[%s328] sm:$0xff]
      %v330 = vld [vmem:[%s328 + $0x8] sm:$0xff]
      %v331 = vld [vmem:[%s328 + $0x10] sm:$0xff]
      %v332 = vld [vmem:[%s328 + $0x28] sm:$0xff]
      %v333 = vld [vmem:[%s328 + $0x30] sm:$0xff]
      %v334 = vld [vmem:[%s328 + $0x38] sm:$0xff]
      %v335 = vld [vmem:[%s328 + $0x50] sm:$0xff]
      %v336 = vld [vmem:[%s328 + $0x58] sm:$0xff]
      %v337 = vld [vmem:[%s328 + $0x60] sm:$0xff]
      %v338 = vld [vmem:[%s328 + $0x78] sm:$0xff]
      %v339 = vld [vmem:[%s328 + $0x80] sm:$0xff]
      %v340 = vld [vmem:[%s328 + $0x88] sm:$0xff]
      %v341 = vld [vmem:[%s328 + $0xa0] sm:$0xff]
      %v342 = vld [vmem:[%s328 + $0xa8] sm:$0xff]
      %v343 = vld [vmem:[%s328 + $0xb0] sm:$0xff]
      %344 = vst [vmem:[#allocation2] sm:$0xff] %v329
      %345 = vst [vmem:[#allocation2 + $0x8] sm:$0xff] %v330
      %346 = vst [vmem:[#allocation2 + $0x10] sm:$0xff] %v332
      %347 = vst [vmem:[#allocation2 + $0x18] sm:$0xff] %v333
      %348 = vst [vmem:[#allocation2 + $0x20] sm:$0xff] %v335
      %349 = vst [vmem:[#allocation2 + $0x28] sm:$0xff] %v336
      %350 = vst [vmem:[#allocation2 + $0x30] sm:$0xff] %v338
      %351 = vst [vmem:[#allocation2 + $0x38] sm:$0xff] %v339
      %352 = vst [vmem:[#allocation2 + $0x40] sm:$0xff] %v341
      %353 = vst [vmem:[#allocation2 + $0x48] sm:$0xff] %v342
      %369 = vrot.lane.b32.xlu0 %v329, 127
      %v370 = vpop.permute.xlu0 %369
      %371 = vrot.lane.b32.xlu0 %v330, 127
      %v372 = vpop.permute.xlu0 %371
      %373 = vrot.lane.b32.xlu0 %v331, 127
      %v374 = vpop.permute.xlu0 %373
      %375 = vrot.lane.b32.xlu0 %v332, 127
      %v376 = vpop.permute.xlu0 %375
      %377 = vrot.lane.b32.xlu0 %v333, 127
      %v378 = vpop.permute.xlu0 %377
      %379 = vrot.lane.b32.xlu0 %v334, 127
      %v380 = vpop.permute.xlu0 %379
      %381 = vrot.lane.b32.xlu0 %v335, 127
      %v382 = vpop.permute.xlu0 %381
      %383 = vrot.lane.b32.xlu0 %v336, 127
      %v384 = vpop.permute.xlu0 %383
      %385 = vrot.lane.b32.xlu0 %v337, 127
      %v386 = vpop.permute.xlu0 %385
      %387 = vrot.lane.b32.xlu0 %v338, 127
      %v388 = vpop.permute.xlu0 %387
      %389 = vrot.lane.b32.xlu0 %v339, 127
      %v390 = vpop.permute.xlu0 %389
      %391 = vrot.lane.b32.xlu0 %v340, 127
      %v392 = vpop.permute.xlu0 %391
      %393 = vrot.lane.b32.xlu0 %v341, 127
      %v394 = vpop.permute.xlu0 %393
      %395 = vrot.lane.b32.xlu0 %v342, 127
      %v396 = vpop.permute.xlu0 %395
      %397 = vrot.lane.b32.xlu0 %v343, 127
      %v398 = vpop.permute.xlu0 %397
      %vm399 = vcmask 1039360
      %v400 = vsel %vm399, %v370, %v372
      %v401 = vsel %vm399, %v372, %v374
      %v402 = vsel %vm399, %v376, %v378
      %v403 = vsel %vm399, %v378, %v380
      %v404 = vsel %vm399, %v382, %v384
      %v405 = vsel %vm399, %v384, %v386
      %v406 = vsel %vm399, %v388, %v390
      %v407 = vsel %vm399, %v390, %v392
      %v408 = vsel %vm399, %v394, %v396
      %v409 = vsel %vm399, %v396, %v398
      %420 = vst [vmem:[#allocation2 + $0x50] sm:$0xff] %v400
      %421 = vst [vmem:[#allocation2 + $0x58] sm:$0xff] %v401
      %422 = vst [vmem:[#allocation2 + $0x60] sm:$0xff] %v402
      %423 = vst [vmem:[#allocation2 + $0x68] sm:$0xff] %v403
      %424 = vst [vmem:[#allocation2 + $0x70] sm:$0xff] %v404
      %425 = vst [vmem:[#allocation2 + $0x78] sm:$0xff] %v405
      %426 = vst [vmem:[#allocation2 + $0x80] sm:$0xff] %v406
      %427 = vst [vmem:[#allocation2 + $0x88] sm:$0xff] %v407
      %428 = vst [vmem:[#allocation2 + $0x90] sm:$0xff] %v408
      %429 = vst [vmem:[#allocation2 + $0x98] sm:$0xff] %v409
      %430 = vrot.lane.b32.xlu0 %v329, 126
      %v431 = vpop.permute.xlu0 %430
      %432 = vrot.lane.b32.xlu0 %v330, 126
      %v433 = vpop.permute.xlu0 %432
      %434 = vrot.lane.b32.xlu0 %v331, 126
      %v435 = vpop.permute.xlu0 %434
      %436 = vrot.lane.b32.xlu0 %v332, 126
      %v437 = vpop.permute.xlu0 %436
      %438 = vrot.lane.b32.xlu0 %v333, 126
      %v439 = vpop.permute.xlu0 %438
      %440 = vrot.lane.b32.xlu0 %v334, 126
      %v441 = vpop.permute.xlu0 %440
      %442 = vrot.lane.b32.xlu0 %v335, 126
      %v443 = vpop.permute.xlu0 %442
      %444 = vrot.lane.b32.xlu0 %v336, 126
      %v445 = vpop.permute.xlu0 %444
      %446 = vrot.lane.b32.xlu0 %v337, 126
      %v447 = vpop.permute.xlu0 %446
      %448 = vrot.lane.b32.xlu0 %v338, 126
      %v449 = vpop.permute.xlu0 %448
      %450 = vrot.lane.b32.xlu0 %v339, 126
      %v451 = vpop.permute.xlu0 %450
      %452 = vrot.lane.b32.xlu0 %v340, 126
      %v453 = vpop.permute.xlu0 %452
      %454 = vrot.lane.b32.xlu0 %v341, 126
      %v455 = vpop.permute.xlu0 %454
      %456 = vrot.lane.b32.xlu0 %v342, 126
      %v457 = vpop.permute.xlu0 %456
      %458 = vrot.lane.b32.xlu0 %v343, 126
      %v459 = vpop.permute.xlu0 %458
      %vm460 = vcmask 1031168
      %v461 = vsel %vm460, %v431, %v433
      %v462 = vsel %vm460, %v433, %v435
      %v463 = vsel %vm460, %v437, %v439
      %v464 = vsel %vm460, %v439, %v441
      %v465 = vsel %vm460, %v443, %v445
      %v466 = vsel %vm460, %v445, %v447
      %v467 = vsel %vm460, %v449, %v451
      %v468 = vsel %vm460, %v451, %v453
      %v469 = vsel %vm460, %v455, %v457
      %v470 = vsel %vm460, %v457, %v459
      %481 = vst [vmem:[#allocation2 + $0xa0] sm:$0xff] %v461
      %482 = vst [vmem:[#allocation2 + $0xa8] sm:$0xff] %v462
      %483 = vst [vmem:[#allocation2 + $0xb0] sm:$0xff] %v463
      %484 = vst [vmem:[#allocation2 + $0xb8] sm:$0xff] %v464
      %485 = vst [vmem:[#allocation2 + $0xc0] sm:$0xff] %v465
      %486 = vst [vmem:[#allocation2 + $0xc8] sm:$0xff] %v466
      %487 = vst [vmem:[#allocation2 + $0xd0] sm:$0xff] %v467
      %488 = vst [vmem:[#allocation2 + $0xd8] sm:$0xff] %v468
      %489 = vst [vmem:[#allocation2 + $0xe0] sm:$0xff] %v469
      %490 = vst [vmem:[#allocation2 + $0xe8] sm:$0xff] %v470
      %491 = vrot.lane.b32.xlu0 %v329, 110
      %v492 = vpop.permute.xlu0 %491
      %493 = vrot.lane.b32.xlu0 %v330, 110
      %v494 = vpop.permute.xlu0 %493
      %495 = vrot.lane.b32.xlu0 %v331, 110
      %v496 = vpop.permute.xlu0 %495
      %497 = vrot.lane.b32.xlu0 %v332, 110
      %v498 = vpop.permute.xlu0 %497
      %499 = vrot.lane.b32.xlu0 %v333, 110
      %v500 = vpop.permute.xlu0 %499
      %501 = vrot.lane.b32.xlu0 %v334, 110
      %v502 = vpop.permute.xlu0 %501
      %503 = vrot.lane.b32.xlu0 %v335, 110
      %v504 = vpop.permute.xlu0 %503
      %505 = vrot.lane.b32.xlu0 %v336, 110
      %v506 = vpop.permute.xlu0 %505
      %507 = vrot.lane.b32.xlu0 %v337, 110
      %v508 = vpop.permute.xlu0 %507
      %509 = vrot.lane.b32.xlu0 %v338, 110
      %v510 = vpop.permute.xlu0 %509
      %511 = vrot.lane.b32.xlu0 %v339, 110
      %v512 = vpop.permute.xlu0 %511
      %513 = vrot.lane.b32.xlu0 %v340, 110
      %v514 = vpop.permute.xlu0 %513
      %515 = vrot.lane.b32.xlu0 %v341, 110
      %v516 = vpop.permute.xlu0 %515
      %517 = vrot.lane.b32.xlu0 %v342, 110
      %v518 = vpop.permute.xlu0 %517
      %519 = vrot.lane.b32.xlu0 %v343, 110
      %v520 = vpop.permute.xlu0 %519
      %vm521 = vcmask 900096
      %v522 = vsel %vm521, %v492, %v494
      %v523 = vsel %vm521, %v494, %v496
      %v524 = vsel %vm521, %v498, %v500
      %v525 = vsel %vm521, %v500, %v502
      %v526 = vsel %vm521, %v504, %v506
      %v527 = vsel %vm521, %v506, %v508
      %v528 = vsel %vm521, %v510, %v512
      %v529 = vsel %vm521, %v512, %v514
      %v530 = vsel %vm521, %v516, %v518
      %v531 = vsel %vm521, %v518, %v520
      %542 = vst [vmem:[#allocation2 + $0xf0] sm:$0xff] %v522
      %543 = vst [vmem:[#allocation2 + $0xf8] sm:$0xff] %v523
      %544 = vst [vmem:[#allocation2 + $0x100] sm:$0xff] %v524
      %545 = vst [vmem:[#allocation2 + $0x108] sm:$0xff] %v525
      %546 = vst [vmem:[#allocation2 + $0x110] sm:$0xff] %v526
      %547 = vst [vmem:[#allocation2 + $0x118] sm:$0xff] %v527
      %548 = vst [vmem:[#allocation2 + $0x120] sm:$0xff] %v528
      %549 = vst [vmem:[#allocation2 + $0x128] sm:$0xff] %v529
      %550 = vst [vmem:[#allocation2 + $0x130] sm:$0xff] %v530
      %551 = vst [vmem:[#allocation2 + $0x138] sm:$0xff] %v531
      %552 = vrot.lane.b32.xlu0 %v329, 109
      %v553 = vpop.permute.xlu0 %552
      %554 = vrot.lane.b32.xlu0 %v330, 109
      %v555 = vpop.permute.xlu0 %554
      %556 = vrot.lane.b32.xlu0 %v331, 109
      %v557 = vpop.permute.xlu0 %556
      %558 = vrot.lane.b32.xlu0 %v332, 109
      %v559 = vpop.permute.xlu0 %558
      %560 = vrot.lane.b32.xlu0 %v333, 109
      %v561 = vpop.permute.xlu0 %560
      %562 = vrot.lane.b32.xlu0 %v334, 109
      %v563 = vpop.permute.xlu0 %562
      %564 = vrot.lane.b32.xlu0 %v335, 109
      %v565 = vpop.permute.xlu0 %564
      %566 = vrot.lane.b32.xlu0 %v336, 109
      %v567 = vpop.permute.xlu0 %566
      %568 = vrot.lane.b32.xlu0 %v337, 109
      %v569 = vpop.permute.xlu0 %568
      %570 = vrot.lane.b32.xlu0 %v338, 109
      %v571 = vpop.permute.xlu0 %570
      %572 = vrot.lane.b32.xlu0 %v339, 109
      %v573 = vpop.permute.xlu0 %572
      %574 = vrot.lane.b32.xlu0 %v340, 109
      %v575 = vpop.permute.xlu0 %574
      %576 = vrot.lane.b32.xlu0 %v341, 109
      %v577 = vpop.permute.xlu0 %576
      %578 = vrot.lane.b32.xlu0 %v342, 109
      %v579 = vpop.permute.xlu0 %578
      %580 = vrot.lane.b32.xlu0 %v343, 109
      %v581 = vpop.permute.xlu0 %580
      %vm582 = vcmask 891904
      %v583 = vsel %vm582, %v553, %v555
      %v584 = vsel %vm582, %v555, %v557
      %v585 = vsel %vm582, %v559, %v561
      %v586 = vsel %vm582, %v561, %v563
      %v587 = vsel %vm582, %v565, %v567
      %v588 = vsel %vm582, %v567, %v569
      %v589 = vsel %vm582, %v571, %v573
      %v590 = vsel %vm582, %v573, %v575
      %v591 = vsel %vm582, %v577, %v579
      %v592 = vsel %vm582, %v579, %v581
      %603 = vst [vmem:[#allocation2 + $0x140] sm:$0xff] %v583
      %604 = vst [vmem:[#allocation2 + $0x148] sm:$0xff] %v584
      %605 = vst [vmem:[#allocation2 + $0x150] sm:$0xff] %v585
      %606 = vst [vmem:[#allocation2 + $0x158] sm:$0xff] %v586
      %607 = vst [vmem:[#allocation2 + $0x160] sm:$0xff] %v587
      %608 = vst [vmem:[#allocation2 + $0x168] sm:$0xff] %v588
      %609 = vst [vmem:[#allocation2 + $0x170] sm:$0xff] %v589
      %610 = vst [vmem:[#allocation2 + $0x178] sm:$0xff] %v590
      %611 = vst [vmem:[#allocation2 + $0x180] sm:$0xff] %v591
      %612 = vst [vmem:[#allocation2 + $0x188] sm:$0xff] %v592
      %613 = vrot.lane.b32.xlu0 %v329, 108
      %v614 = vpop.permute.xlu0 %613
      %615 = vrot.lane.b32.xlu0 %v330, 108
      %v616 = vpop.permute.xlu0 %615
      %617 = vrot.lane.b32.xlu0 %v331, 108
      %v618 = vpop.permute.xlu0 %617
      %619 = vrot.lane.b32.xlu0 %v332, 108
      %v620 = vpop.permute.xlu0 %619
      %621 = vrot.lane.b32.xlu0 %v333, 108
      %v622 = vpop.permute.xlu0 %621
      %623 = vrot.lane.b32.xlu0 %v334, 108
      %v624 = vpop.permute.xlu0 %623
      %625 = vrot.lane.b32.xlu0 %v335, 108
      %v626 = vpop.permute.xlu0 %625
      %627 = vrot.lane.b32.xlu0 %v336, 108
      %v628 = vpop.permute.xlu0 %627
      %629 = vrot.lane.b32.xlu0 %v337, 108
      %v630 = vpop.permute.xlu0 %629
      %631 = vrot.lane.b32.xlu0 %v338, 108
      %v632 = vpop.permute.xlu0 %631
      %633 = vrot.lane.b32.xlu0 %v339, 108
      %v634 = vpop.permute.xlu0 %633
      %635 = vrot.lane.b32.xlu0 %v340, 108
      %v636 = vpop.permute.xlu0 %635
      %637 = vrot.lane.b32.xlu0 %v341, 108
      %v638 = vpop.permute.xlu0 %637
      %639 = vrot.lane.b32.xlu0 %v342, 108
      %v640 = vpop.permute.xlu0 %639
      %641 = vrot.lane.b32.xlu0 %v343, 108
      %v642 = vpop.permute.xlu0 %641
      %vm643 = vcmask 883712
      %v644 = vsel %vm643, %v614, %v616
      %v645 = vsel %vm643, %v616, %v618
      %v646 = vsel %vm643, %v620, %v622
      %v647 = vsel %vm643, %v622, %v624
      %v648 = vsel %vm643, %v626, %v628
      %v649 = vsel %vm643, %v628, %v630
      %v650 = vsel %vm643, %v632, %v634
      %v651 = vsel %vm643, %v634, %v636
      %v652 = vsel %vm643, %v638, %v640
      %v653 = vsel %vm643, %v640, %v642
      %664 = vst [vmem:[#allocation2 + $0x190] sm:$0xff] %v644
      %665 = vst [vmem:[#allocation2 + $0x198] sm:$0xff] %v645
      %666 = vst [vmem:[#allocation2 + $0x1a0] sm:$0xff] %v646
      %667 = vst [vmem:[#allocation2 + $0x1a8] sm:$0xff] %v647
      %668 = vst [vmem:[#allocation2 + $0x1b0] sm:$0xff] %v648
      %669 = vst [vmem:[#allocation2 + $0x1b8] sm:$0xff] %v649
      %670 = vst [vmem:[#allocation2 + $0x1c0] sm:$0xff] %v650
      %671 = vst [vmem:[#allocation2 + $0x1c8] sm:$0xff] %v651
      %672 = vst [vmem:[#allocation2 + $0x1d0] sm:$0xff] %v652
      %673 = vst [vmem:[#allocation2 + $0x1d8] sm:$0xff] %v653
      %674 = vrot.lane.b32.xlu0 %v329, 92
      %v675 = vpop.permute.xlu0 %674
      %676 = vrot.lane.b32.xlu0 %v330, 92
      %v677 = vpop.permute.xlu0 %676
      %678 = vrot.lane.b32.xlu0 %v331, 92
      %v679 = vpop.permute.xlu0 %678
      %680 = vrot.lane.b32.xlu0 %v332, 92
      %v681 = vpop.permute.xlu0 %680
      %682 = vrot.lane.b32.xlu0 %v333, 92
      %v683 = vpop.permute.xlu0 %682
      %684 = vrot.lane.b32.xlu0 %v334, 92
      %v685 = vpop.permute.xlu0 %684
      %686 = vrot.lane.b32.xlu0 %v335, 92
      %v687 = vpop.permute.xlu0 %686
      %688 = vrot.lane.b32.xlu0 %v336, 92
      %v689 = vpop.permute.xlu0 %688
      %690 = vrot.lane.b32.xlu0 %v337, 92
      %v691 = vpop.permute.xlu0 %690
      %692 = vrot.lane.b32.xlu0 %v338, 92
      %v693 = vpop.permute.xlu0 %692
      %694 = vrot.lane.b32.xlu0 %v339, 92
      %v695 = vpop.permute.xlu0 %694
      %696 = vrot.lane.b32.xlu0 %v340, 92
      %v697 = vpop.permute.xlu0 %696
      %698 = vrot.lane.b32.xlu0 %v341, 92
      %v699 = vpop.permute.xlu0 %698
      %700 = vrot.lane.b32.xlu0 %v342, 92
      %v701 = vpop.permute.xlu0 %700
      %702 = vrot.lane.b32.xlu0 %v343, 92
      %v703 = vpop.permute.xlu0 %702
      %vm704 = vcmask 752640
      %v705 = vsel %vm704, %v675, %v677
      %v706 = vsel %vm704, %v677, %v679
      %v707 = vsel %vm704, %v681, %v683
      %v708 = vsel %vm704, %v683, %v685
      %v709 = vsel %vm704, %v687, %v689
      %v710 = vsel %vm704, %v689, %v691
      %v711 = vsel %vm704, %v693, %v695
      %v712 = vsel %vm704, %v695, %v697
      %v713 = vsel %vm704, %v699, %v701
      %v714 = vsel %vm704, %v701, %v703
      %725 = vst [vmem:[#allocation2 + $0x1e0] sm:$0xff] %v705
      %726 = vst [vmem:[#allocation2 + $0x1e8] sm:$0xff] %v706
      %727 = vst [vmem:[#allocation2 + $0x1f0] sm:$0xff] %v707
      %728 = vst [vmem:[#allocation2 + $0x1f8] sm:$0xff] %v708
      %729 = vst [vmem:[#allocation2 + $0x200] sm:$0xff] %v709
      %730 = vst [vmem:[#allocation2 + $0x208] sm:$0xff] %v710
      %731 = vst [vmem:[#allocation2 + $0x210] sm:$0xff] %v711
      %732 = vst [vmem:[#allocation2 + $0x218] sm:$0xff] %v712
      %733 = vst [vmem:[#allocation2 + $0x220] sm:$0xff] %v713
      %734 = vst [vmem:[#allocation2 + $0x228] sm:$0xff] %v714
      %735 = vrot.lane.b32.xlu0 %v329, 91
      %v736 = vpop.permute.xlu0 %735
      %737 = vrot.lane.b32.xlu0 %v330, 91
      %v738 = vpop.permute.xlu0 %737
      %739 = vrot.lane.b32.xlu0 %v331, 91
      %v740 = vpop.permute.xlu0 %739
      %741 = vrot.lane.b32.xlu0 %v332, 91
      %v742 = vpop.permute.xlu0 %741
      %743 = vrot.lane.b32.xlu0 %v333, 91
      %v744 = vpop.permute.xlu0 %743
      %745 = vrot.lane.b32.xlu0 %v334, 91
      %v746 = vpop.permute.xlu0 %745
      %747 = vrot.lane.b32.xlu0 %v335, 91
      %v748 = vpop.permute.xlu0 %747
      %749 = vrot.lane.b32.xlu0 %v336, 91
      %v750 = vpop.permute.xlu0 %749
      %751 = vrot.lane.b32.xlu0 %v337, 91
      %v752 = vpop.permute.xlu0 %751
      %753 = vrot.lane.b32.xlu0 %v338, 91
      %v754 = vpop.permute.xlu0 %753
      %755 = vrot.lane.b32.xlu0 %v339, 91
      %v756 = vpop.permute.xlu0 %755
      %757 = vrot.lane.b32.xlu0 %v340, 91
      %v758 = vpop.permute.xlu0 %757
      %759 = vrot.lane.b32.xlu0 %v341, 91
      %v760 = vpop.permute.xlu0 %759
      %761 = vrot.lane.b32.xlu0 %v342, 91
      %v762 = vpop.permute.xlu0 %761
      %763 = vrot.lane.b32.xlu0 %v343, 91
      %v764 = vpop.permute.xlu0 %763
      %vm765 = vcmask 744448
      %v766 = vsel %vm765, %v736, %v738
      %v767 = vsel %vm765, %v738, %v740
      %v768 = vsel %vm765, %v742, %v744
      %v769 = vsel %vm765, %v744, %v746
      %v770 = vsel %vm765, %v748, %v750
      %v771 = vsel %vm765, %v750, %v752
      %v772 = vsel %vm765, %v754, %v756
      %v773 = vsel %vm765, %v756, %v758
      %v774 = vsel %vm765, %v760, %v762
      %v775 = vsel %vm765, %v762, %v764
      %786 = vst [vmem:[#allocation2 + $0x230] sm:$0xff] %v766
      %787 = vst [vmem:[#allocation2 + $0x238] sm:$0xff] %v767
      %788 = vst [vmem:[#allocation2 + $0x240] sm:$0xff] %v768
      %789 = vst [vmem:[#allocation2 + $0x248] sm:$0xff] %v769
      %790 = vst [vmem:[#allocation2 + $0x250] sm:$0xff] %v770
      %791 = vst [vmem:[#allocation2 + $0x258] sm:$0xff] %v771
      %792 = vst [vmem:[#allocation2 + $0x260] sm:$0xff] %v772
      %793 = vst [vmem:[#allocation2 + $0x268] sm:$0xff] %v773
      %794 = vst [vmem:[#allocation2 + $0x270] sm:$0xff] %v774
      %795 = vst [vmem:[#allocation2 + $0x278] sm:$0xff] %v775
      %796 = vrot.lane.b32.xlu0 %v329, 90
      %v797 = vpop.permute.xlu0 %796
      %798 = vrot.lane.b32.xlu0 %v330, 90
      %v799 = vpop.permute.xlu0 %798
      %800 = vrot.lane.b32.xlu0 %v331, 90
      %v801 = vpop.permute.xlu0 %800
      %802 = vrot.lane.b32.xlu0 %v332, 90
      %v803 = vpop.permute.xlu0 %802
      %804 = vrot.lane.b32.xlu0 %v333, 90
      %v805 = vpop.permute.xlu0 %804
      %806 = vrot.lane.b32.xlu0 %v334, 90
      %v807 = vpop.permute.xlu0 %806
      %808 = vrot.lane.b32.xlu0 %v335, 90
      %v809 = vpop.permute.xlu0 %808
      %810 = vrot.lane.b32.xlu0 %v336, 90
      %v811 = vpop.permute.xlu0 %810
      %812 = vrot.lane.b32.xlu0 %v337, 90
      %v813 = vpop.permute.xlu0 %812
      %814 = vrot.lane.b32.xlu0 %v338, 90
      %v815 = vpop.permute.xlu0 %814
      %816 = vrot.lane.b32.xlu0 %v339, 90
      %v817 = vpop.permute.xlu0 %816
      %818 = vrot.lane.b32.xlu0 %v340, 90
      %v819 = vpop.permute.xlu0 %818
      %820 = vrot.lane.b32.xlu0 %v341, 90
      %v821 = vpop.permute.xlu0 %820
      %822 = vrot.lane.b32.xlu0 %v342, 90
      %v823 = vpop.permute.xlu0 %822
      %824 = vrot.lane.b32.xlu0 %v343, 90
      %v825 = vpop.permute.xlu0 %824
      %vm826 = vcmask 736256
      %v827 = vsel %vm826, %v797, %v799
      %v828 = vsel %vm826, %v799, %v801
      %v829 = vsel %vm826, %v803, %v805
      %v830 = vsel %vm826, %v805, %v807
      %v831 = vsel %vm826, %v809, %v811
      %v832 = vsel %vm826, %v811, %v813
      %v833 = vsel %vm826, %v815, %v817
      %v834 = vsel %vm826, %v817, %v819
      %v835 = vsel %vm826, %v821, %v823
      %v836 = vsel %vm826, %v823, %v825
      %847 = vst [vmem:[#allocation2 + $0x280] sm:$0xff] %v827
      %848 = vst [vmem:[#allocation2 + $0x288] sm:$0xff] %v828
      %849 = vst [vmem:[#allocation2 + $0x290] sm:$0xff] %v829
      %850 = vst [vmem:[#allocation2 + $0x298] sm:$0xff] %v830
      %851 = vst [vmem:[#allocation2 + $0x2a0] sm:$0xff] %v831
      %852 = vst [vmem:[#allocation2 + $0x2a8] sm:$0xff] %v832
      %853 = vst [vmem:[#allocation2 + $0x2b0] sm:$0xff] %v833
      %854 = vst [vmem:[#allocation2 + $0x2b8] sm:$0xff] %v834
      %855 = vst [vmem:[#allocation2 + $0x2c0] sm:$0xff] %v835
      %856 = vst [vmem:[#allocation2 + $0x2c8] sm:$0xff] %v836
      %v857 = vld [vmem:[%s1] sm:$0xff]
      %v858 = vld [vmem:[%s1 + $0x8] sm:$0xff]
      %v859 = vld [vmem:[%s1 + $0x10] sm:$0xff]
      %v860 = vld [vmem:[%s1 + $0x18] sm:$0xff]
      %v861 = vld [vmem:[%s1 + $0x20] sm:$0xff]
      %v862 = vld [vmem:[%s1 + $0x28] sm:$0xff]
      %v863 = vld [vmem:[%s1 + $0x30] sm:$0xff]
      %v864 = vld [vmem:[%s1 + $0x38] sm:$0xff]
      %v865 = vld [vmem:[%s1 + $0x40] sm:$0xff]
      %v866 = vld [vmem:[%s1 + $0x48] sm:$0xff]
      %v867 = vld [vmem:[%s1 + $0x50] sm:$0xff]
      %v868 = vld [vmem:[%s1 + $0x58] sm:$0xff]
      %v869 = vld [vmem:[%s1 + $0x60] sm:$0xff]
      %v870 = vld [vmem:[%s1 + $0x68] sm:$0xff]
      %v871 = vld [vmem:[%s1 + $0x70] sm:$0xff]
      %v872 = vld [vmem:[%s1 + $0x78] sm:$0xff]
      %v873 = vld [vmem:[%s1 + $0x80] sm:$0xff]
      %v874 = vld [vmem:[%s1 + $0x88] sm:$0xff]
      %v875 = vld [vmem:[%s1 + $0x90] sm:$0xff]
      %v876 = vld [vmem:[%s1 + $0x98] sm:$0xff]
      %v877 = vld [vmem:[%s1 + $0xa0] sm:$0xff]
      %v878 = vld [vmem:[%s1 + $0xa8] sm:$0xff]
      %v879 = vld [vmem:[%s1 + $0xb0] sm:$0xff]
      %v880 = vld [vmem:[%s1 + $0xb8] sm:$0xff]
      %v881 = vld [vmem:[%s1 + $0xc0] sm:$0xff]
      %v882 = vld [vmem:[%s1 + $0xc8] sm:$0xff]
      %v883 = vld [vmem:[%s1 + $0xd0] sm:$0xff]
      %v884 = vld [vmem:[%s1 + $0xd8] sm:$0xff]
      %v885 = vld [vmem:[%s1 + $0xe0] sm:$0xff]
      %v886 = vld [vmem:[%s1 + $0xe8] sm:$0xff]
      %v887 = vld [vmem:[%s1 + $0xf0] sm:$0xff]
      %v888 = vld [vmem:[%s1 + $0xf8] sm:$0xff]
      %v889 = vld [vmem:[%s1 + $0x100] sm:$0xff]
      %v890 = vld [vmem:[%s1 + $0x108] sm:$0xff]
      %v891 = vld [vmem:[%s1 + $0x110] sm:$0xff]
      %v892 = vld [vmem:[%s1 + $0x118] sm:$0xff]
      %v893 = vld [vmem:[%s1 + $0x120] sm:$0xff]
      %v894 = vld [vmem:[%s1 + $0x128] sm:$0xff]
      %v895 = vld [vmem:[%s1 + $0x130] sm:$0xff]
      %v896 = vld [vmem:[%s1 + $0x138] sm:$0xff]
      %v897 = vld [vmem:[%s1 + $0x140] sm:$0xff]
      %v898 = vld [vmem:[%s1 + $0x148] sm:$0xff]
      %v899 = vld [vmem:[%s1 + $0x150] sm:$0xff]
      %v900 = vld [vmem:[%s1 + $0x158] sm:$0xff]
      %v901 = vld [vmem:[%s1 + $0x160] sm:$0xff]
      %v902 = vld [vmem:[%s1 + $0x168] sm:$0xff]
      %v903 = vld [vmem:[%s1 + $0x170] sm:$0xff]
      %v904 = vld [vmem:[%s1 + $0x178] sm:$0xff]
      %v905 = vld [vmem:[#allocation2] sm:$0xff]
      %v906 = vld [vmem:[#allocation2 + $0x8] sm:$0xff]
      %v907 = vld [vmem:[#allocation2 + $0x10] sm:$0xff]
      %v908 = vld [vmem:[#allocation2 + $0x18] sm:$0xff]
      %v909 = vld [vmem:[#allocation2 + $0x20] sm:$0xff]
      %v910 = vld [vmem:[#allocation2 + $0x28] sm:$0xff]
      %v911 = vld [vmem:[#allocation2 + $0x30] sm:$0xff]
      %v912 = vld [vmem:[#allocation2 + $0x38] sm:$0xff]
      %v913 = vld [vmem:[#allocation2 + $0x40] sm:$0xff]
      %v914 = vld [vmem:[#allocation2 + $0x48] sm:$0xff]
      %v915 = vld [vmem:[#allocation2 + $0x50] sm:$0xff]
      %v916 = vld [vmem:[#allocation2 + $0x58] sm:$0xff]
      %v917 = vld [vmem:[#allocation2 + $0x60] sm:$0xff]
      %v918 = vld [vmem:[#allocation2 + $0x68] sm:$0xff]
      %v919 = vld [vmem:[#allocation2 + $0x70] sm:$0xff]
      %v920 = vld [vmem:[#allocation2 + $0x78] sm:$0xff]
      %v921 = vld [vmem:[#allocation2 + $0x80] sm:$0xff]
      %v922 = vld [vmem:[#allocation2 + $0x88] sm:$0xff]
      %v923 = vld [vmem:[#allocation2 + $0x90] sm:$0xff]
      %v924 = vld [vmem:[#allocation2 + $0x98] sm:$0xff]
      %v925 = vld [vmem:[#allocation2 + $0xa0] sm:$0xff]
      %v926 = vld [vmem:[#allocation2 + $0xa8] sm:$0xff]
      %v927 = vld [vmem:[#allocation2 + $0xb0] sm:$0xff]
      %v928 = vld [vmem:[#allocation2 + $0xb8] sm:$0xff]
      %v929 = vld [vmem:[#allocation2 + $0xc0] sm:$0xff]
      %v930 = vld [vmem:[#allocation2 + $0xc8] sm:$0xff]
      %v931 = vld [vmem:[#allocation2 + $0xd0] sm:$0xff]
      %v932 = vld [vmem:[#allocation2 + $0xd8] sm:$0xff]
      %v933 = vld [vmem:[#allocation2 + $0xe0] sm:$0xff]
      %v934 = vld [vmem:[#allocation2 + $0xe8] sm:$0xff]
      %v935 = vld [vmem:[#allocation2 + $0xf0] sm:$0xff]
      %v936 = vld [vmem:[#allocation2 + $0xf8] sm:$0xff]
      %v937 = vld [vmem:[#allocation2 + $0x100] sm:$0xff]
      %v938 = vld [vmem:[#allocation2 + $0x108] sm:$0xff]
      %v939 = vld [vmem:[#allocation2 + $0x110] sm:$0xff]
      %v940 = vld [vmem:[#allocation2 + $0x118] sm:$0xff]
      %v941 = vld [vmem:[#allocation2 + $0x120] sm:$0xff]
      %v942 = vld [vmem:[#allocation2 + $0x128] sm:$0xff]
      %v943 = vld [vmem:[#allocation2 + $0x130] sm:$0xff]
      %v944 = vld [vmem:[#allocation2 + $0x138] sm:$0xff]
      %v945 = vld [vmem:[#allocation2 + $0x140] sm:$0xff]
      %v946 = vld [vmem:[#allocation2 + $0x148] sm:$0xff]
      %v947 = vld [vmem:[#allocation2 + $0x150] sm:$0xff]
      %v948 = vld [vmem:[#allocation2 + $0x158] sm:$0xff]
      %v949 = vld [vmem:[#allocation2 + $0x160] sm:$0xff]
      %v950 = vld [vmem:[#allocation2 + $0x168] sm:$0xff]
      %v951 = vld [vmem:[#allocation2 + $0x170] sm:$0xff]
      %v952 = vld [vmem:[#allocation2 + $0x178] sm:$0xff]
      %v953 = vld [vmem:[#allocation2 + $0x180] sm:$0xff]
      %v954 = vld [vmem:[#allocation2 + $0x188] sm:$0xff]
      %v955 = vld [vmem:[#allocation2 + $0x190] sm:$0xff]
      %v956 = vld [vmem:[#allocation2 + $0x198] sm:$0xff]
      %v957 = vld [vmem:[#allocation2 + $0x1a0] sm:$0xff]
      %v958 = vld [vmem:[#allocation2 + $0x1a8] sm:$0xff]
      %v959 = vld [vmem:[#allocation2 + $0x1b0] sm:$0xff]
      %v960 = vld [vmem:[#allocation2 + $0x1b8] sm:$0xff]
      %v961 = vld [vmem:[#allocation2 + $0x1c0] sm:$0xff]
      %v962 = vld [vmem:[#allocation2 + $0x1c8] sm:$0xff]
      %v963 = vld [vmem:[#allocation2 + $0x1d0] sm:$0xff]
      %v964 = vld [vmem:[#allocation2 + $0x1d8] sm:$0xff]
      %v965 = vld [vmem:[#allocation2 + $0x1e0] sm:$0xff]
      %v966 = vld [vmem:[#allocation2 + $0x1e8] sm:$0xff]
      %v967 = vld [vmem:[#allocation2 + $0x1f0] sm:$0xff]
      %v968 = vld [vmem:[#allocation2 + $0x1f8] sm:$0xff]
      %v969 = vld [vmem:[#allocation2 + $0x200] sm:$0xff]
      %v970 = vld [vmem:[#allocation2 + $0x208] sm:$0xff]
      %v971 = vld [vmem:[#allocation2 + $0x210] sm:$0xff]
      %v972 = vld [vmem:[#allocation2 + $0x218] sm:$0xff]
      %v973 = vld [vmem:[#allocation2 + $0x220] sm:$0xff]
      %v974 = vld [vmem:[#allocation2 + $0x228] sm:$0xff]
      %v975 = vld [vmem:[#allocation2 + $0x230] sm:$0xff]
      %v976 = vld [vmem:[#allocation2 + $0x238] sm:$0xff]
      %v977 = vld [vmem:[#allocation2 + $0x240] sm:$0xff]
      %v978 = vld [vmem:[#allocation2 + $0x248] sm:$0xff]
      %v979 = vld [vmem:[#allocation2 + $0x250] sm:$0xff]
      %v980 = vld [vmem:[#allocation2 + $0x258] sm:$0xff]
      %v981 = vld [vmem:[#allocation2 + $0x260] sm:$0xff]
      %v982 = vld [vmem:[#allocation2 + $0x268] sm:$0xff]
      %v983 = vld [vmem:[#allocation2 + $0x270] sm:$0xff]
      %v984 = vld [vmem:[#allocation2 + $0x278] sm:$0xff]
      %v985 = vld [vmem:[#allocation2 + $0x280] sm:$0xff]
      %v986 = vld [vmem:[#allocation2 + $0x288] sm:$0xff]
      %v987 = vld [vmem:[#allocation2 + $0x290] sm:$0xff]
      %v988 = vld [vmem:[#allocation2 + $0x298] sm:$0xff]
      %v989 = vld [vmem:[#allocation2 + $0x2a0] sm:$0xff]
      %v990 = vld [vmem:[#allocation2 + $0x2a8] sm:$0xff]
      %v991 = vld [vmem:[#allocation2 + $0x2b0] sm:$0xff]
      %v992 = vld [vmem:[#allocation2 + $0x2b8] sm:$0xff]
      %v993 = vld [vmem:[#allocation2 + $0x2c0] sm:$0xff]
      %v994 = vld [vmem:[#allocation2 + $0x2c8] sm:$0xff]
      %996 = vset.pattern.permute.xlu0 0
      %997 = vperm.xlu0 %996, %v308
      %v998 = vpop.permute.xlu0 %997
      %1001 = vset.pattern.permute.xlu0 0
      %1002 = vperm.xlu0 %1001, %v309
      %v1003 = vpop.permute.xlu0 %1002
      %1006 = vset.pattern.permute.xlu0 0
      %1007 = vperm.xlu0 %1006, %v310
      %v1008 = vpop.permute.xlu0 %1007
      %1011 = vset.pattern.permute.xlu0 0
      %1012 = vperm.xlu0 %1011, %v311
      %v1013 = vpop.permute.xlu0 %1012
      %1016 = vset.pattern.permute.xlu0 0
      %1017 = vperm.xlu0 %1016, %v312
      %v1018 = vpop.permute.xlu0 %1017
      %1021 = vset.pattern.permute.xlu0 0
      %1022 = vperm.xlu0 %1021, %v313
      %v1023 = vpop.permute.xlu0 %1022
      %1026 = vset.pattern.permute.xlu0 0
      %1027 = vperm.xlu0 %1026, %v314
      %v1028 = vpop.permute.xlu0 %1027
      %1031 = vset.pattern.permute.xlu0 0
      %1032 = vperm.xlu0 %1031, %v315
      %v1033 = vpop.permute.xlu0 %1032
      %1036 = vset.pattern.permute.xlu0 0
      %1037 = vperm.xlu0 %1036, %v316
      %v1038 = vpop.permute.xlu0 %1037
      %1041 = vset.pattern.permute.xlu0 0
      %1042 = vperm.xlu0 %1041, %v317
      %v1043 = vpop.permute.xlu0 %1042
      %1046 = vset.pattern.permute.xlu0 0
      %1047 = vperm.xlu0 %1046, %v318
      %v1048 = vpop.permute.xlu0 %1047
      %1051 = vset.pattern.permute.xlu0 0
      %1052 = vperm.xlu0 %1051, %v319
      %v1053 = vpop.permute.xlu0 %1052
      %1056 = vset.pattern.permute.xlu0 0
      %1057 = vperm.xlu0 %1056, %v320
      %v1058 = vpop.permute.xlu0 %1057
      %1061 = vset.pattern.permute.xlu0 0
      %1062 = vperm.xlu0 %1061, %v321
      %v1063 = vpop.permute.xlu0 %1062
      %1066 = vset.pattern.permute.xlu0 0
      %1067 = vperm.xlu0 %1066, %v322
      %v1068 = vpop.permute.xlu0 %1067
      %1071 = vset.pattern.permute.xlu0 0
      %1072 = vperm.xlu0 %1071, %v323
      %v1073 = vpop.permute.xlu0 %1072
      %vm1075 = vcmask 850944
      %v1077 = vsel %vm1075, %v859, 0
      %v1080 = vsel %vm1075, %v862, 0
      %v1083 = vsel %vm1075, %v865, 0
      %v1086 = vsel %vm1075, %v868, 0
      %v1089 = vsel %vm1075, %v871, 0
      %v1092 = vsel %vm1075, %v874, 0
      %v1095 = vsel %vm1075, %v877, 0
      %v1098 = vsel %vm1075, %v880, 0
      %v1101 = vsel %vm1075, %v883, 0
      %v1104 = vsel %vm1075, %v886, 0
      %v1107 = vsel %vm1075, %v889, 0
      %v1110 = vsel %vm1075, %v892, 0
      %v1113 = vsel %vm1075, %v895, 0
      %v1116 = vsel %vm1075, %v898, 0
      %v1119 = vsel %vm1075, %v901, 0
      %v1122 = vsel %vm1075, %v904, 0
      %1124 = vmatprep.subr.mxu0 %v906
      %1125 = vmatpush1.msra.mxu0 %v905
      %1126 = vmatprep.subr.mxu0 %v908
      %1127 = vmatpush1.msra.mxu0 %v907
      %1128 = vmatprep.subr.mxu0 %v910
      %1129 = vmatpush1.msra.mxu0 %v909
      %1130 = vmatprep.subr.mxu0 %v912
      %1131 = vmatpush1.msra.mxu0 %v911
      %1132 = vmatprep.subr.mxu0 %v914
      %1133 = vmatpush1.msra.mxu0 %v913
      %1134 = vmatprep.subr.mxu0 %v916
      %1135 = vmatpush1.msra.mxu0 %v915
      %1136 = vmatprep.subr.mxu0 %v918
      %1137 = vmatpush1.msra.mxu0 %v917
      %1138 = vmatprep.subr.mxu0 %v920
      %1139 = vmatpush1.msra.mxu0 %v919
      %1140 = vmatprep.subr.mxu0 %v922
      %1141 = vmatpush1.msra.mxu0 %v921
      %1142 = vmatprep.subr.mxu0 %v924
      %1143 = vmatpush1.msra.mxu0 %v923
      %1144 = vmatprep.subr.mxu0 %v926
      %1145 = vmatpush1.msra.mxu0 %v925
      %1146 = vmatprep.subr.mxu0 %v928
      %1147 = vmatpush1.msra.mxu0 %v927
      %1148 = vmatprep.subr.mxu0 %v930
      %1149 = vmatpush1.msra.mxu0 %v929
      %1150 = vmatprep.subr.mxu0 %v932
      %1151 = vmatpush1.msra.mxu0 %v931
      %1152 = vmatprep.subr.mxu0 %v934
      %1153 = vmatpush1.msra.mxu0 %v933
      %1154 = vmatprep.subr.mxu0 %v936
      %1155 = vmatpush1.msra.mxu0 %v935
      %1156 = vmatprep.subr.mxu0 %v938
      %1157 = vmatpush1.msra.mxu0 %v937
      %1158 = vmatprep.subr.mxu0 %v940
      %1159 = vmatpush1.msra.mxu0 %v939
      %1160 = vmatprep.subr.mxu0 %v942
      %1161 = vmatpush1.msra.mxu0 %v941
      %1162 = vmatprep.subr.mxu0 %v944
      %1163 = vmatpush1.msra.mxu0 %v943
      %1164 = vmatprep.subr.mxu0 %v946
      %1165 = vmatpush1.msra.mxu0 %v945
      %1166 = vmatprep.subr.mxu0 %v948
      %1167 = vmatpush1.msra.mxu0 %v947
      %1168 = vmatprep.subr.mxu0 %v950
      %1169 = vmatpush1.msra.mxu0 %v949
      %1170 = vmatprep.subr.mxu0 %v952
      %1171 = vmatpush1.msra.mxu0 %v951
      %1172 = vmatprep.subr.mxu0 %v954
      %1173 = vmatpush1.msra.mxu0 %v953
      %1174 = vmatprep.subr.mxu0 %v956
      %1175 = vmatpush1.msra.mxu0 %v955
      %1176 = vmatprep.subr.mxu0 %v958
      %1177 = vmatpush1.msra.mxu0 %v957
      %1178 = vmatprep.subr.mxu0 %v960
      %1179 = vmatpush1.msra.mxu0 %v959
      %1180 = vmatprep.subr.mxu0 %v962
      %1181 = vmatpush1.msra.mxu0 %v961
      %1182 = vmatprep.subr.mxu0 %v964
      %1183 = vmatpush1.msra.mxu0 %v963
      %1184 = vmatprep.subr.mxu0 %v966
      %1185 = vmatpush1.msra.mxu0 %v965
      %1186 = vmatprep.subr.mxu0 %v968
      %1187 = vmatpush1.msra.mxu0 %v967
      %1188 = vmatprep.mubr.f32.mxu0 %v858
      %1189 = vmatmul.mubr.f32.gmra.mrb[0].mxu0 %v857
      %v1190 = vpop.f32.mrb[0].mxu0
      %v1191 = vadd.f32 %v998, %v1190
      %v1192 = vpop.f32.mrb[0].mxu0
      %v1193 = vadd.f32 %v998, %v1192
      %1194 = vmatprep.mubr.f32.mxu0 %v861
      %1195 = vmatmul.mubr.f32.gmra.mrb[0].mxu0 %v860
      %v1196 = vpop.f32.mrb[0].mxu0
      %v1197 = vadd.f32 %v1003, %v1196
      %v1198 = vpop.f32.mrb[0].mxu0
      %v1199 = vadd.f32 %v1003, %v1198
      %1200 = vmatprep.mubr.f32.mxu0 %v864
      %1201 = vmatmul.mubr.f32.gmra.mrb[0].mxu0 %v863
      %v1202 = vpop.f32.mrb[0].mxu0
      %v1203 = vadd.f32 %v1008, %v1202
      %v1204 = vpop.f32.mrb[0].mxu0
      %v1205 = vadd.f32 %v1008, %v1204
      %1206 = vmatprep.mubr.f32.mxu0 %v867
      %1207 = vmatmul.mubr.f32.gmra.mrb[0].mxu0 %v866
      %v1208 = vpop.f32.mrb[0].mxu0
      %v1209 = vadd.f32 %v1013, %v1208
      %v1210 = vpop.f32.mrb[0].mxu0
      %v1211 = vadd.f32 %v1013, %v1210
      %1212 = vmatprep.mubr.f32.mxu0 %v870
      %1213 = vmatmul.mubr.f32.gmra.mrb[0].mxu0 %v869
      %v1214 = vpop.f32.mrb[0].mxu0
      %v1215 = vadd.f32 %v1018, %v1214
      %v1216 = vpop.f32.mrb[0].mxu0
      %v1217 = vadd.f32 %v1018, %v1216
      %1218 = vmatprep.mubr.f32.mxu0 %v873
      %1219 = vmatmul.mubr.f32.gmra.mrb[0].mxu0 %v872
      %v1220 = vpop.f32.mrb[0].mxu0
      %v1221 = vadd.f32 %v1023, %v1220
      %v1222 = vpop.f32.mrb[0].mxu0
      %v1223 = vadd.f32 %v1023, %v1222
      %1224 = vmatprep.mubr.f32.mxu0 %v876
      %1225 = vmatmul.mubr.f32.gmra.mrb[0].mxu0 %v875
      %v1226 = vpop.f32.mrb[0].mxu0
      %v1227 = vadd.f32 %v1028, %v1226
      %v1228 = vpop.f32.mrb[0].mxu0
      %v1229 = vadd.f32 %v1028, %v1228
      %1230 = vmatprep.mubr.f32.mxu0 %v879
      %1231 = vmatmul.mubr.f32.gmra.mrb[0].mxu0 %v878
      %v1232 = vpop.f32.mrb[0].mxu0
      %v1233 = vadd.f32 %v1033, %v1232
      %v1234 = vpop.f32.mrb[0].mxu0
      %v1235 = vadd.f32 %v1033, %v1234
      %1236 = vmatprep.mubr.f32.mxu0 %v882
      %1237 = vmatmul.mubr.f32.gmra.mrb[0].mxu0 %v881
      %v1238 = vpop.f32.mrb[0].mxu0
      %v1239 = vadd.f32 %v1038, %v1238
      %v1240 = vpop.f32.mrb[0].mxu0
      %v1241 = vadd.f32 %v1038, %v1240
      %1242 = vmatprep.mubr.f32.mxu0 %v885
      %1243 = vmatmul.mubr.f32.gmra.mrb[0].mxu0 %v884
      %v1244 = vpop.f32.mrb[0].mxu0
      %v1245 = vadd.f32 %v1043, %v1244
      %v1246 = vpop.f32.mrb[0].mxu0
      %v1247 = vadd.f32 %v1043, %v1246
      %1248 = vmatprep.mubr.f32.mxu0 %v888
      %1249 = vmatmul.mubr.f32.gmra.mrb[0].mxu0 %v887
      %v1250 = vpop.f32.mrb[0].mxu0
      %v1251 = vadd.f32 %v1048, %v1250
      %v1252 = vpop.f32.mrb[0].mxu0
      %v1253 = vadd.f32 %v1048, %v1252
      %1254 = vmatprep.mubr.f32.mxu0 %v891
      %1255 = vmatmul.mubr.f32.gmra.mrb[0].mxu0 %v890
      %v1256 = vpop.f32.mrb[0].mxu0
      %v1257 = vadd.f32 %v1053, %v1256
      %v1258 = vpop.f32.mrb[0].mxu0
      %v1259 = vadd.f32 %v1053, %v1258
      %1260 = vmatprep.mubr.f32.mxu0 %v894
      %1261 = vmatmul.mubr.f32.gmra.mrb[0].mxu0 %v893
      %v1262 = vpop.f32.mrb[0].mxu0
      %v1263 = vadd.f32 %v1058, %v1262
      %v1264 = vpop.f32.mrb[0].mxu0
      %v1265 = vadd.f32 %v1058, %v1264
      %1266 = vmatprep.mubr.f32.mxu0 %v897
      %1267 = vmatmul.mubr.f32.gmra.mrb[0].mxu0 %v896
      %v1268 = vpop.f32.mrb[0].mxu0
      %v1269 = vadd.f32 %v1063, %v1268
      %v1270 = vpop.f32.mrb[0].mxu0
      %v1271 = vadd.f32 %v1063, %v1270
      %1272 = vmatprep.mubr.f32.mxu0 %v900
      %1273 = vmatmul.mubr.f32.gmra.mrb[0].mxu0 %v899
      %v1274 = vpop.f32.mrb[0].mxu0
      %v1275 = vadd.f32 %v1068, %v1274
      %v1276 = vpop.f32.mrb[0].mxu0
      %v1277 = vadd.f32 %v1068, %v1276
      %1278 = vmatprep.mubr.f32.mxu0 %v903
      %1279 = vmatmul.mubr.f32.gmra.mrb[0].mxu0 %v902
      %v1280 = vpop.f32.mrb[0].mxu0
      %v1281 = vadd.f32 %v1073, %v1280
      %v1282 = vpop.f32.mrb[0].mxu0
      %v1283 = vadd.f32 %v1073, %v1282
      %1284 = vdwg.mxu0
      %1285 = vmatprep.subr.mxu0 %v970
      %1286 = vmatpush1.msra.mxu0 %v969
      %1287 = vmatprep.subr.mxu0 %v972
      %1288 = vmatpush1.msra.mxu0 %v971
      %1289 = vmatprep.subr.mxu0 %v974
      %1290 = vmatpush1.msra.mxu0 %v973
      %1291 = vmatprep.subr.mxu0 %v976
      %1292 = vmatpush1.msra.mxu0 %v975
      %1293 = vmatprep.subr.mxu0 %v978
      %1294 = vmatpush1.msra.mxu0 %v977
      %1295 = vmatprep.subr.mxu0 %v980
      %1296 = vmatpush1.msra.mxu0 %v979
      %1297 = vmatprep.subr.mxu0 %v982
      %1298 = vmatpush1.msra.mxu0 %v981
      %1299 = vmatprep.subr.mxu0 %v984
      %1300 = vmatpush1.msra.mxu0 %v983
      %1301 = vmatprep.subr.mxu0 %v986
      %1302 = vmatpush1.msra.mxu0 %v985
      %1303 = vmatprep.subr.mxu0 %v988
      %1304 = vmatpush1.msra.mxu0 %v987
      %1305 = vmatprep.subr.mxu0 %v990
      %1306 = vmatpush1.msra.mxu0 %v989
      %1307 = vmatprep.subr.mxu0 %v992
      %1308 = vmatpush1.msra.mxu0 %v991
      %1309 = vmatprep.subr.mxu0 %v994
      %1310 = vmatpush1.msra.mxu0 %v993
      %1311 = vmatprep.subr.mxu0 0.0
      %1312 = vmatpush1.msra.mxu0 0.0
      %1313 = vmatprep.subr.mxu0 0.0
      %1314 = vmatpush1.msra.mxu0 0.0
      %1315 = vmatprep.subr.mxu0 0.0
      %1316 = vmatpush1.msra.mxu0 0.0
      %1317 = vmatprep.subr.mxu0 0.0
      %1318 = vmatpush1.msra.mxu0 0.0
      %1319 = vmatprep.subr.mxu0 0.0
      %1320 = vmatpush1.msra.mxu0 0.0
      %1321 = vmatprep.subr.mxu0 0.0
      %1322 = vmatpush1.msra.mxu0 0.0
      %1323 = vmatprep.subr.mxu0 0.0
      %1324 = vmatpush1.msra.mxu0 0.0
      %1325 = vmatprep.subr.mxu0 0.0
      %1326 = vmatpush1.msra.mxu0 0.0
      %1327 = vmatprep.subr.mxu0 0.0
      %1328 = vmatpush1.msra.mxu0 0.0
      %1329 = vmatprep.subr.mxu0 0.0
      %1330 = vmatpush1.msra.mxu0 0.0
      %1331 = vmatprep.subr.mxu0 0.0
      %1332 = vmatpush1.msra.mxu0 0.0
      %1333 = vmatprep.subr.mxu0 0.0
      %1334 = vmatpush1.msra.mxu0 0.0
      %1335 = vmatprep.subr.mxu0 0.0
      %1336 = vmatpush1.msra.mxu0 0.0
      %1337 = vmatprep.subr.mxu0 0.0
      %1338 = vmatpush1.msra.mxu0 0.0
      %1339 = vmatprep.subr.mxu0 0.0
      %1340 = vmatpush1.msra.mxu0 0.0
      %1341 = vmatprep.subr.mxu0 0.0
      %1342 = vmatpush1.msra.mxu0 0.0
      %1343 = vmatprep.subr.mxu0 0.0
      %1344 = vmatpush1.msra.mxu0 0.0
      %1345 = vmatprep.subr.mxu0 0.0
      %1346 = vmatpush1.msra.mxu0 0.0
      %1347 = vmatprep.subr.mxu0 0.0
      %1348 = vmatpush1.msra.mxu0 0.0
      %1349 = vmatprep.mubr.f32.mxu0 0.0
      %1350 = vmatmul.mubr.f32.gmra.mrb[0].mxu0 %v1077
      %v1351 = vpop.f32.mrb[0].mxu0
      %v1352 = vadd.f32 %v1191, %v1351
      %v1353 = vpop.f32.mrb[0].mxu0
      %v1354 = vadd.f32 %v1193, %v1353
      %1355 = vmatprep.mubr.f32.mxu0 0.0
      %1356 = vmatmul.mubr.f32.gmra.mrb[0].mxu0 %v1080
      %v1357 = vpop.f32.mrb[0].mxu0
      %v1358 = vadd.f32 %v1197, %v1357
      %v1359 = vpop.f32.mrb[0].mxu0
      %v1360 = vadd.f32 %v1199, %v1359
      %1361 = vmatprep.mubr.f32.mxu0 0.0
      %1362 = vmatmul.mubr.f32.gmra.mrb[0].mxu0 %v1083
      %v1363 = vpop.f32.mrb[0].mxu0
      %v1364 = vadd.f32 %v1203, %v1363
      %v1365 = vpop.f32.mrb[0].mxu0
      %v1366 = vadd.f32 %v1205, %v1365
      %1367 = vmatprep.mubr.f32.mxu0 0.0
      %1368 = vmatmul.mubr.f32.gmra.mrb[0].mxu0 %v1086
      %v1369 = vpop.f32.mrb[0].mxu0
      %v1370 = vadd.f32 %v1209, %v1369
      %v1371 = vpop.f32.mrb[0].mxu0
      %v1372 = vadd.f32 %v1211, %v1371
      %1373 = vmatprep.mubr.f32.mxu0 0.0
      %1374 = vmatmul.mubr.f32.gmra.mrb[0].mxu0 %v1089
      %v1375 = vpop.f32.mrb[0].mxu0
      %v1376 = vadd.f32 %v1215, %v1375
      %v1377 = vpop.f32.mrb[0].mxu0
      %v1378 = vadd.f32 %v1217, %v1377
      %1379 = vmatprep.mubr.f32.mxu0 0.0
      %1380 = vmatmul.mubr.f32.gmra.mrb[0].mxu0 %v1092
      %v1381 = vpop.f32.mrb[0].mxu0
      %v1382 = vadd.f32 %v1221, %v1381
      %v1383 = vpop.f32.mrb[0].mxu0
      %v1384 = vadd.f32 %v1223, %v1383
      %1385 = vmatprep.mubr.f32.mxu0 0.0
      %1386 = vmatmul.mubr.f32.gmra.mrb[0].mxu0 %v1095
      %v1387 = vpop.f32.mrb[0].mxu0
      %v1388 = vadd.f32 %v1227, %v1387
      %v1389 = vpop.f32.mrb[0].mxu0
      %v1390 = vadd.f32 %v1229, %v1389
      %1391 = vmatprep.mubr.f32.mxu0 0.0
      %1392 = vmatmul.mubr.f32.gmra.mrb[0].mxu0 %v1098
      %v1393 = vpop.f32.mrb[0].mxu0
      %v1394 = vadd.f32 %v1233, %v1393
      %v1395 = vpop.f32.mrb[0].mxu0
      %v1396 = vadd.f32 %v1235, %v1395
      %1397 = vmatprep.mubr.f32.mxu0 0.0
      %1398 = vmatmul.mubr.f32.gmra.mrb[0].mxu0 %v1101
      %v1399 = vpop.f32.mrb[0].mxu0
      %v1400 = vadd.f32 %v1239, %v1399
      %v1401 = vpop.f32.mrb[0].mxu0
      %v1402 = vadd.f32 %v1241, %v1401
      %1403 = vmatprep.mubr.f32.mxu0 0.0
      %1404 = vmatmul.mubr.f32.gmra.mrb[0].mxu0 %v1104
      %v1405 = vpop.f32.mrb[0].mxu0
      %v1406 = vadd.f32 %v1245, %v1405
      %v1407 = vpop.f32.mrb[0].mxu0
      %v1408 = vadd.f32 %v1247, %v1407
      %1409 = vmatprep.mubr.f32.mxu0 0.0
      %1410 = vmatmul.mubr.f32.gmra.mrb[0].mxu0 %v1107
      %v1411 = vpop.f32.mrb[0].mxu0
      %v1412 = vadd.f32 %v1251, %v1411
      %v1413 = vpop.f32.mrb[0].mxu0
      %v1414 = vadd.f32 %v1253, %v1413
      %1415 = vmatprep.mubr.f32.mxu0 0.0
      %1416 = vmatmul.mubr.f32.gmra.mrb[0].mxu0 %v1110
      %v1417 = vpop.f32.mrb[0].mxu0
      %v1418 = vadd.f32 %v1257, %v1417
      %v1419 = vpop.f32.mrb[0].mxu0
      %v1420 = vadd.f32 %v1259, %v1419
      %1421 = vmatprep.mubr.f32.mxu0 0.0
      %1422 = vmatmul.mubr.f32.gmra.mrb[0].mxu0 %v1113
      %v1423 = vpop.f32.mrb[0].mxu0
      %v1424 = vadd.f32 %v1263, %v1423
      %v1425 = vpop.f32.mrb[0].mxu0
      %v1426 = vadd.f32 %v1265, %v1425
      %1427 = vmatprep.mubr.f32.mxu0 0.0
      %1428 = vmatmul.mubr.f32.gmra.mrb[0].mxu0 %v1116
      %v1429 = vpop.f32.mrb[0].mxu0
      %v1430 = vadd.f32 %v1269, %v1429
      %v1431 = vpop.f32.mrb[0].mxu0
      %v1432 = vadd.f32 %v1271, %v1431
      %1433 = vmatprep.mubr.f32.mxu0 0.0
      %1434 = vmatmul.mubr.f32.gmra.mrb[0].mxu0 %v1119
      %v1435 = vpop.f32.mrb[0].mxu0
      %v1436 = vadd.f32 %v1275, %v1435
      %v1437 = vpop.f32.mrb[0].mxu0
      %v1438 = vadd.f32 %v1277, %v1437
      %1439 = vmatprep.mubr.f32.mxu0 0.0
      %1440 = vmatmul.mubr.f32.gmra.mrb[0].mxu0 %v1122
      %v1441 = vpop.f32.mrb[0].mxu0
      %v1442 = vadd.f32 %v1281, %v1441
      %v1443 = vpop.f32.mrb[0].mxu0
      %v1444 = vadd.f32 %v1283, %v1443
      %1445 = vdwg.mxu0
      %v1446 = vxor.u32 %v1352, 2147483648
      %v1447 = vxor.u32 %v1354, 2147483648
      %v1448 = vxor.u32 %v1358, 2147483648
      %v1449 = vxor.u32 %v1360, 2147483648
      %v1450 = vxor.u32 %v1364, 2147483648
      %v1451 = vxor.u32 %v1366, 2147483648
      %v1452 = vxor.u32 %v1370, 2147483648
      %v1453 = vxor.u32 %v1372, 2147483648
      %v1454 = vmul.f32 %v1446, 1.442695
      %v1455 = vpow.pop %v1454
      %v1456 = vmul.f32 %v1447, 1.442695
      %v1457 = vpow.pop %v1456
      %v1458 = vmul.f32 %v1448, 1.442695
      %v1459 = vpow.pop %v1458
      %v1460 = vmul.f32 %v1449, 1.442695
      %v1461 = vpow.pop %v1460
      %v1462 = vmul.f32 %v1450, 1.442695
      %v1463 = vpow.pop %v1462
      %v1464 = vmul.f32 %v1451, 1.442695
      %v1465 = vpow.pop %v1464
      %v1466 = vmul.f32 %v1452, 1.442695
      %v1467 = vpow.pop %v1466
      %v1468 = vmul.f32 %v1453, 1.442695
      %v1469 = vpow.pop %v1468
      %v1470 = vadd.f32 %v1455, 1.0
      %v1471 = vadd.f32 %v1457, 1.0
      %v1472 = vadd.f32 %v1459, 1.0
      %v1473 = vadd.f32 %v1461, 1.0
      %v1474 = vadd.f32 %v1463, 1.0
      %v1475 = vadd.f32 %v1465, 1.0
      %v1476 = vadd.f32 %v1467, 1.0
      %v1477 = vadd.f32 %v1469, 1.0
      %v1478 = vrcp.pop %v1470
      %v1479 = vmul.f32 1.0, %v1478
      %v1480 = vrcp.pop %v1471
      %v1481 = vmul.f32 1.0, %v1480
      %v1482 = vrcp.pop %v1472
      %v1483 = vmul.f32 1.0, %v1482
      %v1484 = vrcp.pop %v1473
      %v1485 = vmul.f32 1.0, %v1484
      %v1486 = vrcp.pop %v1474
      %v1487 = vmul.f32 1.0, %v1486
      %v1488 = vrcp.pop %v1475
      %v1489 = vmul.f32 1.0, %v1488
      %v1490 = vrcp.pop %v1476
      %v1491 = vmul.f32 1.0, %v1490
      %v1492 = vrcp.pop %v1477
      %v1493 = vmul.f32 1.0, %v1492
      %v1494 = vxor.u32 %v1376, 2147483648
      %v1495 = vxor.u32 %v1378, 2147483648
      %v1496 = vxor.u32 %v1382, 2147483648
      %v1497 = vxor.u32 %v1384, 2147483648
      %v1498 = vxor.u32 %v1388, 2147483648
      %v1499 = vxor.u32 %v1390, 2147483648
      %v1500 = vxor.u32 %v1394, 2147483648
      %v1501 = vxor.u32 %v1396, 2147483648
      %v1502 = vmul.f32 %v1494, 1.442695
      %v1503 = vpow.pop %v1502
      %v1504 = vmul.f32 %v1495, 1.442695
      %v1505 = vpow.pop %v1504
      %v1506 = vmul.f32 %v1496, 1.442695
      %v1507 = vpow.pop %v1506
      %v1508 = vmul.f32 %v1497, 1.442695
      %v1509 = vpow.pop %v1508
      %v1510 = vmul.f32 %v1498, 1.442695
      %v1511 = vpow.pop %v1510
      %v1512 = vmul.f32 %v1499, 1.442695
      %v1513 = vpow.pop %v1512
      %v1514 = vmul.f32 %v1500, 1.442695
      %v1515 = vpow.pop %v1514
      %v1516 = vmul.f32 %v1501, 1.442695
      %v1517 = vpow.pop %v1516
      %v1518 = vadd.f32 %v1503, 1.0
      %v1519 = vadd.f32 %v1505, 1.0
      %v1520 = vadd.f32 %v1507, 1.0
      %v1521 = vadd.f32 %v1509, 1.0
      %v1522 = vadd.f32 %v1511, 1.0
      %v1523 = vadd.f32 %v1513, 1.0
      %v1524 = vadd.f32 %v1515, 1.0
      %v1525 = vadd.f32 %v1517, 1.0
      %v1526 = vrcp.pop %v1518
      %v1527 = vmul.f32 1.0, %v1526
      %v1528 = vrcp.pop %v1519
      %v1529 = vmul.f32 1.0, %v1528
      %v1530 = vrcp.pop %v1520
      %v1531 = vmul.f32 1.0, %v1530
      %v1532 = vrcp.pop %v1521
      %v1533 = vmul.f32 1.0, %v1532
      %v1534 = vrcp.pop %v1522
      %v1535 = vmul.f32 1.0, %v1534
      %v1536 = vrcp.pop %v1523
      %v1537 = vmul.f32 1.0, %v1536
      %v1538 = vrcp.pop %v1524
      %v1539 = vmul.f32 1.0, %v1538
      %v1540 = vrcp.pop %v1525
      %v1541 = vmul.f32 1.0, %v1540
      %v1542 = vxor.u32 %v1400, 2147483648
      %v1543 = vxor.u32 %v1402, 2147483648
      %v1544 = vxor.u32 %v1406, 2147483648
      %v1545 = vxor.u32 %v1408, 2147483648
      %v1546 = vxor.u32 %v1412, 2147483648
      %v1547 = vxor.u32 %v1414, 2147483648
      %v1548 = vxor.u32 %v1418, 2147483648
      %v1549 = vxor.u32 %v1420, 2147483648
      %v1550 = vmul.f32 %v1542, 1.442695
      %v1551 = vpow.pop %v1550
      %v1552 = vmul.f32 %v1543, 1.442695
      %v1553 = vpow.pop %v1552
      %v1554 = vmul.f32 %v1544, 1.442695
      %v1555 = vpow.pop %v1554
      %v1556 = vmul.f32 %v1545, 1.442695
      %v1557 = vpow.pop %v1556
      %v1558 = vmul.f32 %v1546, 1.442695
      %v1559 = vpow.pop %v1558
      %v1560 = vmul.f32 %v1547, 1.442695
      %v1561 = vpow.pop %v1560
      %v1562 = vmul.f32 %v1548, 1.442695
      %v1563 = vpow.pop %v1562
      %v1564 = vmul.f32 %v1549, 1.442695
      %v1565 = vpow.pop %v1564
      %v1566 = vadd.f32 %v1551, 1.0
      %v1567 = vadd.f32 %v1553, 1.0
      %v1568 = vadd.f32 %v1555, 1.0
      %v1569 = vadd.f32 %v1557, 1.0
      %v1570 = vadd.f32 %v1559, 1.0
      %v1571 = vadd.f32 %v1561, 1.0
      %v1572 = vadd.f32 %v1563, 1.0
      %v1573 = vadd.f32 %v1565, 1.0
      %v1574 = vrcp.pop %v1566
      %v1575 = vmul.f32 1.0, %v1574
      %v1576 = vrcp.pop %v1567
      %v1577 = vmul.f32 1.0, %v1576
      %v1578 = vrcp.pop %v1568
      %v1579 = vmul.f32 1.0, %v1578
      %v1580 = vrcp.pop %v1569
      %v1581 = vmul.f32 1.0, %v1580
      %v1582 = vrcp.pop %v1570
      %v1583 = vmul.f32 1.0, %v1582
      %v1584 = vrcp.pop %v1571
      %v1585 = vmul.f32 1.0, %v1584
      %v1586 = vrcp.pop %v1572
      %v1587 = vmul.f32 1.0, %v1586
      %v1588 = vrcp.pop %v1573
      %v1589 = vmul.f32 1.0, %v1588
      %v1590 = vtanh.pop %v1424
      %v1591 = vtanh.pop %v1426
      %v1592 = vtanh.pop %v1430
      %v1593 = vtanh.pop %v1432
      %v1594 = vtanh.pop %v1436
      %v1595 = vtanh.pop %v1438
      %v1596 = vtanh.pop %v1442
      %v1597 = vtanh.pop %v1444
      %v1598 = vld [vmem:[%s286] sm:$0xff]
      %v1599 = vld [vmem:[%s286 + $0x8] sm:$0xff]
      %v1600 = vld [vmem:[%s286 + $0x20] sm:$0xff]
      %v1601 = vld [vmem:[%s286 + $0x28] sm:$0xff]
      %v1602 = vld [vmem:[%s286 + $0x40] sm:$0xff]
      %v1603 = vld [vmem:[%s286 + $0x48] sm:$0xff]
      %v1604 = vld [vmem:[%s286 + $0x60] sm:$0xff]
      %v1605 = vld [vmem:[%s286 + $0x68] sm:$0xff]
      %v1606 = vmul.f32 %v1527, %v1598
      %v1607 = vmul.f32 %v1529, %v1599
      %v1608 = vmul.f32 %v1531, %v1600
      %v1609 = vmul.f32 %v1533, %v1601
      %v1610 = vmul.f32 %v1535, %v1602
      %v1611 = vmul.f32 %v1537, %v1603
      %v1612 = vmul.f32 %v1539, %v1604
      %v1613 = vmul.f32 %v1541, %v1605
      %v1614 = vmul.f32 %v1479, %v1590
      %v1615 = vmul.f32 %v1481, %v1591
      %v1616 = vmul.f32 %v1483, %v1592
      %v1617 = vmul.f32 %v1485, %v1593
      %v1618 = vmul.f32 %v1487, %v1594
      %v1619 = vmul.f32 %v1489, %v1595
      %v1620 = vmul.f32 %v1491, %v1596
      %v1621 = vmul.f32 %v1493, %v1597
      %v1622 = vadd.f32 %v1606, %v1614
      %v1623 = vadd.f32 %v1607, %v1615
      %v1624 = vadd.f32 %v1608, %v1616
      %v1625 = vadd.f32 %v1609, %v1617
      %v1626 = vadd.f32 %v1610, %v1618
      %v1627 = vadd.f32 %v1611, %v1619
      %v1628 = vadd.f32 %v1612, %v1620
      %v1629 = vadd.f32 %v1613, %v1621
      %v1630 = vtanh.pop %v1622
      %v1631 = vtanh.pop %v1623
      %v1632 = vtanh.pop %v1624
      %v1633 = vtanh.pop %v1625
      %v1634 = vtanh.pop %v1626
      %v1635 = vtanh.pop %v1627
      %v1636 = vtanh.pop %v1628
      %v1637 = vtanh.pop %v1629
      %v1638 = vmul.f32 %v1575, %v1630
      %v1639 = vmul.f32 %v1577, %v1631
      %v1640 = vmul.f32 %v1579, %v1632
      %v1641 = vmul.f32 %v1581, %v1633
      %v1642 = vmul.f32 %v1583, %v1634
      %v1643 = vmul.f32 %v1585, %v1635
      %v1644 = vmul.f32 %v1587, %v1636
      %v1645 = vmul.f32 %v1589, %v1637
      %1646 = vst [vmem:[%s306] sm:$0xff] %v1622
      %1647 = vst [vmem:[%s306 + $0x8] sm:$0xff] %v1623
      %1648 = vst [vmem:[%s306 + $0x20] sm:$0xff] %v1624
      %1649 = vst [vmem:[%s306 + $0x28] sm:$0xff] %v1625
      %1650 = vst [vmem:[%s306 + $0x40] sm:$0xff] %v1626
      %1651 = vst [vmem:[%s306 + $0x48] sm:$0xff] %v1627
      %1652 = vst [vmem:[%s306 + $0x60] sm:$0xff] %v1628
      %1653 = vst [vmem:[%s306 + $0x68] sm:$0xff] %v1629
      %1654 = vst [vmem:[%s296] sm:$0xff] %v1638
      %1655 = vst [vmem:[%s296 + $0x8] sm:$0xff] %v1639
      %1656 = vst [vmem:[%s296 + $0x20] sm:$0xff] %v1640
      %1657 = vst [vmem:[%s296 + $0x28] sm:$0xff] %v1641
      %1658 = vst [vmem:[%s296 + $0x40] sm:$0xff] %v1642
      %1659 = vst [vmem:[%s296 + $0x48] sm:$0xff] %v1643
      %1660 = vst [vmem:[%s296 + $0x60] sm:$0xff] %v1644
      %1661 = vst [vmem:[%s296 + $0x68] sm:$0xff] %v1645
      %s1662 = sadd.s32 %s324, 256
      %s1663 = sshra.s32 %s1662, 7
      %s1664 = sand.u32 %s1662, 127
      %s1665 = smul.addr %s1663, 8
      %s1666 = scalar_lea.vmem %s277, %s1665
      %v1667 = vld [vmem:[%s1666] sm:$0xff]
      %v1668 = vld [vmem:[%s1666 + $0x8] sm:$0xff]
      %v1669 = vld [vmem:[%s1666 + $0x10] sm:$0xff]
      %v1670 = vld [vmem:[%s1666 + $0x28] sm:$0xff]
      %v1671 = vld [vmem:[%s1666 + $0x30] sm:$0xff]
      %v1672 = vld [vmem:[%s1666 + $0x38] sm:$0xff]
      %v1673 = vld [vmem:[%s1666 + $0x50] sm:$0xff]
      %v1674 = vld [vmem:[%s1666 + $0x58] sm:$0xff]
      %v1675 = vld [vmem:[%s1666 + $0x60] sm:$0xff]
      %v1676 = vld [vmem:[%s1666 + $0x78] sm:$0xff]
      %v1677 = vld [vmem:[%s1666 + $0x80] sm:$0xff]
      %v1678 = vld [vmem:[%s1666 + $0x88] sm:$0xff]
      %v1679 = vld [vmem:[%s1666 + $0xa0] sm:$0xff]
      %v1680 = vld [vmem:[%s1666 + $0xa8] sm:$0xff]
      %v1681 = vld [vmem:[%s1666 + $0xb0] sm:$0xff]
      %1682 = vst [vmem:[#allocation2] sm:$0xff] %v1667
      %1683 = vst [vmem:[#allocation2 + $0x8] sm:$0xff] %v1668
      %1684 = vst [vmem:[#allocation2 + $0x10] sm:$0xff] %v1670
      %1685 = vst [vmem:[#allocation2 + $0x18] sm:$0xff] %v1671
      %1686 = vst [vmem:[#allocation2 + $0x20] sm:$0xff] %v1673
      %1687 = vst [vmem:[#allocation2 + $0x28] sm:$0xff] %v1674
      %1688 = vst [vmem:[#allocation2 + $0x30] sm:$0xff] %v1676
      %1689 = vst [vmem:[#allocation2 + $0x38] sm:$0xff] %v1677
      %1690 = vst [vmem:[#allocation2 + $0x40] sm:$0xff] %v1679
      %1691 = vst [vmem:[#allocation2 + $0x48] sm:$0xff] %v1680
      %1707 = vrot.lane.b32.xlu0 %v1667, 127
      %v1708 = vpop.permute.xlu0 %1707
      %1709 = vrot.lane.b32.xlu0 %v1668, 127
      %v1710 = vpop.permute.xlu0 %1709
      %1711 = vrot.lane.b32.xlu0 %v1669, 127
      %v1712 = vpop.permute.xlu0 %1711
      %1713 = vrot.lane.b32.xlu0 %v1670, 127
      %v1714 = vpop.permute.xlu0 %1713
      %1715 = vrot.lane.b32.xlu0 %v1671, 127
      %v1716 = vpop.permute.xlu0 %1715
      %1717 = vrot.lane.b32.xlu0 %v1672, 127
      %v1718 = vpop.permute.xlu0 %1717
      %1719 = vrot.lane.b32.xlu0 %v1673, 127
      %v1720 = vpop.permute.xlu0 %1719
      %1721 = vrot.lane.b32.xlu0 %v1674, 127
      %v1722 = vpop.permute.xlu0 %1721
      %1723 = vrot.lane.b32.xlu0 %v1675, 127
      %v1724 = vpop.permute.xlu0 %1723
      %1725 = vrot.lane.b32.xlu0 %v1676, 127
      %v1726 = vpop.permute.xlu0 %1725
      %1727 = vrot.lane.b32.xlu0 %v1677, 127
      %v1728 = vpop.permute.xlu0 %1727
      %1729 = vrot.lane.b32.xlu0 %v1678, 127
      %v1730 = vpop.permute.xlu0 %1729
      %1731 = vrot.lane.b32.xlu0 %v1679, 127
      %v1732 = vpop.permute.xlu0 %1731
      %1733 = vrot.lane.b32.xlu0 %v1680, 127
      %v1734 = vpop.permute.xlu0 %1733
      %1735 = vrot.lane.b32.xlu0 %v1681, 127
      %v1736 = vpop.permute.xlu0 %1735
      %v1737 = vsel %vm399, %v1708, %v1710
      %v1738 = vsel %vm399, %v1710, %v1712
      %v1739 = vsel %vm399, %v1714, %v1716
      %v1740 = vsel %vm399, %v1716, %v1718
      %v1741 = vsel %vm399, %v1720, %v1722
      %v1742 = vsel %vm399, %v1722, %v1724
      %v1743 = vsel %vm399, %v1726, %v1728
      %v1744 = vsel %vm399, %v1728, %v1730
      %v1745 = vsel %vm399, %v1732, %v1734
      %v1746 = vsel %vm399, %v1734, %v1736
      %1757 = vst [vmem:[#allocation2 + $0x50] sm:$0xff] %v1737
      %1758 = vst [vmem:[#allocation2 + $0x58] sm:$0xff] %v1738
      %1759 = vst [vmem:[#allocation2 + $0x60] sm:$0xff] %v1739
      %1760 = vst [vmem:[#allocation2 + $0x68] sm:$0xff] %v1740
      %1761 = vst [vmem:[#allocation2 + $0x70] sm:$0xff] %v1741
      %1762 = vst [vmem:[#allocation2 + $0x78] sm:$0xff] %v1742
      %1763 = vst [vmem:[#allocation2 + $0x80] sm:$0xff] %v1743
      %1764 = vst [vmem:[#allocation2 + $0x88] sm:$0xff] %v1744
      %1765 = vst [vmem:[#allocation2 + $0x90] sm:$0xff] %v1745
      %1766 = vst [vmem:[#allocation2 + $0x98] sm:$0xff] %v1746
      %1767 = vrot.lane.b32.xlu0 %v1667, 126
      %v1768 = vpop.permute.xlu0 %1767
      %1769 = vrot.lane.b32.xlu0 %v1668, 126
      %v1770 = vpop.permute.xlu0 %1769
      %1771 = vrot.lane.b32.xlu0 %v1669, 126
      %v1772 = vpop.permute.xlu0 %1771
      %1773 = vrot.lane.b32.xlu0 %v1670, 126
      %v1774 = vpop.permute.xlu0 %1773
      %1775 = vrot.lane.b32.xlu0 %v1671, 126
      %v1776 = vpop.permute.xlu0 %1775
      %1777 = vrot.lane.b32.xlu0 %v1672, 126
      %v1778 = vpop.permute.xlu0 %1777
      %1779 = vrot.lane.b32.xlu0 %v1673, 126
      %v1780 = vpop.permute.xlu0 %1779
      %1781 = vrot.lane.b32.xlu0 %v1674, 126
      %v1782 = vpop.permute.xlu0 %1781
      %1783 = vrot.lane.b32.xlu0 %v1675, 126
      %v1784 = vpop.permute.xlu0 %1783
      %1785 = vrot.lane.b32.xlu0 %v1676, 126
      %v1786 = vpop.permute.xlu0 %1785
      %1787 = vrot.lane.b32.xlu0 %v1677, 126
      %v1788 = vpop.permute.xlu0 %1787
      %1789 = vrot.lane.b32.xlu0 %v1678, 126
      %v1790 = vpop.permute.xlu0 %1789
      %1791 = vrot.lane.b32.xlu0 %v1679, 126
      %v1792 = vpop.permute.xlu0 %1791
      %1793 = vrot.lane.b32.xlu0 %v1680, 126
      %v1794 = vpop.permute.xlu0 %1793
      %1795 = vrot.lane.b32.xlu0 %v1681, 126
      %v1796 = vpop.permute.xlu0 %1795
      %v1797 = vsel %vm460, %v1768, %v1770
      %v1798 = vsel %vm460, %v1770, %v1772
      %v1799 = vsel %vm460, %v1774, %v1776
      %v1800 = vsel %vm460, %v1776, %v1778
      %v1801 = vsel %vm460, %v1780, %v1782
      %v1802 = vsel %vm460, %v1782, %v1784
      %v1803 = vsel %vm460, %v1786, %v1788
      %v1804 = vsel %vm460, %v1788, %v1790
      %v1805 = vsel %vm460, %v1792, %v1794
      %v1806 = vsel %vm460, %v1794, %v1796
      %1817 = vst [vmem:[#allocation2 + $0xa0] sm:$0xff] %v1797
      %1818 = vst [vmem:[#allocation2 + $0xa8] sm:$0xff] %v1798
      %1819 = vst [vmem:[#allocation2 + $0xb0] sm:$0xff] %v1799
      %1820 = vst [vmem:[#allocation2 + $0xb8] sm:$0xff] %v1800
      %1821 = vst [vmem:[#allocation2 + $0xc0] sm:$0xff] %v1801
      %1822 = vst [vmem:[#allocation2 + $0xc8] sm:$0xff] %v1802
      %1823 = vst [vmem:[#allocation2 + $0xd0] sm:$0xff] %v1803
      %1824 = vst [vmem:[#allocation2 + $0xd8] sm:$0xff] %v1804
      %1825 = vst [vmem:[#allocation2 + $0xe0] sm:$0xff] %v1805
      %1826 = vst [vmem:[#allocation2 + $0xe8] sm:$0xff] %v1806
      %1827 = vrot.lane.b32.xlu0 %v1667, 110
      %v1828 = vpop.permute.xlu0 %1827
      %1829 = vrot.lane.b32.xlu0 %v1668, 110
      %v1830 = vpop.permute.xlu0 %1829
      %1831 = vrot.lane.b32.xlu0 %v1669, 110
      %v1832 = vpop.permute.xlu0 %1831
      %1833 = vrot.lane.b32.xlu0 %v1670, 110
      %v1834 = vpop.permute.xlu0 %1833
      %1835 = vrot.lane.b32.xlu0 %v1671, 110
      %v1836 = vpop.permute.xlu0 %1835
      %1837 = vrot.lane.b32.xlu0 %v1672, 110
      %v1838 = vpop.permute.xlu0 %1837
      %1839 = vrot.lane.b32.xlu0 %v1673, 110
      %v1840 = vpop.permute.xlu0 %1839
      %1841 = vrot.lane.b32.xlu0 %v1674, 110
      %v1842 = vpop.permute.xlu0 %1841
      %1843 = vrot.lane.b32.xlu0 %v1675, 110
      %v1844 = vpop.permute.xlu0 %1843
      %1845 = vrot.lane.b32.xlu0 %v1676, 110
      %v1846 = vpop.permute.xlu0 %1845
      %1847 = vrot.lane.b32.xlu0 %v1677, 110
      %v1848 = vpop.permute.xlu0 %1847
      %1849 = vrot.lane.b32.xlu0 %v1678, 110
      %v1850 = vpop.permute.xlu0 %1849
      %1851 = vrot.lane.b32.xlu0 %v1679, 110
      %v1852 = vpop.permute.xlu0 %1851
      %1853 = vrot.lane.b32.xlu0 %v1680, 110
      %v1854 = vpop.permute.xlu0 %1853
      %1855 = vrot.lane.b32.xlu0 %v1681, 110
      %v1856 = vpop.permute.xlu0 %1855
      %v1857 = vsel %vm521, %v1828, %v1830
      %v1858 = vsel %vm521, %v1830, %v1832
      %v1859 = vsel %vm521, %v1834, %v1836
      %v1860 = vsel %vm521, %v1836, %v1838
      %v1861 = vsel %vm521, %v1840, %v1842
      %v1862 = vsel %vm521, %v1842, %v1844
      %v1863 = vsel %vm521, %v1846, %v1848
      %v1864 = vsel %vm521, %v1848, %v1850
      %v1865 = vsel %vm521, %v1852, %v1854
      %v1866 = vsel %vm521, %v1854, %v1856
      %1877 = vst [vmem:[#allocation2 + $0xf0] sm:$0xff] %v1857
      %1878 = vst [vmem:[#allocation2 + $0xf8] sm:$0xff] %v1858
      %1879 = vst [vmem:[#allocation2 + $0x100] sm:$0xff] %v1859
      %1880 = vst [vmem:[#allocation2 + $0x108] sm:$0xff] %v1860
      %1881 = vst [vmem:[#allocation2 + $0x110] sm:$0xff] %v1861
      %1882 = vst [vmem:[#allocation2 + $0x118] sm:$0xff] %v1862
      %1883 = vst [vmem:[#allocation2 + $0x120] sm:$0xff] %v1863
      %1884 = vst [vmem:[#allocation2 + $0x128] sm:$0xff] %v1864
      %1885 = vst [vmem:[#allocation2 + $0x130] sm:$0xff] %v1865
      %1886 = vst [vmem:[#allocation2 + $0x138] sm:$0xff] %v1866
      %1887 = vrot.lane.b32.xlu0 %v1667, 109
      %v1888 = vpop.permute.xlu0 %1887
      %1889 = vrot.lane.b32.xlu0 %v1668, 109
      %v1890 = vpop.permute.xlu0 %1889
      %1891 = vrot.lane.b32.xlu0 %v1669, 109
      %v1892 = vpop.permute.xlu0 %1891
      %1893 = vrot.lane.b32.xlu0 %v1670, 109
      %v1894 = vpop.permute.xlu0 %1893
      %1895 = vrot.lane.b32.xlu0 %v1671, 109
      %v1896 = vpop.permute.xlu0 %1895
      %1897 = vrot.lane.b32.xlu0 %v1672, 109
      %v1898 = vpop.permute.xlu0 %1897
      %1899 = vrot.lane.b32.xlu0 %v1673, 109
      %v1900 = vpop.permute.xlu0 %1899
      %1901 = vrot.lane.b32.xlu0 %v1674, 109
      %v1902 = vpop.permute.xlu0 %1901
      %1903 = vrot.lane.b32.xlu0 %v1675, 109
      %v1904 = vpop.permute.xlu0 %1903
      %1905 = vrot.lane.b32.xlu0 %v1676, 109
      %v1906 = vpop.permute.xlu0 %1905
      %1907 = vrot.lane.b32.xlu0 %v1677, 109
      %v1908 = vpop.permute.xlu0 %1907
      %1909 = vrot.lane.b32.xlu0 %v1678, 109
      %v1910 = vpop.permute.xlu0 %1909
      %1911 = vrot.lane.b32.xlu0 %v1679, 109
      %v1912 = vpop.permute.xlu0 %1911
      %1913 = vrot.lane.b32.xlu0 %v1680, 109
      %v1914 = vpop.permute.xlu0 %1913
      %1915 = vrot.lane.b32.xlu0 %v1681, 109
      %v1916 = vpop.permute.xlu0 %1915
      %v1917 = vsel %vm582, %v1888, %v1890
      %v1918 = vsel %vm582, %v1890, %v1892
      %v1919 = vsel %vm582, %v1894, %v1896
      %v1920 = vsel %vm582, %v1896, %v1898
      %v1921 = vsel %vm582, %v1900, %v1902
      %v1922 = vsel %vm582, %v1902, %v1904
      %v1923 = vsel %vm582, %v1906, %v1908
      %v1924 = vsel %vm582, %v1908, %v1910
      %v1925 = vsel %vm582, %v1912, %v1914
      %v1926 = vsel %vm582, %v1914, %v1916
      %1937 = vst [vmem:[#allocation2 + $0x140] sm:$0xff] %v1917
      %1938 = vst [vmem:[#allocation2 + $0x148] sm:$0xff] %v1918
      %1939 = vst [vmem:[#allocation2 + $0x150] sm:$0xff] %v1919
      %1940 = vst [vmem:[#allocation2 + $0x158] sm:$0xff] %v1920
      %1941 = vst [vmem:[#allocation2 + $0x160] sm:$0xff] %v1921
      %1942 = vst [vmem:[#allocation2 + $0x168] sm:$0xff] %v1922
      %1943 = vst [vmem:[#allocation2 + $0x170] sm:$0xff] %v1923
      %1944 = vst [vmem:[#allocation2 + $0x178] sm:$0xff] %v1924
      %1945 = vst [vmem:[#allocation2 + $0x180] sm:$0xff] %v1925
      %1946 = vst [vmem:[#allocation2 + $0x188] sm:$0xff] %v1926
      %1947 = vrot.lane.b32.xlu0 %v1667, 108
      %v1948 = vpop.permute.xlu0 %1947
      %1949 = vrot.lane.b32.xlu0 %v1668, 108
      %v1950 = vpop.permute.xlu0 %1949
      %1951 = vrot.lane.b32.xlu0 %v1669, 108
      %v1952 = vpop.permute.xlu0 %1951
      %1953 = vrot.lane.b32.xlu0 %v1670, 108
      %v1954 = vpop.permute.xlu0 %1953
      %1955 = vrot.lane.b32.xlu0 %v1671, 108
      %v1956 = vpop.permute.xlu0 %1955
      %1957 = vrot.lane.b32.xlu0 %v1672, 108
      %v1958 = vpop.permute.xlu0 %1957
      %1959 = vrot.lane.b32.xlu0 %v1673, 108
      %v1960 = vpop.permute.xlu0 %1959
      %1961 = vrot.lane.b32.xlu0 %v1674, 108
      %v1962 = vpop.permute.xlu0 %1961
      %1963 = vrot.lane.b32.xlu0 %v1675, 108
      %v1964 = vpop.permute.xlu0 %1963
      %1965 = vrot.lane.b32.xlu0 %v1676, 108
      %v1966 = vpop.permute.xlu0 %1965
      %1967 = vrot.lane.b32.xlu0 %v1677, 108
      %v1968 = vpop.permute.xlu0 %1967
      %1969 = vrot.lane.b32.xlu0 %v1678, 108
      %v1970 = vpop.permute.xlu0 %1969
      %1971 = vrot.lane.b32.xlu0 %v1679, 108
      %v1972 = vpop.permute.xlu0 %1971
      %1973 = vrot.lane.b32.xlu0 %v1680, 108
      %v1974 = vpop.permute.xlu0 %1973
      %1975 = vrot.lane.b32.xlu0 %v1681, 108
      %v1976 = vpop.permute.xlu0 %1975
      %v1977 = vsel %vm643, %v1948, %v1950
      %v1978 = vsel %vm643, %v1950, %v1952
      %v1979 = vsel %vm643, %v1954, %v1956
      %v1980 = vsel %vm643, %v1956, %v1958
      %v1981 = vsel %vm643, %v1960, %v1962
      %v1982 = vsel %vm643, %v1962, %v1964
      %v1983 = vsel %vm643, %v1966, %v1968
      %v1984 = vsel %vm643, %v1968, %v1970
      %v1985 = vsel %vm643, %v1972, %v1974
      %v1986 = vsel %vm643, %v1974, %v1976
      %1997 = vst [vmem:[#allocation2 + $0x190] sm:$0xff] %v1977
      %1998 = vst [vmem:[#allocation2 + $0x198] sm:$0xff] %v1978
      %1999 = vst [vmem:[#allocation2 + $0x1a0] sm:$0xff] %v1979
      %2000 = vst [vmem:[#allocation2 + $0x1a8] sm:$0xff] %v1980
      %2001 = vst [vmem:[#allocation2 + $0x1b0] sm:$0xff] %v1981
      %2002 = vst [vmem:[#allocation2 + $0x1b8] sm:$0xff] %v1982
      %2003 = vst [vmem:[#allocation2 + $0x1c0] sm:$0xff] %v1983
      %2004 = vst [vmem:[#allocation2 + $0x1c8] sm:$0xff] %v1984
      %2005 = vst [vmem:[#allocation2 + $0x1d0] sm:$0xff] %v1985
      %2006 = vst [vmem:[#allocation2 + $0x1d8] sm:$0xff] %v1986
      %2007 = vrot.lane.b32.xlu0 %v1667, 92
      %v2008 = vpop.permute.xlu0 %2007
      %2009 = vrot.lane.b32.xlu0 %v1668, 92
      %v2010 = vpop.permute.xlu0 %2009
      %2011 = vrot.lane.b32.xlu0 %v1669, 92
      %v2012 = vpop.permute.xlu0 %2011
      %2013 = vrot.lane.b32.xlu0 %v1670, 92
      %v2014 = vpop.permute.xlu0 %2013
      %2015 = vrot.lane.b32.xlu0 %v1671, 92
      %v2016 = vpop.permute.xlu0 %2015
      %2017 = vrot.lane.b32.xlu0 %v1672, 92
      %v2018 = vpop.permute.xlu0 %2017
      %2019 = vrot.lane.b32.xlu0 %v1673, 92
      %v2020 = vpop.permute.xlu0 %2019
      %2021 = vrot.lane.b32.xlu0 %v1674, 92
      %v2022 = vpop.permute.xlu0 %2021
      %2023 = vrot.lane.b32.xlu0 %v1675, 92
      %v2024 = vpop.permute.xlu0 %2023
      %2025 = vrot.lane.b32.xlu0 %v1676, 92
      %v2026 = vpop.permute.xlu0 %2025
      %2027 = vrot.lane.b32.xlu0 %v1677, 92
      %v2028 = vpop.permute.xlu0 %2027
      %2029 = vrot.lane.b32.xlu0 %v1678, 92
      %v2030 = vpop.permute.xlu0 %2029
      %2031 = vrot.lane.b32.xlu0 %v1679, 92
      %v2032 = vpop.permute.xlu0 %2031
      %2033 = vrot.lane.b32.xlu0 %v1680, 92
      %v2034 = vpop.permute.xlu0 %2033
      %2035 = vrot.lane.b32.xlu0 %v1681, 92
      %v2036 = vpop.permute.xlu0 %2035
      %v2037 = vsel %vm704, %v2008, %v2010
      %v2038 = vsel %vm704, %v2010, %v2012
      %v2039 = vsel %vm704, %v2014, %v2016
      %v2040 = vsel %vm704, %v2016, %v2018
      %v2041 = vsel %vm704, %v2020, %v2022
      %v2042 = vsel %vm704, %v2022, %v2024
      %v2043 = vsel %vm704, %v2026, %v2028
      %v2044 = vsel %vm704, %v2028, %v2030
      %v2045 = vsel %vm704, %v2032, %v2034
      %v2046 = vsel %vm704, %v2034, %v2036
      %2057 = vst [vmem:[#allocation2 + $0x1e0] sm:$0xff] %v2037
      %2058 = vst [vmem:[#allocation2 + $0x1e8] sm:$0xff] %v2038
      %2059 = vst [vmem:[#allocation2 + $0x1f0] sm:$0xff] %v2039
      %2060 = vst [vmem:[#allocation2 + $0x1f8] sm:$0xff] %v2040
      %2061 = vst [vmem:[#allocation2 + $0x200] sm:$0xff] %v2041
      %2062 = vst [vmem:[#allocation2 + $0x208] sm:$0xff] %v2042
      %2063 = vst [vmem:[#allocation2 + $0x210] sm:$0xff] %v2043
      %2064 = vst [vmem:[#allocation2 + $0x218] sm:$0xff] %v2044
      %2065 = vst [vmem:[#allocation2 + $0x220] sm:$0xff] %v2045
      %2066 = vst [vmem:[#allocation2 + $0x228] sm:$0xff] %v2046
      %2067 = vrot.lane.b32.xlu0 %v1667, 91
      %v2068 = vpop.permute.xlu0 %2067
      %2069 = vrot.lane.b32.xlu0 %v1668, 91
      %v2070 = vpop.permute.xlu0 %2069
      %2071 = vrot.lane.b32.xlu0 %v1669, 91
      %v2072 = vpop.permute.xlu0 %2071
      %2073 = vrot.lane.b32.xlu0 %v1670, 91
      %v2074 = vpop.permute.xlu0 %2073
      %2075 = vrot.lane.b32.xlu0 %v1671, 91
      %v2076 = vpop.permute.xlu0 %2075
      %2077 = vrot.lane.b32.xlu0 %v1672, 91
      %v2078 = vpop.permute.xlu0 %2077
      %2079 = vrot.lane.b32.xlu0 %v1673, 91
      %v2080 = vpop.permute.xlu0 %2079
      %2081 = vrot.lane.b32.xlu0 %v1674, 91
      %v2082 = vpop.permute.xlu0 %2081
      %2083 = vrot.lane.b32.xlu0 %v1675, 91
      %v2084 = vpop.permute.xlu0 %2083
      %2085 = vrot.lane.b32.xlu0 %v1676, 91
      %v2086 = vpop.permute.xlu0 %2085
      %2087 = vrot.lane.b32.xlu0 %v1677, 91
      %v2088 = vpop.permute.xlu0 %2087
      %2089 = vrot.lane.b32.xlu0 %v1678, 91
      %v2090 = vpop.permute.xlu0 %2089
      %2091 = vrot.lane.b32.xlu0 %v1679, 91
      %v2092 = vpop.permute.xlu0 %2091
      %2093 = vrot.lane.b32.xlu0 %v1680, 91
      %v2094 = vpop.permute.xlu0 %2093
      %2095 = vrot.lane.b32.xlu0 %v1681, 91
      %v2096 = vpop.permute.xlu0 %2095
      %v2097 = vsel %vm765, %v2068, %v2070
      %v2098 = vsel %vm765, %v2070, %v2072
      %v2099 = vsel %vm765, %v2074, %v2076
      %v2100 = vsel %vm765, %v2076, %v2078
      %v2101 = vsel %vm765, %v2080, %v2082
      %v2102 = vsel %vm765, %v2082, %v2084
      %v2103 = vsel %vm765, %v2086, %v2088
      %v2104 = vsel %vm765, %v2088, %v2090
      %v2105 = vsel %vm765, %v2092, %v2094
      %v2106 = vsel %vm765, %v2094, %v2096
      %2117 = vst [vmem:[#allocation2 + $0x230] sm:$0xff] %v2097
      %2118 = vst [vmem:[#allocation2 + $0x238] sm:$0xff] %v2098
      %2119 = vst [vmem:[#allocation2 + $0x240] sm:$0xff] %v2099
      %2120 = vst [vmem:[#allocation2 + $0x248] sm:$0xff] %v2100
      %2121 = vst [vmem:[#allocation2 + $0x250] sm:$0xff] %v2101
      %2122 = vst [vmem:[#allocation2 + $0x258] sm:$0xff] %v2102
      %2123 = vst [vmem:[#allocation2 + $0x260] sm:$0xff] %v2103
      %2124 = vst [vmem:[#allocation2 + $0x268] sm:$0xff] %v2104
      %2125 = vst [vmem:[#allocation2 + $0x270] sm:$0xff] %v2105
      %2126 = vst [vmem:[#allocation2 + $0x278] sm:$0xff] %v2106
      %2127 = vrot.lane.b32.xlu0 %v1667, 90
      %v2128 = vpop.permute.xlu0 %2127
      %2129 = vrot.lane.b32.xlu0 %v1668, 90
      %v2130 = vpop.permute.xlu0 %2129
      %2131 = vrot.lane.b32.xlu0 %v1669, 90
      %v2132 = vpop.permute.xlu0 %2131
      %2133 = vrot.lane.b32.xlu0 %v1670, 90
      %v2134 = vpop.permute.xlu0 %2133
      %2135 = vrot.lane.b32.xlu0 %v1671, 90
      %v2136 = vpop.permute.xlu0 %2135
      %2137 = vrot.lane.b32.xlu0 %v1672, 90
      %v2138 = vpop.permute.xlu0 %2137
      %2139 = vrot.lane.b32.xlu0 %v1673, 90
      %v2140 = vpop.permute.xlu0 %2139
      %2141 = vrot.lane.b32.xlu0 %v1674, 90
      %v2142 = vpop.permute.xlu0 %2141
      %2143 = vrot.lane.b32.xlu0 %v1675, 90
      %v2144 = vpop.permute.xlu0 %2143
      %2145 = vrot.lane.b32.xlu0 %v1676, 90
      %v2146 = vpop.permute.xlu0 %2145
      %2147 = vrot.lane.b32.xlu0 %v1677, 90
      %v2148 = vpop.permute.xlu0 %2147
      %2149 = vrot.lane.b32.xlu0 %v1678, 90
      %v2150 = vpop.permute.xlu0 %2149
      %2151 = vrot.lane.b32.xlu0 %v1679, 90
      %v2152 = vpop.permute.xlu0 %2151
      %2153 = vrot.lane.b32.xlu0 %v1680, 90
      %v2154 = vpop.permute.xlu0 %2153
      %2155 = vrot.lane.b32.xlu0 %v1681, 90
      %v2156 = vpop.permute.xlu0 %2155
      %v2157 = vsel %vm826, %v2128, %v2130
      %v2158 = vsel %vm826, %v2130, %v2132
      %v2159 = vsel %vm826, %v2134, %v2136
      %v2160 = vsel %vm826, %v2136, %v2138
      %v2161 = vsel %vm826, %v2140, %v2142
      %v2162 = vsel %vm826, %v2142, %v2144
      %v2163 = vsel %vm826, %v2146, %v2148
      %v2164 = vsel %vm826, %v2148, %v2150
      %v2165 = vsel %vm826, %v2152, %v2154
      %v2166 = vsel %vm826, %v2154, %v2156
      %2177 = vst [vmem:[#allocation2 + $0x280] sm:$0xff] %v2157
      %2178 = vst [vmem:[#allocation2 + $0x288] sm:$0xff] %v2158
      %2179 = vst [vmem:[#allocation2 + $0x290] sm:$0xff] %v2159
      %2180 = vst [vmem:[#allocation2 + $0x298] sm:$0xff] %v2160
      %2181 = vst [vmem:[#allocation2 + $0x2a0] sm:$0xff] %v2161
      %2182 = vst [vmem:[#allocation2 + $0x2a8] sm:$0xff] %v2162
      %2183 = vst [vmem:[#allocation2 + $0x2b0] sm:$0xff] %v2163
      %2184 = vst [vmem:[#allocation2 + $0x2b8] sm:$0xff] %v2164
      %2185 = vst [vmem:[#allocation2 + $0x2c0] sm:$0xff] %v2165
      %2186 = vst [vmem:[#allocation2 + $0x2c8] sm:$0xff] %v2166
      %v2187 = vld [vmem:[%s1] sm:$0xff]
      %v2188 = vld [vmem:[%s1 + $0x8] sm:$0xff]
      %v2189 = vld [vmem:[%s1 + $0x10] sm:$0xff]
      %v2190 = vld [vmem:[%s1 + $0x18] sm:$0xff]
      %v2191 = vld [vmem:[%s1 + $0x20] sm:$0xff]
      %v2192 = vld [vmem:[%s1 + $0x28] sm:$0xff]
      %v2193 = vld [vmem:[%s1 + $0x30] sm:$0xff]
      %v2194 = vld [vmem:[%s1 + $0x38] sm:$0xff]
      %v2195 = vld [vmem:[%s1 + $0x40] sm:$0xff]
      %v2196 = vld [vmem:[%s1 + $0x48] sm:$0xff]
      %v2197 = vld [vmem:[%s1 + $0x50] sm:$0xff]
      %v2198 = vld [vmem:[%s1 + $0x58] sm:$0xff]
      %v2199 = vld [vmem:[%s1 + $0x60] sm:$0xff]
      %v2200 = vld [vmem:[%s1 + $0x68] sm:$0xff]
      %v2201 = vld [vmem:[%s1 + $0x70] sm:$0xff]
      %v2202 = vld [vmem:[%s1 + $0x78] sm:$0xff]
      %v2203 = vld [vmem:[%s1 + $0x80] sm:$0xff]
      %v2204 = vld [vmem:[%s1 + $0x88] sm:$0xff]
      %v2205 = vld [vmem:[%s1 + $0x90] sm:$0xff]
      %v2206 = vld [vmem:[%s1 + $0x98] sm:$0xff]
      %v2207 = vld [vmem:[%s1 + $0xa0] sm:$0xff]
      %v2208 = vld [vmem:[%s1 + $0xa8] sm:$0xff]
      %v2209 = vld [vmem:[%s1 + $0xb0] sm:$0xff]
      %v2210 = vld [vmem:[%s1 + $0xb8] sm:$0xff]
      %v2211 = vld [vmem:[%s1 + $0xc0] sm:$0xff]
      %v2212 = vld [vmem:[%s1 + $0xc8] sm:$0xff]
      %v2213 = vld [vmem:[%s1 + $0xd0] sm:$0xff]
      %v2214 = vld [vmem:[%s1 + $0xd8] sm:$0xff]
      %v2215 = vld [vmem:[%s1 + $0xe0] sm:$0xff]
      %v2216 = vld [vmem:[%s1 + $0xe8] sm:$0xff]
      %v2217 = vld [vmem:[%s1 + $0xf0] sm:$0xff]
      %v2218 = vld [vmem:[%s1 + $0xf8] sm:$0xff]
      %v2219 = vld [vmem:[%s1 + $0x100] sm:$0xff]
      %v2220 = vld [vmem:[%s1 + $0x108] sm:$0xff]
      %v2221 = vld [vmem:[%s1 + $0x110] sm:$0xff]
      %v2222 = vld [vmem:[%s1 + $0x118] sm:$0xff]
      %v2223 = vld [vmem:[%s1 + $0x120] sm:$0xff]
      %v2224 = vld [vmem:[%s1 + $0x128] sm:$0xff]
      %v2225 = vld [vmem:[%s1 + $0x130] sm:$0xff]
      %v2226 = vld [vmem:[%s1 + $0x138] sm:$0xff]
      %v2227 = vld [vmem:[%s1 + $0x140] sm:$0xff]
      %v2228 = vld [vmem:[%s1 + $0x148] sm:$0xff]
      %v2229 = vld [vmem:[%s1 + $0x150] sm:$0xff]
      %v2230 = vld [vmem:[%s1 + $0x158] sm:$0xff]
      %v2231 = vld [vmem:[%s1 + $0x160] sm:$0xff]
      %v2232 = vld [vmem:[%s1 + $0x168] sm:$0xff]
      %v2233 = vld [vmem:[%s1 + $0x170] sm:$0xff]
      %v2234 = vld [vmem:[%s1 + $0x178] sm:$0xff]
      %v2235 = vld [vmem:[#allocation2] sm:$0xff]
      %v2236 = vld [vmem:[#allocation2 + $0x8] sm:$0xff]
      %v2237 = vld [vmem:[#allocation2 + $0x10] sm:$0xff]
      %v2238 = vld [vmem:[#allocation2 + $0x18] sm:$0xff]
      %v2239 = vld [vmem:[#allocation2 + $0x20] sm:$0xff]
      %v2240 = vld [vmem:[#allocation2 + $0x28] sm:$0xff]
      %v2241 = vld [vmem:[#allocation2 + $0x30] sm:$0xff]
      %v2242 = vld [vmem:[#allocation2 + $0x38] sm:$0xff]
      %v2243 = vld [vmem:[#allocation2 + $0x40] sm:$0xff]
      %v2244 = vld [vmem:[#allocation2 + $0x48] sm:$0xff]
      %v2245 = vld [vmem:[#allocation2 + $0x50] sm:$0xff]
      %v2246 = vld [vmem:[#allocation2 + $0x58] sm:$0xff]
      %v2247 = vld [vmem:[#allocation2 + $0x60] sm:$0xff]
      %v2248 = vld [vmem:[#allocation2 + $0x68] sm:$0xff]
      %v2249 = vld [vmem:[#allocation2 + $0x70] sm:$0xff]
      %v2250 = vld [vmem:[#allocation2 + $0x78] sm:$0xff]
      %v2251 = vld [vmem:[#allocation2 + $0x80] sm:$0xff]
      %v2252 = vld [vmem:[#allocation2 + $0x88] sm:$0xff]
      %v2253 = vld [vmem:[#allocation2 + $0x90] sm:$0xff]
      %v2254 = vld [vmem:[#allocation2 + $0x98] sm:$0xff]
      %v2255 = vld [vmem:[#allocation2 + $0xa0] sm:$0xff]
      %v2256 = vld [vmem:[#allocation2 + $0xa8] sm:$0xff]
      %v2257 = vld [vmem:[#allocation2 + $0xb0] sm:$0xff]
      %v2258 = vld [vmem:[#allocation2 + $0xb8] sm:$0xff]
      %v2259 = vld [vmem:[#allocation2 + $0xc0] sm:$0xff]
      %v2260 = vld [vmem:[#allocation2 + $0xc8] sm:$0xff]
      %v2261 = vld [vmem:[#allocation2 + $0xd0] sm:$0xff]
      %v2262 = vld [vmem:[#allocation2 + $0xd8] sm:$0xff]
      %v2263 = vld [vmem:[#allocation2 + $0xe0] sm:$0xff]
      %v2264 = vld [vmem:[#allocation2 + $0xe8] sm:$0xff]
      %v2265 = vld [vmem:[#allocation2 + $0xf0] sm:$0xff]
      %v2266 = vld [vmem:[#allocation2 + $0xf8] sm:$0xff]
      %v2267 = vld [vmem:[#allocation2 + $0x100] sm:$0xff]
      %v2268 = vld [vmem:[#allocation2 + $0x108] sm:$0xff]
      %v2269 = vld [vmem:[#allocation2 + $0x110] sm:$0xff]
      %v2270 = vld [vmem:[#allocation2 + $0x118] sm:$0xff]
      %v2271 = vld [vmem:[#allocation2 + $0x120] sm:$0xff]
      %v2272 = vld [vmem:[#allocation2 + $0x128] sm:$0xff]
      %v2273 = vld [vmem:[#allocation2 + $0x130] sm:$0xff]
      %v2274 = vld [vmem:[#allocation2 + $0x138] sm:$0xff]
      %v2275 = vld [vmem:[#allocation2 + $0x140] sm:$0xff]
      %v2276 = vld [vmem:[#allocation2 + $0x148] sm:$0xff]
      %v2277 = vld [vmem:[#allocation2 + $0x150] sm:$0xff]
      %v2278 = vld [vmem:[#allocation2 + $0x158] sm:$0xff]
      %v2279 = vld [vmem:[#allocation2 + $0x160] sm:$0xff]
      %v2280 = vld [vmem:[#allocation2 + $0x168] sm:$0xff]
      %v2281 = vld [vmem:[#allocation2 + $0x170] sm:$0xff]
      %v2282 = vld [vmem:[#allocation2 + $0x178] sm:$0xff]
      %v2283 = vld [vmem:[#allocation2 + $0x180] sm:$0xff]
      %v2284 = vld [vmem:[#allocation2 + $0x188] sm:$0xff]
      %v2285 = vld [vmem:[#allocation2 + $0x190] sm:$0xff]
      %v2286 = vld [vmem:[#allocation2 + $0x198] sm:$0xff]
      %v2287 = vld [vmem:[#allocation2 + $0x1a0] sm:$0xff]
      %v2288 = vld [vmem:[#allocation2 + $0x1a8] sm:$0xff]
      %v2289 = vld [vmem:[#allocation2 + $0x1b0] sm:$0xff]
      %v2290 = vld [vmem:[#allocation2 + $0x1b8] sm:$0xff]
      %v2291 = vld [vmem:[#allocation2 + $0x1c0] sm:$0xff]
      %v2292 = vld [vmem:[#allocation2 + $0x1c8] sm:$0xff]
      %v2293 = vld [vmem:[#allocation2 + $0x1d0] sm:$0xff]
      %v2294 = vld [vmem:[#allocation2 + $0x1d8] sm:$0xff]
      %v2295 = vld [vmem:[#allocation2 + $0x1e0] sm:$0xff]
      %v2296 = vld [vmem:[#allocation2 + $0x1e8] sm:$0xff]
      %v2297 = vld [vmem:[#allocation2 + $0x1f0] sm:$0xff]
      %v2298 = vld [vmem:[#allocation2 + $0x1f8] sm:$0xff]
      %v2299 = vld [vmem:[#allocation2 + $0x200] sm:$0xff]
      %v2300 = vld [vmem:[#allocation2 + $0x208] sm:$0xff]
      %v2301 = vld [vmem:[#allocation2 + $0x210] sm:$0xff]
      %v2302 = vld [vmem:[#allocation2 + $0x218] sm:$0xff]
      %v2303 = vld [vmem:[#allocation2 + $0x220] sm:$0xff]
      %v2304 = vld [vmem:[#allocation2 + $0x228] sm:$0xff]
      %v2305 = vld [vmem:[#allocation2 + $0x230] sm:$0xff]
      %v2306 = vld [vmem:[#allocation2 + $0x238] sm:$0xff]
      %v2307 = vld [vmem:[#allocation2 + $0x240] sm:$0xff]
      %v2308 = vld [vmem:[#allocation2 + $0x248] sm:$0xff]
      %v2309 = vld [vmem:[#allocation2 + $0x250] sm:$0xff]
      %v2310 = vld [vmem:[#allocation2 + $0x258] sm:$0xff]
      %v2311 = vld [vmem:[#allocation2 + $0x260] sm:$0xff]
      %v2312 = vld [vmem:[#allocation2 + $0x268] sm:$0xff]
      %v2313 = vld [vmem:[#allocation2 + $0x270] sm:$0xff]
      %v2314 = vld [vmem:[#allocation2 + $0x278] sm:$0xff]
      %v2315 = vld [vmem:[#allocation2 + $0x280] sm:$0xff]
      %v2316 = vld [vmem:[#allocation2 + $0x288] sm:$0xff]
      %v2317 = vld [vmem:[#allocation2 + $0x290] sm:$0xff]
      %v2318 = vld [vmem:[#allocation2 + $0x298] sm:$0xff]
      %v2319 = vld [vmem:[#allocation2 + $0x2a0] sm:$0xff]
      %v2320 = vld [vmem:[#allocation2 + $0x2a8] sm:$0xff]
      %v2321 = vld [vmem:[#allocation2 + $0x2b0] sm:$0xff]
      %v2322 = vld [vmem:[#allocation2 + $0x2b8] sm:$0xff]
      %v2323 = vld [vmem:[#allocation2 + $0x2c0] sm:$0xff]
      %v2324 = vld [vmem:[#allocation2 + $0x2c8] sm:$0xff]
      %v2326 = vsel %vm1075, %v2189, 0
      %v2329 = vsel %vm1075, %v2192, 0
      %v2332 = vsel %vm1075, %v2195, 0
      %v2335 = vsel %vm1075, %v2198, 0
      %v2338 = vsel %vm1075, %v2201, 0
      %v2341 = vsel %vm1075, %v2204, 0
      %v2344 = vsel %vm1075, %v2207, 0
      %v2347 = vsel %vm1075, %v2210, 0
      %v2350 = vsel %vm1075, %v2213, 0
      %v2353 = vsel %vm1075, %v2216, 0
      %v2356 = vsel %vm1075, %v2219, 0
      %v2359 = vsel %vm1075, %v2222, 0
      %v2362 = vsel %vm1075, %v2225, 0
      %v2365 = vsel %vm1075, %v2228, 0
      %v2368 = vsel %vm1075, %v2231, 0
      %v2371 = vsel %vm1075, %v2234, 0
      %2373 = vmatprep.subr.mxu0 %v2236
      %2374 = vmatpush1.msra.mxu0 %v2235
      %2375 = vmatprep.subr.mxu0 %v2238
      %2376 = vmatpush1.msra.mxu0 %v2237
      %2377 = vmatprep.subr.mxu0 %v2240
      %2378 = vmatpush1.msra.mxu0 %v2239
      %2379 = vmatprep.subr.mxu0 %v2242
      %2380 = vmatpush1.msra.mxu0 %v2241
      %2381 = vmatprep.subr.mxu0 %v2244
      %2382 = vmatpush1.msra.mxu0 %v2243
      %2383 = vmatprep.subr.mxu0 %v2246
      %2384 = vmatpush1.msra.mxu0 %v2245
      %2385 = vmatprep.subr.mxu0 %v2248
      %2386 = vmatpush1.msra.mxu0 %v2247
      %2387 = vmatprep.subr.mxu0 %v2250
      %2388 = vmatpush1.msra.mxu0 %v2249
      %2389 = vmatprep.subr.mxu0 %v2252
      %2390 = vmatpush1.msra.mxu0 %v2251
      %2391 = vmatprep.subr.mxu0 %v2254
      %2392 = vmatpush1.msra.mxu0 %v2253
      %2393 = vmatprep.subr.mxu0 %v2256
      %2394 = vmatpush1.msra.mxu0 %v2255
      %2395 = vmatprep.subr.mxu0 %v2258
      %2396 = vmatpush1.msra.mxu0 %v2257
      %2397 = vmatprep.subr.mxu0 %v2260
      %2398 = vmatpush1.msra.mxu0 %v2259
      %2399 = vmatprep.subr.mxu0 %v2262
      %2400 = vmatpush1.msra.mxu0 %v2261
      %2401 = vmatprep.subr.mxu0 %v2264
      %2402 = vmatpush1.msra.mxu0 %v2263
      %2403 = vmatprep.subr.mxu0 %v2266
      %2404 = vmatpush1.msra.mxu0 %v2265
      %2405 = vmatprep.subr.mxu0 %v2268
      %2406 = vmatpush1.msra.mxu0 %v2267
      %2407 = vmatprep.subr.mxu0 %v2270
      %2408 = vmatpush1.msra.mxu0 %v2269
      %2409 = vmatprep.subr.mxu0 %v2272
      %2410 = vmatpush1.msra.mxu0 %v2271
      %2411 = vmatprep.subr.mxu0 %v2274
      %2412 = vmatpush1.msra.mxu0 %v2273
      %2413 = vmatprep.subr.mxu0 %v2276
      %2414 = vmatpush1.msra.mxu0 %v2275
      %2415 = vmatprep.subr.mxu0 %v2278
      %2416 = vmatpush1.msra.mxu0 %v2277
      %2417 = vmatprep.subr.mxu0 %v2280
      %2418 = vmatpush1.msra.mxu0 %v2279
      %2419 = vmatprep.subr.mxu0 %v2282
      %2420 = vmatpush1.msra.mxu0 %v2281
      %2421 = vmatprep.subr.mxu0 %v2284
      %2422 = vmatpush1.msra.mxu0 %v2283
      %2423 = vmatprep.subr.mxu0 %v2286
      %2424 = vmatpush1.msra.mxu0 %v2285
      %2425 = vmatprep.subr.mxu0 %v2288
      %2426 = vmatpush1.msra.mxu0 %v2287
      %2427 = vmatprep.subr.mxu0 %v2290
      %2428 = vmatpush1.msra.mxu0 %v2289
      %2429 = vmatprep.subr.mxu0 %v2292
      %2430 = vmatpush1.msra.mxu0 %v2291
      %2431 = vmatprep.subr.mxu0 %v2294
      %2432 = vmatpush1.msra.mxu0 %v2293
      %2433 = vmatprep.subr.mxu0 %v2296
      %2434 = vmatpush1.msra.mxu0 %v2295
      %2435 = vmatprep.subr.mxu0 %v2298
      %2436 = vmatpush1.msra.mxu0 %v2297
      %2437 = vmatprep.mubr.f32.mxu0 %v2188
      %2438 = vmatmul.mubr.f32.gmra.mrb[0].mxu0 %v2187
      %v2439 = vpop.f32.mrb[0].mxu0
      %v2440 = vadd.f32 %v998, %v2439
      %v2441 = vpop.f32.mrb[0].mxu0
      %v2442 = vadd.f32 %v998, %v2441
      %2443 = vmatprep.mubr.f32.mxu0 %v2191
      %2444 = vmatmul.mubr.f32.gmra.mrb[0].mxu0 %v2190
      %v2445 = vpop.f32.mrb[0].mxu0
      %v2446 = vadd.f32 %v1003, %v2445
      %v2447 = vpop.f32.mrb[0].mxu0
      %v2448 = vadd.f32 %v1003, %v2447
      %2449 = vmatprep.mubr.f32.mxu0 %v2194
      %2450 = vmatmul.mubr.f32.gmra.mrb[0].mxu0 %v2193
      %v2451 = vpop.f32.mrb[0].mxu0
      %v2452 = vadd.f32 %v1008, %v2451
      %v2453 = vpop.f32.mrb[0].mxu0
      %v2454 = vadd.f32 %v1008, %v2453
      %2455 = vmatprep.mubr.f32.mxu0 %v2197
      %2456 = vmatmul.mubr.f32.gmra.mrb[0].mxu0 %v2196
      %v2457 = vpop.f32.mrb[0].mxu0
      %v2458 = vadd.f32 %v1013, %v2457
      %v2459 = vpop.f32.mrb[0].mxu0
      %v2460 = vadd.f32 %v1013, %v2459
      %2461 = vmatprep.mubr.f32.mxu0 %v2200
      %2462 = vmatmul.mubr.f32.gmra.mrb[0].mxu0 %v2199
      %v2463 = vpop.f32.mrb[0].mxu0
      %v2464 = vadd.f32 %v1018, %v2463
      %v2465 = vpop.f32.mrb[0].mxu0
      %v2466 = vadd.f32 %v1018, %v2465
      %2467 = vmatprep.mubr.f32.mxu0 %v2203
      %2468 = vmatmul.mubr.f32.gmra.mrb[0].mxu0 %v2202
      %v2469 = vpop.f32.mrb[0].mxu0
      %v2470 = vadd.f32 %v1023, %v2469
      %v2471 = vpop.f32.mrb[0].mxu0
      %v2472 = vadd.f32 %v1023, %v2471
      %2473 = vmatprep.mubr.f32.mxu0 %v2206
      %2474 = vmatmul.mubr.f32.gmra.mrb[0].mxu0 %v2205
      %v2475 = vpop.f32.mrb[0].mxu0
      %v2476 = vadd.f32 %v1028, %v2475
      %v2477 = vpop.f32.mrb[0].mxu0
      %v2478 = vadd.f32 %v1028, %v2477
      %2479 = vmatprep.mubr.f32.mxu0 %v2209
      %2480 = vmatmul.mubr.f32.gmra.mrb[0].mxu0 %v2208
      %v2481 = vpop.f32.mrb[0].mxu0
      %v2482 = vadd.f32 %v1033, %v2481
      %v2483 = vpop.f32.mrb[0].mxu0
      %v2484 = vadd.f32 %v1033, %v2483
      %2485 = vmatprep.mubr.f32.mxu0 %v2212
      %2486 = vmatmul.mubr.f32.gmra.mrb[0].mxu0 %v2211
      %v2487 = vpop.f32.mrb[0].mxu0
      %v2488 = vadd.f32 %v1038, %v2487
      %v2489 = vpop.f32.mrb[0].mxu0
      %v2490 = vadd.f32 %v1038, %v2489
      %2491 = vmatprep.mubr.f32.mxu0 %v2215
      %2492 = vmatmul.mubr.f32.gmra.mrb[0].mxu0 %v2214
      %v2493 = vpop.f32.mrb[0].mxu0
      %v2494 = vadd.f32 %v1043, %v2493
      %v2495 = vpop.f32.mrb[0].mxu0
      %v2496 = vadd.f32 %v1043, %v2495
      %2497 = vmatprep.mubr.f32.mxu0 %v2218
      %2498 = vmatmul.mubr.f32.gmra.mrb[0].mxu0 %v2217
      %v2499 = vpop.f32.mrb[0].mxu0
      %v2500 = vadd.f32 %v1048, %v2499
      %v2501 = vpop.f32.mrb[0].mxu0
      %v2502 = vadd.f32 %v1048, %v2501
      %2503 = vmatprep.mubr.f32.mxu0 %v2221
      %2504 = vmatmul.mubr.f32.gmra.mrb[0].mxu0 %v2220
      %v2505 = vpop.f32.mrb[0].mxu0
      %v2506 = vadd.f32 %v1053, %v2505
      %v2507 = vpop.f32.mrb[0].mxu0
      %v2508 = vadd.f32 %v1053, %v2507
      %2509 = vmatprep.mubr.f32.mxu0 %v2224
      %2510 = vmatmul.mubr.f32.gmra.mrb[0].mxu0 %v2223
      %v2511 = vpop.f32.mrb[0].mxu0
      %v2512 = vadd.f32 %v1058, %v2511
      %v2513 = vpop.f32.mrb[0].mxu0
      %v2514 = vadd.f32 %v1058, %v2513
      %2515 = vmatprep.mubr.f32.mxu0 %v2227
      %2516 = vmatmul.mubr.f32.gmra.mrb[0].mxu0 %v2226
      %v2517 = vpop.f32.mrb[0].mxu0
      %v2518 = vadd.f32 %v1063, %v2517
      %v2519 = vpop.f32.mrb[0].mxu0
      %v2520 = vadd.f32 %v1063, %v2519
      %2521 = vmatprep.mubr.f32.mxu0 %v2230
      %2522 = vmatmul.mubr.f32.gmra.mrb[0].mxu0 %v2229
      %v2523 = vpop.f32.mrb[0].mxu0
      %v2524 = vadd.f32 %v1068, %v2523
      %v2525 = vpop.f32.mrb[0].mxu0
      %v2526 = vadd.f32 %v1068, %v2525
      %2527 = vmatprep.mubr.f32.mxu0 %v2233
      %2528 = vmatmul.mubr.f32.gmra.mrb[0].mxu0 %v2232
      %v2529 = vpop.f32.mrb[0].mxu0
      %v2530 = vadd.f32 %v1073, %v2529
      %v2531 = vpop.f32.mrb[0].mxu0
      %v2532 = vadd.f32 %v1073, %v2531
      %2533 = vdwg.mxu0
      %2534 = vmatprep.subr.mxu0 %v2300
      %2535 = vmatpush1.msra.mxu0 %v2299
      %2536 = vmatprep.subr.mxu0 %v2302
      %2537 = vmatpush1.msra.mxu0 %v2301
      %2538 = vmatprep.subr.mxu0 %v2304
      %2539 = vmatpush1.msra.mxu0 %v2303
      %2540 = vmatprep.subr.mxu0 %v2306
      %2541 = vmatpush1.msra.mxu0 %v2305
      %2542 = vmatprep.subr.mxu0 %v2308
      %2543 = vmatpush1.msra.mxu0 %v2307
      %2544 = vmatprep.subr.mxu0 %v2310
      %2545 = vmatpush1.msra.mxu0 %v2309
      %2546 = vmatprep.subr.mxu0 %v2312
      %2547 = vmatpush1.msra.mxu0 %v2311
      %2548 = vmatprep.subr.mxu0 %v2314
      %2549 = vmatpush1.msra.mxu0 %v2313
      %2550 = vmatprep.subr.mxu0 %v2316
      %2551 = vmatpush1.msra.mxu0 %v2315
      %2552 = vmatprep.subr.mxu0 %v2318
      %2553 = vmatpush1.msra.mxu0 %v2317
      %2554 = vmatprep.subr.mxu0 %v2320
      %2555 = vmatpush1.msra.mxu0 %v2319
      %2556 = vmatprep.subr.mxu0 %v2322
      %2557 = vmatpush1.msra.mxu0 %v2321
      %2558 = vmatprep.subr.mxu0 %v2324
      %2559 = vmatpush1.msra.mxu0 %v2323
      %2560 = vmatprep.subr.mxu0 0.0
      %2561 = vmatpush1.msra.mxu0 0.0
      %2562 = vmatprep.subr.mxu0 0.0
      %2563 = vmatpush1.msra.mxu0 0.0
      %2564 = vmatprep.subr.mxu0 0.0
      %2565 = vmatpush1.msra.mxu0 0.0
      %2566 = vmatprep.subr.mxu0 0.0
      %2567 = vmatpush1.msra.mxu0 0.0
      %2568 = vmatprep.subr.mxu0 0.0
      %2569 = vmatpush1.msra.mxu0 0.0
      %2570 = vmatprep.subr.mxu0 0.0
      %2571 = vmatpush1.msra.mxu0 0.0
      %2572 = vmatprep.subr.mxu0 0.0
      %2573 = vmatpush1.msra.mxu0 0.0
      %2574 = vmatprep.subr.mxu0 0.0
      %2575 = vmatpush1.msra.mxu0 0.0
      %2576 = vmatprep.subr.mxu0 0.0
      %2577 = vmatpush1.msra.mxu0 0.0
      %2578 = vmatprep.subr.mxu0 0.0
      %2579 = vmatpush1.msra.mxu0 0.0
      %2580 = vmatprep.subr.mxu0 0.0
      %2581 = vmatpush1.msra.mxu0 0.0
      %2582 = vmatprep.subr.mxu0 0.0
      %2583 = vmatpush1.msra.mxu0 0.0
      %2584 = vmatprep.subr.mxu0 0.0
      %2585 = vmatpush1.msra.mxu0 0.0
      %2586 = vmatprep.subr.mxu0 0.0
      %2587 = vmatpush1.msra.mxu0 0.0
      %2588 = vmatprep.subr.mxu0 0.0
      %2589 = vmatpush1.msra.mxu0 0.0
      %2590 = vmatprep.subr.mxu0 0.0
      %2591 = vmatpush1.msra.mxu0 0.0
      %2592 = vmatprep.subr.mxu0 0.0
      %2593 = vmatpush1.msra.mxu0 0.0
      %2594 = vmatprep.subr.mxu0 0.0
      %2595 = vmatpush1.msra.mxu0 0.0
      %2596 = vmatprep.subr.mxu0 0.0
      %2597 = vmatpush1.msra.mxu0 0.0
      %2598 = vmatprep.mubr.f32.mxu0 0.0
      %2599 = vmatmul.mubr.f32.gmra.mrb[0].mxu0 %v2326
      %v2600 = vpop.f32.mrb[0].mxu0
      %v2601 = vadd.f32 %v2440, %v2600
      %v2602 = vpop.f32.mrb[0].mxu0
      %v2603 = vadd.f32 %v2442, %v2602
      %2604 = vmatprep.mubr.f32.mxu0 0.0
      %2605 = vmatmul.mubr.f32.gmra.mrb[0].mxu0 %v2329
      %v2606 = vpop.f32.mrb[0].mxu0
      %v2607 = vadd.f32 %v2446, %v2606
      %v2608 = vpop.f32.mrb[0].mxu0
      %v2609 = vadd.f32 %v2448, %v2608
      %2610 = vmatprep.mubr.f32.mxu0 0.0
      %2611 = vmatmul.mubr.f32.gmra.mrb[0].mxu0 %v2332
      %v2612 = vpop.f32.mrb[0].mxu0
      %v2613 = vadd.f32 %v2452, %v2612
      %v2614 = vpop.f32.mrb[0].mxu0
      %v2615 = vadd.f32 %v2454, %v2614
      %2616 = vmatprep.mubr.f32.mxu0 0.0
      %2617 = vmatmul.mubr.f32.gmra.mrb[0].mxu0 %v2335
      %v2618 = vpop.f32.mrb[0].mxu0
      %v2619 = vadd.f32 %v2458, %v2618
      %v2620 = vpop.f32.mrb[0].mxu0
      %v2621 = vadd.f32 %v2460, %v2620
      %2622 = vmatprep.mubr.f32.mxu0 0.0
      %2623 = vmatmul.mubr.f32.gmra.mrb[0].mxu0 %v2338
      %v2624 = vpop.f32.mrb[0].mxu0
      %v2625 = vadd.f32 %v2464, %v2624
      %v2626 = vpop.f32.mrb[0].mxu0
      %v2627 = vadd.f32 %v2466, %v2626
      %2628 = vmatprep.mubr.f32.mxu0 0.0
      %2629 = vmatmul.mubr.f32.gmra.mrb[0].mxu0 %v2341
      %v2630 = vpop.f32.mrb[0].mxu0
      %v2631 = vadd.f32 %v2470, %v2630
      %v2632 = vpop.f32.mrb[0].mxu0
      %v2633 = vadd.f32 %v2472, %v2632
      %2634 = vmatprep.mubr.f32.mxu0 0.0
      %2635 = vmatmul.mubr.f32.gmra.mrb[0].mxu0 %v2344
      %v2636 = vpop.f32.mrb[0].mxu0
      %v2637 = vadd.f32 %v2476, %v2636
      %v2638 = vpop.f32.mrb[0].mxu0
      %v2639 = vadd.f32 %v2478, %v2638
      %2640 = vmatprep.mubr.f32.mxu0 0.0
      %2641 = vmatmul.mubr.f32.gmra.mrb[0].mxu0 %v2347
      %v2642 = vpop.f32.mrb[0].mxu0
      %v2643 = vadd.f32 %v2482, %v2642
      %v2644 = vpop.f32.mrb[0].mxu0
      %v2645 = vadd.f32 %v2484, %v2644
      %2646 = vmatprep.mubr.f32.mxu0 0.0
      %2647 = vmatmul.mubr.f32.gmra.mrb[0].mxu0 %v2350
      %v2648 = vpop.f32.mrb[0].mxu0
      %v2649 = vadd.f32 %v2488, %v2648
      %v2650 = vpop.f32.mrb[0].mxu0
      %v2651 = vadd.f32 %v2490, %v2650
      %2652 = vmatprep.mubr.f32.mxu0 0.0
      %2653 = vmatmul.mubr.f32.gmra.mrb[0].mxu0 %v2353
      %v2654 = vpop.f32.mrb[0].mxu0
      %v2655 = vadd.f32 %v2494, %v2654
      %v2656 = vpop.f32.mrb[0].mxu0
      %v2657 = vadd.f32 %v2496, %v2656
      %2658 = vmatprep.mubr.f32.mxu0 0.0
      %2659 = vmatmul.mubr.f32.gmra.mrb[0].mxu0 %v2356
      %v2660 = vpop.f32.mrb[0].mxu0
      %v2661 = vadd.f32 %v2500, %v2660
      %v2662 = vpop.f32.mrb[0].mxu0
      %v2663 = vadd.f32 %v2502, %v2662
      %2664 = vmatprep.mubr.f32.mxu0 0.0
      %2665 = vmatmul.mubr.f32.gmra.mrb[0].mxu0 %v2359
      %v2666 = vpop.f32.mrb[0].mxu0
      %v2667 = vadd.f32 %v2506, %v2666
      %v2668 = vpop.f32.mrb[0].mxu0
      %v2669 = vadd.f32 %v2508, %v2668
      %2670 = vmatprep.mubr.f32.mxu0 0.0
      %2671 = vmatmul.mubr.f32.gmra.mrb[0].mxu0 %v2362
      %v2672 = vpop.f32.mrb[0].mxu0
      %v2673 = vadd.f32 %v2512, %v2672
      %v2674 = vpop.f32.mrb[0].mxu0
      %v2675 = vadd.f32 %v2514, %v2674
      %2676 = vmatprep.mubr.f32.mxu0 0.0
      %2677 = vmatmul.mubr.f32.gmra.mrb[0].mxu0 %v2365
      %v2678 = vpop.f32.mrb[0].mxu0
      %v2679 = vadd.f32 %v2518, %v2678
      %v2680 = vpop.f32.mrb[0].mxu0
      %v2681 = vadd.f32 %v2520, %v2680
      %2682 = vmatprep.mubr.f32.mxu0 0.0
      %2683 = vmatmul.mubr.f32.gmra.mrb[0].mxu0 %v2368
      %v2684 = vpop.f32.mrb[0].mxu0
      %v2685 = vadd.f32 %v2524, %v2684
      %v2686 = vpop.f32.mrb[0].mxu0
      %v2687 = vadd.f32 %v2526, %v2686
      %2688 = vmatprep.mubr.f32.mxu0 0.0
      %2689 = vmatmul.mubr.f32.gmra.mrb[0].mxu0 %v2371
      %v2690 = vpop.f32.mrb[0].mxu0
      %v2691 = vadd.f32 %v2530, %v2690
      %v2692 = vpop.f32.mrb[0].mxu0
      %v2693 = vadd.f32 %v2532, %v2692
      %2694 = vdwg.mxu0
      %v2695 = vxor.u32 %v2601, 2147483648
      %v2696 = vxor.u32 %v2603, 2147483648
      %v2697 = vxor.u32 %v2607, 2147483648
      %v2698 = vxor.u32 %v2609, 2147483648
      %v2699 = vxor.u32 %v2613, 2147483648
      %v2700 = vxor.u32 %v2615, 2147483648
      %v2701 = vxor.u32 %v2619, 2147483648
      %v2702 = vxor.u32 %v2621, 2147483648
      %v2703 = vmul.f32 %v2695, 1.442695
      %v2704 = vpow.pop %v2703
      %v2705 = vmul.f32 %v2696, 1.442695
      %v2706 = vpow.pop %v2705
      %v2707 = vmul.f32 %v2697, 1.442695
      %v2708 = vpow.pop %v2707
      %v2709 = vmul.f32 %v2698, 1.442695
      %v2710 = vpow.pop %v2709
      %v2711 = vmul.f32 %v2699, 1.442695
      %v2712 = vpow.pop %v2711
      %v2713 = vmul.f32 %v2700, 1.442695
      %v2714 = vpow.pop %v2713
      %v2715 = vmul.f32 %v2701, 1.442695
      %v2716 = vpow.pop %v2715
      %v2717 = vmul.f32 %v2702, 1.442695
      %v2718 = vpow.pop %v2717
      %v2719 = vadd.f32 %v2704, 1.0
      %v2720 = vadd.f32 %v2706, 1.0
      %v2721 = vadd.f32 %v2708, 1.0
      %v2722 = vadd.f32 %v2710, 1.0
      %v2723 = vadd.f32 %v2712, 1.0
      %v2724 = vadd.f32 %v2714, 1.0
      %v2725 = vadd.f32 %v2716, 1.0
      %v2726 = vadd.f32 %v2718, 1.0
      %v2727 = vrcp.pop %v2719
      %v2728 = vmul.f32 1.0, %v2727
      %v2729 = vrcp.pop %v2720
      %v2730 = vmul.f32 1.0, %v2729
      %v2731 = vrcp.pop %v2721
      %v2732 = vmul.f32 1.0, %v2731
      %v2733 = vrcp.pop %v2722
      %v2734 = vmul.f32 1.0, %v2733
      %v2735 = vrcp.pop %v2723
      %v2736 = vmul.f32 1.0, %v2735
      %v2737 = vrcp.pop %v2724
      %v2738 = vmul.f32 1.0, %v2737
      %v2739 = vrcp.pop %v2725
      %v2740 = vmul.f32 1.0, %v2739
      %v2741 = vrcp.pop %v2726
      %v2742 = vmul.f32 1.0, %v2741
      %v2743 = vxor.u32 %v2625, 2147483648
      %v2744 = vxor.u32 %v2627, 2147483648
      %v2745 = vxor.u32 %v2631, 2147483648
      %v2746 = vxor.u32 %v2633, 2147483648
      %v2747 = vxor.u32 %v2637, 2147483648
      %v2748 = vxor.u32 %v2639, 2147483648
      %v2749 = vxor.u32 %v2643, 2147483648
      %v2750 = vxor.u32 %v2645, 2147483648
      %v2751 = vmul.f32 %v2743, 1.442695
      %v2752 = vpow.pop %v2751
      %v2753 = vmul.f32 %v2744, 1.442695
      %v2754 = vpow.pop %v2753
      %v2755 = vmul.f32 %v2745, 1.442695
      %v2756 = vpow.pop %v2755
      %v2757 = vmul.f32 %v2746, 1.442695
      %v2758 = vpow.pop %v2757
      %v2759 = vmul.f32 %v2747, 1.442695
      %v2760 = vpow.pop %v2759
      %v2761 = vmul.f32 %v2748, 1.442695
      %v2762 = vpow.pop %v2761
      %v2763 = vmul.f32 %v2749, 1.442695
      %v2764 = vpow.pop %v2763
      %v2765 = vmul.f32 %v2750, 1.442695
      %v2766 = vpow.pop %v2765
      %v2767 = vadd.f32 %v2752, 1.0
      %v2768 = vadd.f32 %v2754, 1.0
      %v2769 = vadd.f32 %v2756, 1.0
      %v2770 = vadd.f32 %v2758, 1.0
      %v2771 = vadd.f32 %v2760, 1.0
      %v2772 = vadd.f32 %v2762, 1.0
      %v2773 = vadd.f32 %v2764, 1.0
      %v2774 = vadd.f32 %v2766, 1.0
      %v2775 = vrcp.pop %v2767
      %v2776 = vmul.f32 1.0, %v2775
      %v2777 = vrcp.pop %v2768
      %v2778 = vmul.f32 1.0, %v2777
      %v2779 = vrcp.pop %v2769
      %v2780 = vmul.f32 1.0, %v2779
      %v2781 = vrcp.pop %v2770
      %v2782 = vmul.f32 1.0, %v2781
      %v2783 = vrcp.pop %v2771
      %v2784 = vmul.f32 1.0, %v2783
      %v2785 = vrcp.pop %v2772
      %v2786 = vmul.f32 1.0, %v2785
      %v2787 = vrcp.pop %v2773
      %v2788 = vmul.f32 1.0, %v2787
      %v2789 = vrcp.pop %v2774
      %v2790 = vmul.f32 1.0, %v2789
      %v2791 = vxor.u32 %v2649, 2147483648
      %v2792 = vxor.u32 %v2651, 2147483648
      %v2793 = vxor.u32 %v2655, 2147483648
      %v2794 = vxor.u32 %v2657, 2147483648
      %v2795 = vxor.u32 %v2661, 2147483648
      %v2796 = vxor.u32 %v2663, 2147483648
      %v2797 = vxor.u32 %v2667, 2147483648
      %v2798 = vxor.u32 %v2669, 2147483648
      %v2799 = vmul.f32 %v2791, 1.442695
      %v2800 = vpow.pop %v2799
      %v2801 = vmul.f32 %v2792, 1.442695
      %v2802 = vpow.pop %v2801
      %v2803 = vmul.f32 %v2793, 1.442695
      %v2804 = vpow.pop %v2803
      %v2805 = vmul.f32 %v2794, 1.442695
      %v2806 = vpow.pop %v2805
      %v2807 = vmul.f32 %v2795, 1.442695
      %v2808 = vpow.pop %v2807
      %v2809 = vmul.f32 %v2796, 1.442695
      %v2810 = vpow.pop %v2809
      %v2811 = vmul.f32 %v2797, 1.442695
      %v2812 = vpow.pop %v2811
      %v2813 = vmul.f32 %v2798, 1.442695
      %v2814 = vpow.pop %v2813
      %v2815 = vadd.f32 %v2800, 1.0
      %v2816 = vadd.f32 %v2802, 1.0
      %v2817 = vadd.f32 %v2804, 1.0
      %v2818 = vadd.f32 %v2806, 1.0
      %v2819 = vadd.f32 %v2808, 1.0
      %v2820 = vadd.f32 %v2810, 1.0
      %v2821 = vadd.f32 %v2812, 1.0
      %v2822 = vadd.f32 %v2814, 1.0
      %v2823 = vrcp.pop %v2815
      %v2824 = vmul.f32 1.0, %v2823
      %v2825 = vrcp.pop %v2816
      %v2826 = vmul.f32 1.0, %v2825
      %v2827 = vrcp.pop %v2817
      %v2828 = vmul.f32 1.0, %v2827
      %v2829 = vrcp.pop %v2818
      %v2830 = vmul.f32 1.0, %v2829
      %v2831 = vrcp.pop %v2819
      %v2832 = vmul.f32 1.0, %v2831
      %v2833 = vrcp.pop %v2820
      %v2834 = vmul.f32 1.0, %v2833
      %v2835 = vrcp.pop %v2821
      %v2836 = vmul.f32 1.0, %v2835
      %v2837 = vrcp.pop %v2822
      %v2838 = vmul.f32 1.0, %v2837
      %v2839 = vtanh.pop %v2673
      %v2840 = vtanh.pop %v2675
      %v2841 = vtanh.pop %v2679
      %v2842 = vtanh.pop %v2681
      %v2843 = vtanh.pop %v2685
      %v2844 = vtanh.pop %v2687
      %v2845 = vtanh.pop %v2691
      %v2846 = vtanh.pop %v2693
      %v2847 = vld [vmem:[%s286 + $0x10] sm:$0xff]
      %v2848 = vld [vmem:[%s286 + $0x18] sm:$0xff]
      %v2849 = vld [vmem:[%s286 + $0x30] sm:$0xff]
      %v2850 = vld [vmem:[%s286 + $0x38] sm:$0xff]
      %v2851 = vld [vmem:[%s286 + $0x50] sm:$0xff]
      %v2852 = vld [vmem:[%s286 + $0x58] sm:$0xff]
      %v2853 = vld [vmem:[%s286 + $0x70] sm:$0xff]
      %v2854 = vld [vmem:[%s286 + $0x78] sm:$0xff]
      %v2855 = vmul.f32 %v2776, %v2847
      %v2856 = vmul.f32 %v2778, %v2848
      %v2857 = vmul.f32 %v2780, %v2849
      %v2858 = vmul.f32 %v2782, %v2850
      %v2859 = vmul.f32 %v2784, %v2851
      %v2860 = vmul.f32 %v2786, %v2852
      %v2861 = vmul.f32 %v2788, %v2853
      %v2862 = vmul.f32 %v2790, %v2854
      %v2863 = vmul.f32 %v2728, %v2839
      %v2864 = vmul.f32 %v2730, %v2840
      %v2865 = vmul.f32 %v2732, %v2841
      %v2866 = vmul.f32 %v2734, %v2842
      %v2867 = vmul.f32 %v2736, %v2843
      %v2868 = vmul.f32 %v2738, %v2844
      %v2869 = vmul.f32 %v2740, %v2845
      %v2870 = vmul.f32 %v2742, %v2846
      %v2871 = vadd.f32 %v2855, %v2863
      %v2872 = vadd.f32 %v2856, %v2864
      %v2873 = vadd.f32 %v2857, %v2865
      %v2874 = vadd.f32 %v2858, %v2866
      %v2875 = vadd.f32 %v2859, %v2867
      %v2876 = vadd.f32 %v2860, %v2868
      %v2877 = vadd.f32 %v2861, %v2869
      %v2878 = vadd.f32 %v2862, %v2870
      %v2879 = vtanh.pop %v2871
      %v2880 = vtanh.pop %v2872
      %v2881 = vtanh.pop %v2873
      %v2882 = vtanh.pop %v2874
      %v2883 = vtanh.pop %v2875
      %v2884 = vtanh.pop %v2876
      %v2885 = vtanh.pop %v2877
      %v2886 = vtanh.pop %v2878
      %v2887 = vmul.f32 %v2824, %v2879
      %v2888 = vmul.f32 %v2826, %v2880
      %v2889 = vmul.f32 %v2828, %v2881
      %v2890 = vmul.f32 %v2830, %v2882
      %v2891 = vmul.f32 %v2832, %v2883
      %v2892 = vmul.f32 %v2834, %v2884
      %v2893 = vmul.f32 %v2836, %v2885
      %v2894 = vmul.f32 %v2838, %v2886
      %2895 = vst [vmem:[%s306 + $0x10] sm:$0xff] %v2871
      %2896 = vst [vmem:[%s306 + $0x18] sm:$0xff] %v2872
      %2897 = vst [vmem:[%s306 + $0x30] sm:$0xff] %v2873
      %2898 = vst [vmem:[%s306 + $0x38] sm:$0xff] %v2874
      %2899 = vst [vmem:[%s306 + $0x50] sm:$0xff] %v2875
      %2900 = vst [vmem:[%s306 + $0x58] sm:$0xff] %v2876
      %2901 = vst [vmem:[%s306 + $0x70] sm:$0xff] %v2877
      %2902 = vst [vmem:[%s306 + $0x78] sm:$0xff] %v2878
      %2903 = vst [vmem:[%s296 + $0x10] sm:$0xff] %v2887
      %2904 = vst [vmem:[%s296 + $0x18] sm:$0xff] %v2888
      %2905 = vst [vmem:[%s296 + $0x30] sm:$0xff] %v2889
      %2906 = vst [vmem:[%s296 + $0x38] sm:$0xff] %v2890
      %2907 = vst [vmem:[%s296 + $0x50] sm:$0xff] %v2891
      %2908 = vst [vmem:[%s296 + $0x58] sm:$0xff] %v2892
      %2909 = vst [vmem:[%s296 + $0x70] sm:$0xff] %v2893
      %2910 = vst [vmem:[%s296 + $0x78] sm:$0xff] %v2894
      %s2911 = smul.u32 4, %s22
      %p2912 = scmp.lt.s32.totalorder %s21, 1
      %s2913 = scalar_select %p2912, %s21, 1
      %p2914 = scmp.lt.s32.totalorder %s2911, 3
      %s2915 = scalar_select %p2914, %s2911, 3
      %s2916 = smul.addr %s2913, 16
      %s2917 = sadd.s32 %s2915, %s2916
      %s2918 = smul.addr %s2917, 8
      %s2919 = scalar_lea.vmem %s4, %s2918
      %s2920 = smul.u32 4, %s22
      %p2921 = scmp.lt.s32.totalorder %s21, 1
      %s2922 = scalar_select %p2921, %s21, 1
      %p2923 = scmp.lt.s32.totalorder %s2920, 3
      %s2924 = scalar_select %p2923, %s2920, 3
      %s2925 = smul.addr %s2922, 16
      %s2926 = sadd.s32 %s2924, %s2925
      %s2927 = smul.addr %s2926, 8
      %s2928 = scalar_lea.vmem %s5, %s2927
      // Predicated region
      $region37: #{convlstm_cell_pallas.1} parent=35 // pred_check
        %p2929 = pneg %p145
      $region38: #{convlstm_cell_pallas.1} parent=35 // pred_check_branch
        %2931 = sbr.rel (%p2929) target = $region40
      $region39: #{convlstm_cell_pallas.1} parent=35 // pred_region
        %s2932 = smul.u32 4, %s22
      $region40: #{convlstm_cell_pallas.1} parent=35 // pred_fallthru
        _
      // Predicated region
      $region41: #{convlstm_cell_pallas.1} parent=35 // pred_check
        %p2933 = pneg %p173
      $region42: #{convlstm_cell_pallas.1} parent=35 // pred_check_branch
        %2935 = sbr.rel (%p2933) target = $region44
      $region43: #{convlstm_cell_pallas.1} parent=35 // pred_region
        %s2936 = smul.u32 4, %s22
      $region44: #{convlstm_cell_pallas.1} parent=35 // pred_fallthru
        _
    $region36: #{convlstm_cell_pallas.1} parent=5 // pred_fallthru
      _
    %p2937 = scmp.le.s32.totalorder 2, %s12
    // Predicated region
    $region45: #{convlstm_cell_pallas.1} parent=5 // pred_check
      %p2938 = pneg %p2937
    $region46: #{convlstm_cell_pallas.1} parent=5 // pred_check_branch
      %2940 = sbr.rel (%p2938) target = $region48
    $region47: #{convlstm_cell_pallas.1} parent=5 // pred_region
      %s2941 = ssub.s32 %s12, 2
      // Predicated region
      $region49: #{convlstm_cell_pallas.1} parent=47 // pred_check
        %p2942 = pneg %p151
      $region50: #{convlstm_cell_pallas.1} parent=47 // pred_check_branch
        %2944 = sbr.rel (%p2942) target = $region52
      $region51: #{convlstm_cell_pallas.1} parent=47 // pred_region
        %s2945 = smul.u32 4, %s24
        %p2946 = scmp.lt.s32.totalorder %s23, 1
        %s2947 = scalar_select %p2946, %s23, 1
        %p2948 = scmp.lt.s32.totalorder %s2945, 3
        %s2949 = scalar_select %p2948, %s2945, 3
        %s2950 = smul.addr %s2947, 16
        %s2951 = sadd.s32 %s2949, %s2950
        %s2952 = smul.addr %s2951, 8
        %s2953 = scalar_lea.vmem %s4, %s2952
      $region52: #{convlstm_cell_pallas.1} parent=47 // pred_fallthru
        _
      // Predicated region
      $region53: #{convlstm_cell_pallas.1} parent=47 // pred_check
        %p2954 = pneg %p179
      $region54: #{convlstm_cell_pallas.1} parent=47 // pred_check_branch
        %2956 = sbr.rel (%p2954) target = $region56
      $region55: #{convlstm_cell_pallas.1} parent=47 // pred_region
        %s2957 = smul.u32 4, %s24
        %p2958 = scmp.lt.s32.totalorder %s23, 1
        %s2959 = scalar_select %p2958, %s23, 1
        %p2960 = scmp.lt.s32.totalorder %s2957, 3
        %s2961 = scalar_select %p2960, %s2957, 3
        %s2962 = smul.addr %s2959, 16
        %s2963 = sadd.s32 %s2961, %s2962
        %s2964 = smul.addr %s2963, 8
        %s2965 = scalar_lea.vmem %s5, %s2964
      $region56: #{convlstm_cell_pallas.1} parent=47 // pred_fallthru
        _
    $region48: #{convlstm_cell_pallas.1} parent=5 // pred_fallthru
      _
  $region6: #{convlstm_cell_pallas.1} parent=0 // loop_footer
    %s16 = sadd.s32 1, %s12
  $region7: #{convlstm_cell_pallas.1} parent=0 // loop_footer_branch
    %11 = sbr.rel target = $region3
  $region8: #{convlstm_cell_pallas.1} parent=0 // loop_exit
    _

</llo_original>
